<compile_context>
chip_gen: v6e
topology: v6e:2x2x1
jax: 0.10.0
libtpu: 0.0.40
codegen_flags: <defaults>
</compile_context>

<pallas_src>
import math
import functools

import jax
import jax.numpy as jnp
from jax.experimental import pallas as pl
from jax.experimental.pallas import tpu as pltpu

# ----------------------------------------------------------------------------
# Hyper-parameters (params / paramsExt of SequenceModule.__init__)
# ----------------------------------------------------------------------------
INNER_CNN_DEPTH = 2        # inner_CNN_depth
TRANSFORMER_DEPTH = 1      # transformer_depth
TRANSFORMER_HEADS = 2      # transformer_head
KERNEL_SIZE = 3            # kernel_size
HIDDEN1 = 32               # hidden_size1
D_MODEL = 32               # transformer_hidden
D_FF = 4 * D_MODEL         # dim_feedforward of TransformerEncoderLayer
CNN_DILATION = 1           # paramsExt.cnn_dilation
EMB_DIM = 20               # fixed by nn.Embedding(..., 20)
VOCAB = 26                 # len(init_word_features)
HEAD_DIM = D_MODEL // TRANSFORMER_HEADS


# ----------------------------------------------------------------------------
# In-kernel building blocks (operate on jnp values living in VMEM/vregs)
# ----------------------------------------------------------------------------
def _leaky(x):
    # F.leaky_relu(x, 0.1)
    return jnp.where(x >= 0.0, x, 0.1 * x)


def _layer_norm(x, g, b):
    mu = jnp.mean(x, axis=-1, keepdims=True)
    var = jnp.mean(jnp.square(x - mu), axis=-1, keepdims=True)
    return (x - mu) * jax.lax.rsqrt(var + 1e-5) * g + b


# ----------------------------------------------------------------------------
# The fused kernel: embedding -> CNN stack -> transformer encoder -> output
# (one grid program per sequence; all parameters read from a packed slab)
# ----------------------------------------------------------------------------
def _fused_forward_kernel(tok_ref, slab_ref, o_ref, *, offs, L):
    def par(name):
        off, r, c = offs[name]          # static python ints -> static slice view
        return slab_ref[off:off + r, 0:c]

    pos = jax.lax.broadcasted_iota(jnp.int32, (L, 1), 0)   # position within seq

    # Embedding lookup as a one-hot matmul (padding_idx=0 row of the table is
    # zero; frozen weights). embed_drop is identity in eval mode.
    cls = jax.lax.broadcasted_iota(jnp.int32, (L, VOCAB), 1)
    onehot = jnp.where(tok_ref[...] == cls, 1.0, 0.0)
    x = jnp.dot(onehot, par("embed"), preferred_element_type=jnp.float32)   # (L, 20)

    def conv(x, tag, dilation):
        """'same' Conv1d as K accumulated matmuls against per-tap weight slabs.
        Row shifts use pltpu.roll (XLU slot) + position masking (no concat/pad)."""
        pad = dilation * (KERNEL_SIZE - 1) // 2
        out = None
        for k in range(KERNEL_SIZE):                      # static tap loop
            off = k * dilation - pad
            if off == 0:
                t = x
            else:
                t = pltpu.roll(x, (-off) % L, axis=0)     # result[i] = x[i + off]
                if off < 0:
                    t = jnp.where(pos < -off, 0.0, t)     # neighbour index < 0
                else:
                    t = jnp.where(pos >= L - off, 0.0, t) # neighbour index >= L
            y = jnp.dot(t, par(f"{tag}_w{k}"), preferred_element_type=jnp.float32)
            out = y if out is None else out + y
        return out + par(f"{tag}_b")

    # ---- cnn_block ----
    x = _leaky(conv(x, "cf", 1))
    y = x                                   # paramsExt.identity == 'cnn'
    for i in range(INNER_CNN_DEPTH):
        x = _leaky(conv(x, f"p{i}", CNN_DILATION))
    x = _leaky(conv(x, "cl", 1))
    cnn_out = x + y                         # (L, HIDDEN1)

    # ---- transformer_block (stack == 'cnn' -> operates on CNN output) ----
    h = jnp.dot(cnn_out, par("th_w"), preferred_element_type=jnp.float32) + par("th_b")
    # TODO(synk): torch F.gelu defaults to exact erf GELU; tanh approximation used here.
    h = jax.nn.gelu(h, approximate=True)
    h = h + par("pe")                       # sinusoidal PE; PE dropout identity in eval

    scale = 1.0 / math.sqrt(HEAD_DIM)
    for li in range(TRANSFORMER_DEPTH):     # post-norm encoder layers
        attn = None
        for hh in range(TRANSFORMER_HEADS): # static head loop, per-head weight slabs
            q = jnp.dot(h, par(f"L{li}_wq{hh}"),
                        preferred_element_type=jnp.float32) + par(f"L{li}_bq{hh}")
            k = jnp.dot(h, par(f"L{li}_wk{hh}"),
                        preferred_element_type=jnp.float32) + par(f"L{li}_bk{hh}")
            v = jnp.dot(h, par(f"L{li}_wv{hh}"),
                        preferred_element_type=jnp.float32) + par(f"L{li}_bv{hh}")
            # contract last axes: no explicit k.T transpose
            s = jax.lax.dot_general(q, k, (((1,), (1,)), ((), ())),
                                    preferred_element_type=jnp.float32) * scale
            m = jnp.max(s, axis=-1, keepdims=True)
            e = jnp.exp(s - m)
            p = e * pl.reciprocal(jnp.sum(e, axis=-1, keepdims=True), approx=True)
            ctx = jnp.dot(p, v, preferred_element_type=jnp.float32)
            # per-head output projection accumulated directly (no head concat)
            oh = jnp.dot(ctx, par(f"L{li}_wo{hh}"), preferred_element_type=jnp.float32)
            attn = oh if attn is None else attn + oh
        attn = attn + par(f"L{li}_bo")
        h2 = _layer_norm(h + attn, par(f"L{li}_ln1_g"), par(f"L{li}_ln1_b"))
        ff = jnp.maximum(
            jnp.dot(h2, par(f"L{li}_ff1_w"), preferred_element_type=jnp.float32)
            + par(f"L{li}_ff1_b"), 0.0)
        ff = jnp.dot(ff, par(f"L{li}_ff2_w"), preferred_element_type=jnp.float32) \
            + par(f"L{li}_ff2_b")
        h = _layer_norm(h2 + ff, par(f"L{li}_ln2_g"), par(f"L{li}_ln2_b"))

    # stack == 'cnn' and _lambda is None -> output == transformer branch output
    o_ref[...] = h


# ----------------------------------------------------------------------------
# Host-side glue
# ----------------------------------------------------------------------------
def positional_encoding(L, d):
    pos = jnp.arange(L, dtype=jnp.float32)[:, None]
    div = jnp.exp(jnp.arange(0, d, 2, dtype=jnp.float32) * (-math.log(10000.0) / d))
    pe = jnp.zeros((L, d), jnp.float32)
    pe = pe.at[:, 0::2].set(jnp.sin(pos * div))
    pe = pe.at[:, 1::2].set(jnp.cos(pos * div))
    return pe


def init_params(key):
    keys = iter(jax.random.split(key, 64))

    def nrm(shape, scale=0.1):
        return scale * jax.random.normal(next(keys), shape, jnp.float32)

    p = {}
    embed = nrm((VOCAB, EMB_DIM), 1.0)
    p["embed"] = embed.at[0].set(0.0)                 # padding_idx=0, frozen
    # Conv weights stored per-tap: torch (Cout, Cin, K) -> permute(2,1,0) -> (K, Cin, Cout)
    p["conv_first_w"] = nrm((KERNEL_SIZE, EMB_DIM, HIDDEN1))
    p["conv_first_b"] = nrm((HIDDEN1,))
    p["plain_w"] = [nrm((KERNEL_SIZE, HIDDEN1, HIDDEN1)) for _ in range(INNER_CNN_DEPTH)]
    p["plain_b"] = [nrm((HIDDEN1,)) for _ in range(INNER_CNN_DEPTH)]
    p["conv_last_w"] = nrm((KERNEL_SIZE, HIDDEN1, HIDDEN1))
    p["conv_last_b"] = nrm((HIDDEN1,))
    # Linear weights stored (Din, Dout) = torch weight.T
    p["trans_hid_w"] = nrm((HIDDEN1, D_MODEL))
    p["trans_hid_b"] = nrm((D_MODEL,))
    layers = []
    for _ in range(TRANSFORMER_DEPTH):
        layers.append(dict(
            in_w=nrm((D_MODEL, 3 * D_MODEL)), in_b=nrm((3 * D_MODEL,)),
            out_w=nrm((D_MODEL, D_MODEL)), out_b=nrm((D_MODEL,)),
            ff1_w=nrm((D_MODEL, D_FF)), ff1_b=nrm((D_FF,)),
            ff2_w=nrm((D_FF, D_MODEL)), ff2_b=nrm((D_MODEL,)),
            ln1_g=jnp.ones((D_MODEL,), jnp.float32), ln1_b=jnp.zeros((D_MODEL,), jnp.float32),
            ln2_g=jnp.ones((D_MODEL,), jnp.float32), ln2_b=jnp.zeros((D_MODEL,), jnp.float32),
        ))
    p["layers"] = layers
    return p


def _pack_slab(entries):
    """Pack named 2-D f32 arrays into one lane-dense (P, 128) slab.
    Every entry starts at an 8-row (sublane-tile) aligned offset so the static
    in-kernel slices need no relayout. Returns (slab, {name: (row, r, c)})."""
    offs = {}
    row = 0
    for name, a in entries:
        r, c = a.shape
        offs[name] = (row, r, c)
        row += ((r + 7) // 8) * 8
    slab = jnp.zeros((row, 128), jnp.float32)
    for name, a in entries:
        off, r, c = offs[name]
        slab = slab.at[off:off + r, :c].set(a.astype(jnp.float32))
    return slab, offs


def _build_slab(params, L):
    ents = [("embed", params["embed"]),
            ("pe", positional_encoding(L, D_MODEL))]

    def add_conv(tag, w, b):
        for k in range(KERNEL_SIZE):
            ents.append((f"{tag}_w{k}", w[k]))              # (Cin, Cout) per tap
        ents.append((f"{tag}_b", b.reshape(1, -1)))

    add_conv("cf", params["conv_first_w"], params["conv_first_b"])
    for i in range(INNER_CNN_DEPTH):
        add_conv(f"p{i}", params["plain_w"][i], params["plain_b"][i])
    add_conv("cl", params["conv_last_w"], params["conv_last_b"])
    ents.append(("th_w", params["trans_hid_w"]))
    ents.append(("th_b", params["trans_hid_b"].reshape(1, -1)))

    dh = HEAD_DIM
    for li, lyr in enumerate(params["layers"]):
        in_w, in_b = lyr["in_w"], lyr["in_b"]
        for hh in range(TRANSFORMER_HEADS):                 # split per head host-side
            q0, q1 = hh * dh, (hh + 1) * dh
            ents.append((f"L{li}_wq{hh}", in_w[:, q0:q1]))
            ents.append((f"L{li}_wk{hh}", in_w[:, D_MODEL + q0:D_MODEL + q1]))
            ents.append((f"L{li}_wv{hh}", in_w[:, 2 * D_MODEL + q0:2 * D_MODEL + q1]))
            ents.append((f"L{li}_wo{hh}", lyr["out_w"][q0:q1, :]))
            ents.append((f"L{li}_bq{hh}", in_b[q0:q1].reshape(1, -1)))
            ents.append((f"L{li}_bk{hh}", in_b[D_MODEL + q0:D_MODEL + q1].reshape(1, -1)))
            ents.append((f"L{li}_bv{hh}", in_b[2 * D_MODEL + q0:2 * D_MODEL + q1].reshape(1, -1)))
        ents.append((f"L{li}_bo", lyr["out_b"].reshape(1, -1)))
        ents.append((f"L{li}_ff1_w", lyr["ff1_w"]))
        ents.append((f"L{li}_ff1_b", lyr["ff1_b"].reshape(1, -1)))
        ents.append((f"L{li}_ff2_w", lyr["ff2_w"]))
        ents.append((f"L{li}_ff2_b", lyr["ff2_b"].reshape(1, -1)))
        ents.append((f"L{li}_ln1_g", lyr["ln1_g"].reshape(1, -1)))
        ents.append((f"L{li}_ln1_b", lyr["ln1_b"].reshape(1, -1)))
        ents.append((f"L{li}_ln2_g", lyr["ln2_g"].reshape(1, -1)))
        ents.append((f"L{li}_ln2_b", lyr["ln2_b"].reshape(1, -1)))
    return _pack_slab(ents)


def sequence_module_forward(params, sequence):
    """sequence: (B, L) int32 token ids. Returns (B, L, D_MODEL) float32."""
    B, L = sequence.shape
    BL = B * L
    tok = sequence.reshape(BL, 1).astype(jnp.int32)
    slab, offs = _build_slab(params, L)                   # one lane-dense param slab

    out = pl.pallas_call(
        functools.partial(_fused_forward_kernel, offs=offs, L=L),
        out_shape=jax.ShapeDtypeStruct((BL, D_MODEL), jnp.float32),
        grid=(B,),                                        # one program per sequence
        in_specs=[pl.BlockSpec((L, 1), lambda b: (b, 0)),
                  pl.BlockSpec(slab.shape, lambda b: (0, 0))],  # slab: single, resident DMA
        out_specs=pl.BlockSpec((L, D_MODEL), lambda b: (b, 0)),
        compiler_params=pltpu.CompilerParams(
            dimension_semantics=("parallel",),            # both TensorCores on v7x
            vmem_limit_bytes=32 * 1024 * 1024),
    )(tok, slab)
    return out.reshape(B, L, D_MODEL)


if __name__ == "__main__":
    key = jax.random.PRNGKey(0)
    pkey, skey = jax.random.split(key)
    params = init_params(pkey)

    B, L = 2, 8
    sequence = jax.random.randint(skey, (B, L), 1, VOCAB, dtype=jnp.int32)
    seq_mask = jnp.ones((B, L), jnp.float32)  # unused by forward (matches torch module)

    out = jax.jit(sequence_module_forward)(params, sequence)
    out = jax.block_until_ready(out)
    assert out.shape == (B, L, D_MODEL) and out.dtype == jnp.float32
    assert bool(jnp.all(jnp.isfinite(out)))
    print("KERNEL_OK")
</pallas_src>

<mosaic_0001>
module attributes {stable_mosaic.version = 11 : i64} {
  func.func @_fused_forward_kernel(%arg0: i32, %arg1: memref<8x1xi32, #tpu.memory_space<vmem>>, %arg2: memref<960x128xf32, #tpu.memory_space<vmem>>, %arg3: memref<8x32xf32, #tpu.memory_space<vmem>>) attributes {dimension_semantics = [#tpu.dimension_semantics<parallel>], iteration_bounds = array<i64: 2>, scalar_prefetch = 0 : i64, scratch_operands = 0 : i64, tpu.core_type = #tpu.core_type<tc>, window_params = [{transform_indices = @transform_0, window_bounds = array<i64: 8, 1>}, {pipeline_mode = #tpu.pipeline_mode<synchronous>, transform_indices = @transform_1, window_bounds = array<i64: 960, 128>}, {transform_indices = @transform_2, window_bounds = array<i64: 8, 32>}]} {
    %0 = tpu.iota {dimensions = array<i32: 0>} : vector<8x1xi32>
    %1 = tpu.iota {dimensions = array<i32: 1>} : vector<8x26xi32>
    %c0 = arith.constant 0 : index
    %c0_0 = arith.constant 0 : index
    %2 = vector.load %arg1[%c0, %c0_0] : memref<8x1xi32, #tpu.memory_space<vmem>>, vector<8x1xi32>
    %3 = vector.broadcast %2 : vector<8x1xi32> to vector<8x26xi32>
    %4 = arith.cmpi eq, %3, %1 : vector<8x26xi32>
    %cst = arith.constant 1.000000e+00 : f32
    %cst_1 = arith.constant 0.000000e+00 : f32
    %5 = vector.broadcast %cst : f32 to vector<8x26xf32>
    %6 = vector.broadcast %cst_1 : f32 to vector<8x26xf32>
    %7 = arith.select %4, %5, %6 : vector<8x26xi1>, vector<8x26xf32>
    %c0_2 = arith.constant 0 : index
    %c0_3 = arith.constant 0 : index
    %8 = vector.load %arg2[%c0_2, %c0_3] : memref<960x128xf32, #tpu.memory_space<vmem>>, vector<26x20xf32>
    %cst_4 = arith.constant dense<0.000000e+00> : vector<8x20xf32>
    %9 = tpu.matmul %7, %8, %cst_4 {dimension_numbers = #tpu.dot_dimension_numbers<[1], [0], [0], [1], [0, 0, 1, 1], [], []>} : vector<8x26xf32>, vector<26x20xf32>, vector<8x20xf32> -> vector<8x20xf32>
    %c1_i32 = arith.constant 1 : i32
    %10 = tpu.dynamic_rotate %9 by %c1_i32 dim 0 : vector<8x20xf32>, i32 -> vector<8x20xf32>
    %c1_i32_5 = arith.constant 1 : i32
    %11 = vector.broadcast %c1_i32_5 : i32 to vector<8x1xi32>
    %12 = arith.cmpi slt, %0, %11 : vector<8x1xi32>
    %cst_6 = arith.constant 0.000000e+00 : f32
    %13 = vector.shape_cast %12 : vector<8x1xi1> to vector<8x1xi1>
    %14 = vector.broadcast %13 : vector<8x1xi1> to vector<8x20xi1>
    %15 = vector.broadcast %cst_6 : f32 to vector<8x20xf32>
    %16 = arith.select %14, %15, %10 : vector<8x20xi1>, vector<8x20xf32>
    %c40 = arith.constant 40 : index
    %c0_7 = arith.constant 0 : index
    %17 = vector.load %arg2[%c40, %c0_7] : memref<960x128xf32, #tpu.memory_space<vmem>>, vector<20x32xf32>
    %cst_8 = arith.constant dense<0.000000e+00> : vector<8x32xf32>
    %18 = tpu.matmul %16, %17, %cst_8 {dimension_numbers = #tpu.dot_dimension_numbers<[1], [0], [0], [1], [0, 0, 1, 1], [], []>} : vector<8x20xf32>, vector<20x32xf32>, vector<8x32xf32> -> vector<8x32xf32>
    %c64 = arith.constant 64 : index
    %c0_9 = arith.constant 0 : index
    %19 = vector.load %arg2[%c64, %c0_9] : memref<960x128xf32, #tpu.memory_space<vmem>>, vector<20x32xf32>
    %cst_10 = arith.constant dense<0.000000e+00> : vector<8x32xf32>
    %20 = tpu.matmul %9, %19, %cst_10 {dimension_numbers = #tpu.dot_dimension_numbers<[1], [0], [0], [1], [0, 0, 1, 1], [], []>} : vector<8x20xf32>, vector<20x32xf32>, vector<8x32xf32> -> vector<8x32xf32>
    %21 = arith.addf %18, %20 : vector<8x32xf32>
    %c7_i32 = arith.constant 7 : i32
    %22 = tpu.dynamic_rotate %9 by %c7_i32 dim 0 : vector<8x20xf32>, i32 -> vector<8x20xf32>
    %c7_i32_11 = arith.constant 7 : i32
    %23 = vector.broadcast %c7_i32_11 : i32 to vector<8x1xi32>
    %24 = arith.cmpi sge, %0, %23 : vector<8x1xi32>
    %cst_12 = arith.constant 0.000000e+00 : f32
    %25 = vector.shape_cast %24 : vector<8x1xi1> to vector<8x1xi1>
    %26 = vector.broadcast %25 : vector<8x1xi1> to vector<8x20xi1>
    %27 = vector.broadcast %cst_12 : f32 to vector<8x20xf32>
    %28 = arith.select %26, %27, %22 : vector<8x20xi1>, vector<8x20xf32>
    %c88 = arith.constant 88 : index
    %c0_13 = arith.constant 0 : index
    %29 = vector.load %arg2[%c88, %c0_13] : memref<960x128xf32, #tpu.memory_space<vmem>>, vector<20x32xf32>
    %cst_14 = arith.constant dense<0.000000e+00> : vector<8x32xf32>
    %30 = tpu.matmul %28, %29, %cst_14 {dimension_numbers = #tpu.dot_dimension_numbers<[1], [0], [0], [1], [0, 0, 1, 1], [], []>} : vector<8x20xf32>, vector<20x32xf32>, vector<8x32xf32> -> vector<8x32xf32>
    %31 = arith.addf %21, %30 : vector<8x32xf32>
    %c112 = arith.constant 112 : index
    %c0_15 = arith.constant 0 : index
    %32 = vector.load %arg2[%c112, %c0_15] : memref<960x128xf32, #tpu.memory_space<vmem>>, vector<1x32xf32>
    %33 = vector.broadcast %32 : vector<1x32xf32> to vector<8x32xf32>
    %34 = arith.addf %31, %33 : vector<8x32xf32>
    %cst_16 = arith.constant 0.000000e+00 : f32
    %35 = vector.broadcast %cst_16 : f32 to vector<8x32xf32>
    %36 = arith.cmpf oge, %34, %35 : vector<8x32xf32>
    %cst_17 = arith.constant 1.000000e-01 : f32
    %37 = vector.broadcast %cst_17 : f32 to vector<8x32xf32>
    %38 = arith.mulf %37, %34 : vector<8x32xf32>
    %39 = arith.select %36, %34, %38 : vector<8x32xi1>, vector<8x32xf32>
    %c1_i32_18 = arith.constant 1 : i32
    %40 = tpu.dynamic_rotate %39 by %c1_i32_18 dim 0 : vector<8x32xf32>, i32 -> vector<8x32xf32>
    %c1_i32_19 = arith.constant 1 : i32
    %41 = vector.broadcast %c1_i32_19 : i32 to vector<8x1xi32>
    %42 = arith.cmpi slt, %0, %41 : vector<8x1xi32>
    %cst_20 = arith.constant 0.000000e+00 : f32
    %43 = vector.shape_cast %42 : vector<8x1xi1> to vector<8x1xi1>
    %44 = vector.broadcast %43 : vector<8x1xi1> to vector<8x32xi1>
    %45 = vector.broadcast %cst_20 : f32 to vector<8x32xf32>
    %46 = arith.select %44, %45, %40 : vector<8x32xi1>, vector<8x32xf32>
    %c120 = arith.constant 120 : index
    %c0_21 = arith.constant 0 : index
    %47 = vector.load %arg2[%c120, %c0_21] : memref<960x128xf32, #tpu.memory_space<vmem>>, vector<32x32xf32>
    %cst_22 = arith.constant dense<0.000000e+00> : vector<8x32xf32>
    %48 = tpu.matmul %46, %47, %cst_22 {dimension_numbers = #tpu.dot_dimension_numbers<[1], [0], [0], [1], [0, 0, 1, 1], [], []>} : vector<8x32xf32>, vector<32x32xf32>, vector<8x32xf32> -> vector<8x32xf32>
    %c152 = arith.constant 152 : index
    %c0_23 = arith.constant 0 : index
    %49 = vector.load %arg2[%c152, %c0_23] : memref<960x128xf32, #tpu.memory_space<vmem>>, vector<32x32xf32>
    %cst_24 = arith.constant dense<0.000000e+00> : vector<8x32xf32>
    %50 = tpu.matmul %39, %49, %cst_24 {dimension_numbers = #tpu.dot_dimension_numbers<[1], [0], [0], [1], [0, 0, 1, 1], [], []>} : vector<8x32xf32>, vector<32x32xf32>, vector<8x32xf32> -> vector<8x32xf32>
    %51 = arith.addf %48, %50 : vector<8x32xf32>
    %c7_i32_25 = arith.constant 7 : i32
    %52 = tpu.dynamic_rotate %39 by %c7_i32_25 dim 0 : vector<8x32xf32>, i32 -> vector<8x32xf32>
    %c7_i32_26 = arith.constant 7 : i32
    %53 = vector.broadcast %c7_i32_26 : i32 to vector<8x1xi32>
    %54 = arith.cmpi sge, %0, %53 : vector<8x1xi32>
    %cst_27 = arith.constant 0.000000e+00 : f32
    %55 = vector.shape_cast %54 : vector<8x1xi1> to vector<8x1xi1>
    %56 = vector.broadcast %55 : vector<8x1xi1> to vector<8x32xi1>
    %57 = vector.broadcast %cst_27 : f32 to vector<8x32xf32>
    %58 = arith.select %56, %57, %52 : vector<8x32xi1>, vector<8x32xf32>
    %c184 = arith.constant 184 : index
    %c0_28 = arith.constant 0 : index
    %59 = vector.load %arg2[%c184, %c0_28] : memref<960x128xf32, #tpu.memory_space<vmem>>, vector<32x32xf32>
    %cst_29 = arith.constant dense<0.000000e+00> : vector<8x32xf32>
    %60 = tpu.matmul %58, %59, %cst_29 {dimension_numbers = #tpu.dot_dimension_numbers<[1], [0], [0], [1], [0, 0, 1, 1], [], []>} : vector<8x32xf32>, vector<32x32xf32>, vector<8x32xf32> -> vector<8x32xf32>
    %61 = arith.addf %51, %60 : vector<8x32xf32>
    %c216 = arith.constant 216 : index
    %c0_30 = arith.constant 0 : index
    %62 = vector.load %arg2[%c216, %c0_30] : memref<960x128xf32, #tpu.memory_space<vmem>>, vector<1x32xf32>
    %63 = vector.broadcast %62 : vector<1x32xf32> to vector<8x32xf32>
    %64 = arith.addf %61, %63 : vector<8x32xf32>
    %cst_31 = arith.constant 0.000000e+00 : f32
    %65 = vector.broadcast %cst_31 : f32 to vector<8x32xf32>
    %66 = arith.cmpf oge, %64, %65 : vector<8x32xf32>
    %cst_32 = arith.constant 1.000000e-01 : f32
    %67 = vector.broadcast %cst_32 : f32 to vector<8x32xf32>
    %68 = arith.mulf %67, %64 : vector<8x32xf32>
    %69 = arith.select %66, %64, %68 : vector<8x32xi1>, vector<8x32xf32>
    %c1_i32_33 = arith.constant 1 : i32
    %70 = tpu.dynamic_rotate %69 by %c1_i32_33 dim 0 : vector<8x32xf32>, i32 -> vector<8x32xf32>
    %c1_i32_34 = arith.constant 1 : i32
    %71 = vector.broadcast %c1_i32_34 : i32 to vector<8x1xi32>
    %72 = arith.cmpi slt, %0, %71 : vector<8x1xi32>
    %cst_35 = arith.constant 0.000000e+00 : f32
    %73 = vector.shape_cast %72 : vector<8x1xi1> to vector<8x1xi1>
    %74 = vector.broadcast %73 : vector<8x1xi1> to vector<8x32xi1>
    %75 = vector.broadcast %cst_35 : f32 to vector<8x32xf32>
    %76 = arith.select %74, %75, %70 : vector<8x32xi1>, vector<8x32xf32>
    %c224 = arith.constant 224 : index
    %c0_36 = arith.constant 0 : index
    %77 = vector.load %arg2[%c224, %c0_36] : memref<960x128xf32, #tpu.memory_space<vmem>>, vector<32x32xf32>
    %cst_37 = arith.constant dense<0.000000e+00> : vector<8x32xf32>
    %78 = tpu.matmul %76, %77, %cst_37 {dimension_numbers = #tpu.dot_dimension_numbers<[1], [0], [0], [1], [0, 0, 1, 1], [], []>} : vector<8x32xf32>, vector<32x32xf32>, vector<8x32xf32> -> vector<8x32xf32>
    %c256 = arith.constant 256 : index
    %c0_38 = arith.constant 0 : index
    %79 = vector.load %arg2[%c256, %c0_38] : memref<960x128xf32, #tpu.memory_space<vmem>>, vector<32x32xf32>
    %cst_39 = arith.constant dense<0.000000e+00> : vector<8x32xf32>
    %80 = tpu.matmul %69, %79, %cst_39 {dimension_numbers = #tpu.dot_dimension_numbers<[1], [0], [0], [1], [0, 0, 1, 1], [], []>} : vector<8x32xf32>, vector<32x32xf32>, vector<8x32xf32> -> vector<8x32xf32>
    %81 = arith.addf %78, %80 : vector<8x32xf32>
    %c7_i32_40 = arith.constant 7 : i32
    %82 = tpu.dynamic_rotate %69 by %c7_i32_40 dim 0 : vector<8x32xf32>, i32 -> vector<8x32xf32>
    %c7_i32_41 = arith.constant 7 : i32
    %83 = vector.broadcast %c7_i32_41 : i32 to vector<8x1xi32>
    %84 = arith.cmpi sge, %0, %83 : vector<8x1xi32>
    %cst_42 = arith.constant 0.000000e+00 : f32
    %85 = vector.shape_cast %84 : vector<8x1xi1> to vector<8x1xi1>
    %86 = vector.broadcast %85 : vector<8x1xi1> to vector<8x32xi1>
    %87 = vector.broadcast %cst_42 : f32 to vector<8x32xf32>
    %88 = arith.select %86, %87, %82 : vector<8x32xi1>, vector<8x32xf32>
    %c288 = arith.constant 288 : index
    %c0_43 = arith.constant 0 : index
    %89 = vector.load %arg2[%c288, %c0_43] : memref<960x128xf32, #tpu.memory_space<vmem>>, vector<32x32xf32>
    %cst_44 = arith.constant dense<0.000000e+00> : vector<8x32xf32>
    %90 = tpu.matmul %88, %89, %cst_44 {dimension_numbers = #tpu.dot_dimension_numbers<[1], [0], [0], [1], [0, 0, 1, 1], [], []>} : vector<8x32xf32>, vector<32x32xf32>, vector<8x32xf32> -> vector<8x32xf32>
    %91 = arith.addf %81, %90 : vector<8x32xf32>
    %c320 = arith.constant 320 : index
    %c0_45 = arith.constant 0 : index
    %92 = vector.load %arg2[%c320, %c0_45] : memref<960x128xf32, #tpu.memory_space<vmem>>, vector<1x32xf32>
    %93 = vector.broadcast %92 : vector<1x32xf32> to vector<8x32xf32>
    %94 = arith.addf %91, %93 : vector<8x32xf32>
    %cst_46 = arith.constant 0.000000e+00 : f32
    %95 = vector.broadcast %cst_46 : f32 to vector<8x32xf32>
    %96 = arith.cmpf oge, %94, %95 : vector<8x32xf32>
    %cst_47 = arith.constant 1.000000e-01 : f32
    %97 = vector.broadcast %cst_47 : f32 to vector<8x32xf32>
    %98 = arith.mulf %97, %94 : vector<8x32xf32>
    %99 = arith.select %96, %94, %98 : vector<8x32xi1>, vector<8x32xf32>
    %c1_i32_48 = arith.constant 1 : i32
    %100 = tpu.dynamic_rotate %99 by %c1_i32_48 dim 0 : vector<8x32xf32>, i32 -> vector<8x32xf32>
    %c1_i32_49 = arith.constant 1 : i32
    %101 = vector.broadcast %c1_i32_49 : i32 to vector<8x1xi32>
    %102 = arith.cmpi slt, %0, %101 : vector<8x1xi32>
    %cst_50 = arith.constant 0.000000e+00 : f32
    %103 = vector.shape_cast %102 : vector<8x1xi1> to vector<8x1xi1>
    %104 = vector.broadcast %103 : vector<8x1xi1> to vector<8x32xi1>
    %105 = vector.broadcast %cst_50 : f32 to vector<8x32xf32>
    %106 = arith.select %104, %105, %100 : vector<8x32xi1>, vector<8x32xf32>
    %c328 = arith.constant 328 : index
    %c0_51 = arith.constant 0 : index
    %107 = vector.load %arg2[%c328, %c0_51] : memref<960x128xf32, #tpu.memory_space<vmem>>, vector<32x32xf32>
    %cst_52 = arith.constant dense<0.000000e+00> : vector<8x32xf32>
    %108 = tpu.matmul %106, %107, %cst_52 {dimension_numbers = #tpu.dot_dimension_numbers<[1], [0], [0], [1], [0, 0, 1, 1], [], []>} : vector<8x32xf32>, vector<32x32xf32>, vector<8x32xf32> -> vector<8x32xf32>
    %c360 = arith.constant 360 : index
    %c0_53 = arith.constant 0 : index
    %109 = vector.load %arg2[%c360, %c0_53] : memref<960x128xf32, #tpu.memory_space<vmem>>, vector<32x32xf32>
    %cst_54 = arith.constant dense<0.000000e+00> : vector<8x32xf32>
    %110 = tpu.matmul %99, %109, %cst_54 {dimension_numbers = #tpu.dot_dimension_numbers<[1], [0], [0], [1], [0, 0, 1, 1], [], []>} : vector<8x32xf32>, vector<32x32xf32>, vector<8x32xf32> -> vector<8x32xf32>
    %111 = arith.addf %108, %110 : vector<8x32xf32>
    %c7_i32_55 = arith.constant 7 : i32
    %112 = tpu.dynamic_rotate %99 by %c7_i32_55 dim 0 : vector<8x32xf32>, i32 -> vector<8x32xf32>
    %c7_i32_56 = arith.constant 7 : i32
    %113 = vector.broadcast %c7_i32_56 : i32 to vector<8x1xi32>
    %114 = arith.cmpi sge, %0, %113 : vector<8x1xi32>
    %cst_57 = arith.constant 0.000000e+00 : f32
    %115 = vector.shape_cast %114 : vector<8x1xi1> to vector<8x1xi1>
    %116 = vector.broadcast %115 : vector<8x1xi1> to vector<8x32xi1>
    %117 = vector.broadcast %cst_57 : f32 to vector<8x32xf32>
    %118 = arith.select %116, %117, %112 : vector<8x32xi1>, vector<8x32xf32>
    %c392 = arith.constant 392 : index
    %c0_58 = arith.constant 0 : index
    %119 = vector.load %arg2[%c392, %c0_58] : memref<960x128xf32, #tpu.memory_space<vmem>>, vector<32x32xf32>
    %cst_59 = arith.constant dense<0.000000e+00> : vector<8x32xf32>
    %120 = tpu.matmul %118, %119, %cst_59 {dimension_numbers = #tpu.dot_dimension_numbers<[1], [0], [0], [1], [0, 0, 1, 1], [], []>} : vector<8x32xf32>, vector<32x32xf32>, vector<8x32xf32> -> vector<8x32xf32>
    %121 = arith.addf %111, %120 : vector<8x32xf32>
    %c424 = arith.constant 424 : index
    %c0_60 = arith.constant 0 : index
    %122 = vector.load %arg2[%c424, %c0_60] : memref<960x128xf32, #tpu.memory_space<vmem>>, vector<1x32xf32>
    %123 = vector.broadcast %122 : vector<1x32xf32> to vector<8x32xf32>
    %124 = arith.addf %121, %123 : vector<8x32xf32>
    %cst_61 = arith.constant 0.000000e+00 : f32
    %125 = vector.broadcast %cst_61 : f32 to vector<8x32xf32>
    %126 = arith.cmpf oge, %124, %125 : vector<8x32xf32>
    %cst_62 = arith.constant 1.000000e-01 : f32
    %127 = vector.broadcast %cst_62 : f32 to vector<8x32xf32>
    %128 = arith.mulf %127, %124 : vector<8x32xf32>
    %129 = arith.select %126, %124, %128 : vector<8x32xi1>, vector<8x32xf32>
    %130 = arith.addf %129, %39 : vector<8x32xf32>
    %c432 = arith.constant 432 : index
    %c0_63 = arith.constant 0 : index
    %131 = vector.load %arg2[%c432, %c0_63] : memref<960x128xf32, #tpu.memory_space<vmem>>, vector<32x32xf32>
    %cst_64 = arith.constant dense<0.000000e+00> : vector<8x32xf32>
    %132 = tpu.matmul %130, %131, %cst_64 {dimension_numbers = #tpu.dot_dimension_numbers<[1], [0], [0], [1], [0, 0, 1, 1], [], []>} : vector<8x32xf32>, vector<32x32xf32>, vector<8x32xf32> -> vector<8x32xf32>
    %c464 = arith.constant 464 : index
    %c0_65 = arith.constant 0 : index
    %133 = vector.load %arg2[%c464, %c0_65] : memref<960x128xf32, #tpu.memory_space<vmem>>, vector<1x32xf32>
    %134 = vector.broadcast %133 : vector<1x32xf32> to vector<8x32xf32>
    %135 = arith.addf %132, %134 : vector<8x32xf32>
    %136 = arith.mulf %135, %135 : vector<8x32xf32>
    %137 = arith.mulf %135, %136 : vector<8x32xf32>
    %cst_66 = arith.constant 4.471500e-02 : f32
    %138 = vector.broadcast %cst_66 : f32 to vector<8x32xf32>
    %139 = arith.mulf %138, %137 : vector<8x32xf32>
    %140 = arith.addf %135, %139 : vector<8x32xf32>
    %cst_67 = arith.constant 0.797884583 : f32
    %141 = vector.broadcast %cst_67 : f32 to vector<8x32xf32>
    %142 = arith.mulf %141, %140 : vector<8x32xf32>
    %143 = math.tanh %142 : vector<8x32xf32>
    %cst_68 = arith.constant 1.000000e+00 : f32
    %144 = vector.broadcast %cst_68 : f32 to vector<8x32xf32>
    %145 = arith.addf %144, %143 : vector<8x32xf32>
    %cst_69 = arith.constant 5.000000e-01 : f32
    %146 = vector.broadcast %cst_69 : f32 to vector<8x32xf32>
    %147 = arith.mulf %146, %145 : vector<8x32xf32>
    %148 = arith.mulf %135, %147 : vector<8x32xf32>
    %c32 = arith.constant 32 : index
    %c0_70 = arith.constant 0 : index
    %149 = vector.load %arg2[%c32, %c0_70] : memref<960x128xf32, #tpu.memory_space<vmem>>, vector<8x32xf32>
    %150 = arith.addf %148, %149 : vector<8x32xf32>
    %c472 = arith.constant 472 : index
    %c0_71 = arith.constant 0 : index
    %151 = vector.load %arg2[%c472, %c0_71] : memref<960x128xf32, #tpu.memory_space<vmem>>, vector<32x16xf32>
    %cst_72 = arith.constant dense<0.000000e+00> : vector<8x16xf32>
    %152 = tpu.matmul %150, %151, %cst_72 {dimension_numbers = #tpu.dot_dimension_numbers<[1], [0], [0], [1], [0, 0, 1, 1], [], []>} : vector<8x32xf32>, vector<32x16xf32>, vector<8x16xf32> -> vector<8x16xf32>
    %c584 = arith.constant 584 : index
    %c0_73 = arith.constant 0 : index
    %153 = vector.load %arg2[%c584, %c0_73] : memref<960x128xf32, #tpu.memory_space<vmem>>, vector<1x16xf32>
    %154 = vector.broadcast %153 : vector<1x16xf32> to vector<8x16xf32>
    %155 = arith.addf %152, %154 : vector<8x16xf32>
    %c504 = arith.constant 504 : index
    %c0_74 = arith.constant 0 : index
    %156 = vector.load %arg2[%c504, %c0_74] : memref<960x128xf32, #tpu.memory_space<vmem>>, vector<32x16xf32>
    %cst_75 = arith.constant dense<0.000000e+00> : vector<8x16xf32>
    %157 = tpu.matmul %150, %156, %cst_75 {dimension_numbers = #tpu.dot_dimension_numbers<[1], [0], [0], [1], [0, 0, 1, 1], [], []>} : vector<8x32xf32>, vector<32x16xf32>, vector<8x16xf32> -> vector<8x16xf32>
    %c592 = arith.constant 592 : index
    %c0_76 = arith.constant 0 : index
    %158 = vector.load %arg2[%c592, %c0_76] : memref<960x128xf32, #tpu.memory_space<vmem>>, vector<1x16xf32>
    %159 = vector.broadcast %158 : vector<1x16xf32> to vector<8x16xf32>
    %160 = arith.addf %157, %159 : vector<8x16xf32>
    %c536 = arith.constant 536 : index
    %c0_77 = arith.constant 0 : index
    %161 = vector.load %arg2[%c536, %c0_77] : memref<960x128xf32, #tpu.memory_space<vmem>>, vector<32x16xf32>
    %cst_78 = arith.constant dense<0.000000e+00> : vector<8x16xf32>
    %162 = tpu.matmul %150, %161, %cst_78 {dimension_numbers = #tpu.dot_dimension_numbers<[1], [0], [0], [1], [0, 0, 1, 1], [], []>} : vector<8x32xf32>, vector<32x16xf32>, vector<8x16xf32> -> vector<8x16xf32>
    %c600 = arith.constant 600 : index
    %c0_79 = arith.constant 0 : index
    %163 = vector.load %arg2[%c600, %c0_79] : memref<960x128xf32, #tpu.memory_space<vmem>>, vector<1x16xf32>
    %164 = vector.broadcast %163 : vector<1x16xf32> to vector<8x16xf32>
    %165 = arith.addf %162, %164 : vector<8x16xf32>
    %cst_80 = arith.constant dense<0.000000e+00> : vector<8x8xf32>
    %166 = tpu.matmul %155, %160, %cst_80 {dimension_numbers = #tpu.dot_dimension_numbers<[1], [1], [0], [0], [0, 0, 1, 0], [], []>} : vector<8x16xf32>, vector<8x16xf32>, vector<8x8xf32> -> vector<8x8xf32>
    %cst_81 = arith.constant 2.500000e-01 : f32
    %167 = vector.broadcast %cst_81 : f32 to vector<8x8xf32>
    %168 = arith.mulf %166, %167 : vector<8x8xf32>
    %cst_82 = arith.constant dense<0xFF800000> : vector<8xf32>
    %169 = vector.multi_reduction <maximumf>, %168, %cst_82 [1] : vector<8x8xf32> to vector<8xf32>
    %170 = vector.shape_cast %169 : vector<8xf32> to vector<8x1xf32>
    %171 = vector.broadcast %170 : vector<8x1xf32> to vector<8x8xf32>
    %172 = arith.subf %168, %171 : vector<8x8xf32>
    %173 = math.exp %172 : vector<8x8xf32>
    %cst_83 = arith.constant dense<0.000000e+00> : vector<8xf32>
    %174 = vector.multi_reduction <add>, %173, %cst_83 [1] : vector<8x8xf32> to vector<8xf32>
    %175 = vector.shape_cast %174 : vector<8xf32> to vector<8x1xf32>
    %176 = tpu.reciprocal %175 {approx = true} : vector<8x1xf32> -> vector<8x1xf32>
    %177 = vector.broadcast %176 : vector<8x1xf32> to vector<8x8xf32>
    %178 = arith.mulf %173, %177 : vector<8x8xf32>
    %cst_84 = arith.constant dense<0.000000e+00> : vector<8x16xf32>
    %179 = tpu.matmul %178, %165, %cst_84 {dimension_numbers = #tpu.dot_dimension_numbers<[1], [0], [0], [1], [0, 0, 1, 1], [], []>} : vector<8x8xf32>, vector<8x16xf32>, vector<8x16xf32> -> vector<8x16xf32>
    %c568 = arith.constant 568 : index
    %c0_85 = arith.constant 0 : index
    %180 = vector.load %arg2[%c568, %c0_85] : memref<960x128xf32, #tpu.memory_space<vmem>>, vector<16x32xf32>
    %cst_86 = arith.constant dense<0.000000e+00> : vector<8x32xf32>
    %181 = tpu.matmul %179, %180, %cst_86 {dimension_numbers = #tpu.dot_dimension_numbers<[1], [0], [0], [1], [0, 0, 1, 1], [], []>} : vector<8x16xf32>, vector<16x32xf32>, vector<8x32xf32> -> vector<8x32xf32>
    %c608 = arith.constant 608 : index
    %c0_87 = arith.constant 0 : index
    %182 = vector.load %arg2[%c608, %c0_87] : memref<960x128xf32, #tpu.memory_space<vmem>>, vector<32x16xf32>
    %cst_88 = arith.constant dense<0.000000e+00> : vector<8x16xf32>
    %183 = tpu.matmul %150, %182, %cst_88 {dimension_numbers = #tpu.dot_dimension_numbers<[1], [0], [0], [1], [0, 0, 1, 1], [], []>} : vector<8x32xf32>, vector<32x16xf32>, vector<8x16xf32> -> vector<8x16xf32>
    %c720 = arith.constant 720 : index
    %c0_89 = arith.constant 0 : index
    %184 = vector.load %arg2[%c720, %c0_89] : memref<960x128xf32, #tpu.memory_space<vmem>>, vector<1x16xf32>
    %185 = vector.broadcast %184 : vector<1x16xf32> to vector<8x16xf32>
    %186 = arith.addf %183, %185 : vector<8x16xf32>
    %c640 = arith.constant 640 : index
    %c0_90 = arith.constant 0 : index
    %187 = vector.load %arg2[%c640, %c0_90] : memref<960x128xf32, #tpu.memory_space<vmem>>, vector<32x16xf32>
    %cst_91 = arith.constant dense<0.000000e+00> : vector<8x16xf32>
    %188 = tpu.matmul %150, %187, %cst_91 {dimension_numbers = #tpu.dot_dimension_numbers<[1], [0], [0], [1], [0, 0, 1, 1], [], []>} : vector<8x32xf32>, vector<32x16xf32>, vector<8x16xf32> -> vector<8x16xf32>
    %c728 = arith.constant 728 : index
    %c0_92 = arith.constant 0 : index
    %189 = vector.load %arg2[%c728, %c0_92] : memref<960x128xf32, #tpu.memory_space<vmem>>, vector<1x16xf32>
    %190 = vector.broadcast %189 : vector<1x16xf32> to vector<8x16xf32>
    %191 = arith.addf %188, %190 : vector<8x16xf32>
    %c672 = arith.constant 672 : index
    %c0_93 = arith.constant 0 : index
    %192 = vector.load %arg2[%c672, %c0_93] : memref<960x128xf32, #tpu.memory_space<vmem>>, vector<32x16xf32>
    %cst_94 = arith.constant dense<0.000000e+00> : vector<8x16xf32>
    %193 = tpu.matmul %150, %192, %cst_94 {dimension_numbers = #tpu.dot_dimension_numbers<[1], [0], [0], [1], [0, 0, 1, 1], [], []>} : vector<8x32xf32>, vector<32x16xf32>, vector<8x16xf32> -> vector<8x16xf32>
    %c736 = arith.constant 736 : index
    %c0_95 = arith.constant 0 : index
    %194 = vector.load %arg2[%c736, %c0_95] : memref<960x128xf32, #tpu.memory_space<vmem>>, vector<1x16xf32>
    %195 = vector.broadcast %194 : vector<1x16xf32> to vector<8x16xf32>
    %196 = arith.addf %193, %195 : vector<8x16xf32>
    %cst_96 = arith.constant dense<0.000000e+00> : vector<8x8xf32>
    %197 = tpu.matmul %186, %191, %cst_96 {dimension_numbers = #tpu.dot_dimension_numbers<[1], [1], [0], [0], [0, 0, 1, 0], [], []>} : vector<8x16xf32>, vector<8x16xf32>, vector<8x8xf32> -> vector<8x8xf32>
    %cst_97 = arith.constant 2.500000e-01 : f32
    %198 = vector.broadcast %cst_97 : f32 to vector<8x8xf32>
    %199 = arith.mulf %197, %198 : vector<8x8xf32>
    %cst_98 = arith.constant dense<0xFF800000> : vector<8xf32>
    %200 = vector.multi_reduction <maximumf>, %199, %cst_98 [1] : vector<8x8xf32> to vector<8xf32>
    %201 = vector.shape_cast %200 : vector<8xf32> to vector<8x1xf32>
    %202 = vector.broadcast %201 : vector<8x1xf32> to vector<8x8xf32>
    %203 = arith.subf %199, %202 : vector<8x8xf32>
    %204 = math.exp %203 : vector<8x8xf32>
    %cst_99 = arith.constant dense<0.000000e+00> : vector<8xf32>
    %205 = vector.multi_reduction <add>, %204, %cst_99 [1] : vector<8x8xf32> to vector<8xf32>
    %206 = vector.shape_cast %205 : vector<8xf32> to vector<8x1xf32>
    %207 = tpu.reciprocal %206 {approx = true} : vector<8x1xf32> -> vector<8x1xf32>
    %208 = vector.broadcast %207 : vector<8x1xf32> to vector<8x8xf32>
    %209 = arith.mulf %204, %208 : vector<8x8xf32>
    %cst_100 = arith.constant dense<0.000000e+00> : vector<8x16xf32>
    %210 = tpu.matmul %209, %196, %cst_100 {dimension_numbers = #tpu.dot_dimension_numbers<[1], [0], [0], [1], [0, 0, 1, 1], [], []>} : vector<8x8xf32>, vector<8x16xf32>, vector<8x16xf32> -> vector<8x16xf32>
    %c704 = arith.constant 704 : index
    %c0_101 = arith.constant 0 : index
    %211 = vector.load %arg2[%c704, %c0_101] : memref<960x128xf32, #tpu.memory_space<vmem>>, vector<16x32xf32>
    %cst_102 = arith.constant dense<0.000000e+00> : vector<8x32xf32>
    %212 = tpu.matmul %210, %211, %cst_102 {dimension_numbers = #tpu.dot_dimension_numbers<[1], [0], [0], [1], [0, 0, 1, 1], [], []>} : vector<8x16xf32>, vector<16x32xf32>, vector<8x32xf32> -> vector<8x32xf32>
    %213 = arith.addf %181, %212 : vector<8x32xf32>
    %c744 = arith.constant 744 : index
    %c0_103 = arith.constant 0 : index
    %214 = vector.load %arg2[%c744, %c0_103] : memref<960x128xf32, #tpu.memory_space<vmem>>, vector<1x32xf32>
    %215 = vector.broadcast %214 : vector<1x32xf32> to vector<8x32xf32>
    %216 = arith.addf %213, %215 : vector<8x32xf32>
    %217 = arith.addf %150, %216 : vector<8x32xf32>
    %c928 = arith.constant 928 : index
    %c0_104 = arith.constant 0 : index
    %218 = vector.load %arg2[%c928, %c0_104] : memref<960x128xf32, #tpu.memory_space<vmem>>, vector<1x32xf32>
    %c936 = arith.constant 936 : index
    %c0_105 = arith.constant 0 : index
    %219 = vector.load %arg2[%c936, %c0_105] : memref<960x128xf32, #tpu.memory_space<vmem>>, vector<1x32xf32>
    %cst_106 = arith.constant dense<0.000000e+00> : vector<8xf32>
    %220 = vector.multi_reduction <add>, %217, %cst_106 [1] : vector<8x32xf32> to vector<8xf32>
    %221 = vector.shape_cast %220 : vector<8xf32> to vector<8x1xf32>
    %cst_107 = arith.constant 3.200000e+01 : f32
    %222 = vector.broadcast %cst_107 : f32 to vector<8x1xf32>
    %223 = arith.divf %221, %222 : vector<8x1xf32>
    %224 = vector.broadcast %223 : vector<8x1xf32> to vector<8x32xf32>
    %225 = arith.subf %217, %224 : vector<8x32xf32>
    %226 = arith.mulf %225, %225 : vector<8x32xf32>
    %cst_108 = arith.constant dense<0.000000e+00> : vector<8xf32>
    %227 = vector.multi_reduction <add>, %226, %cst_108 [1] : vector<8x32xf32> to vector<8xf32>
    %228 = vector.shape_cast %227 : vector<8xf32> to vector<8x1xf32>
    %cst_109 = arith.constant 3.200000e+01 : f32
    %229 = vector.broadcast %cst_109 : f32 to vector<8x1xf32>
    %230 = arith.divf %228, %229 : vector<8x1xf32>
    %231 = vector.broadcast %223 : vector<8x1xf32> to vector<8x32xf32>
    %232 = arith.subf %217, %231 : vector<8x32xf32>
    %cst_110 = arith.constant 9.99999974E-6 : f32
    %233 = vector.broadcast %cst_110 : f32 to vector<8x1xf32>
    %234 = arith.addf %230, %233 : vector<8x1xf32>
    %235 = math.rsqrt %234 : vector<8x1xf32>
    %236 = vector.broadcast %235 : vector<8x1xf32> to vector<8x32xf32>
    %237 = arith.mulf %232, %236 : vector<8x32xf32>
    %238 = vector.broadcast %218 : vector<1x32xf32> to vector<8x32xf32>
    %239 = arith.mulf %237, %238 : vector<8x32xf32>
    %240 = vector.broadcast %219 : vector<1x32xf32> to vector<8x32xf32>
    %241 = arith.addf %239, %240 : vector<8x32xf32>
    %c752 = arith.constant 752 : index
    %c0_111 = arith.constant 0 : index
    %242 = vector.load %arg2[%c752, %c0_111] : memref<960x128xf32, #tpu.memory_space<vmem>>, vector<32x128xf32>
    %cst_112 = arith.constant dense<0.000000e+00> : vector<8x128xf32>
    %243 = tpu.matmul %241, %242, %cst_112 {dimension_numbers = #tpu.dot_dimension_numbers<[1], [0], [0], [1], [0, 0, 1, 1], [], []>} : vector<8x32xf32>, vector<32x128xf32>, vector<8x128xf32> -> vector<8x128xf32>
    %c784 = arith.constant 784 : index
    %c0_113 = arith.constant 0 : index
    %244 = vector.load %arg2[%c784, %c0_113] : memref<960x128xf32, #tpu.memory_space<vmem>>, vector<1x128xf32>
    %245 = vector.broadcast %244 : vector<1x128xf32> to vector<8x128xf32>
    %246 = arith.addf %243, %245 : vector<8x128xf32>
    %cst_114 = arith.constant 0.000000e+00 : f32
    %247 = vector.broadcast %cst_114 : f32 to vector<8x128xf32>
    %248 = arith.maximumf %246, %247 : vector<8x128xf32>
    %c792 = arith.constant 792 : index
    %c0_115 = arith.constant 0 : index
    %249 = vector.load %arg2[%c792, %c0_115] : memref<960x128xf32, #tpu.memory_space<vmem>>, vector<128x32xf32>
    %cst_116 = arith.constant dense<0.000000e+00> : vector<8x32xf32>
    %250 = tpu.matmul %248, %249, %cst_116 {dimension_numbers = #tpu.dot_dimension_numbers<[1], [0], [0], [1], [0, 0, 1, 1], [], []>} : vector<8x128xf32>, vector<128x32xf32>, vector<8x32xf32> -> vector<8x32xf32>
    %c920 = arith.constant 920 : index
    %c0_117 = arith.constant 0 : index
    %251 = vector.load %arg2[%c920, %c0_117] : memref<960x128xf32, #tpu.memory_space<vmem>>, vector<1x32xf32>
    %252 = vector.broadcast %251 : vector<1x32xf32> to vector<8x32xf32>
    %253 = arith.addf %250, %252 : vector<8x32xf32>
    %254 = arith.addf %241, %253 : vector<8x32xf32>
    %c944 = arith.constant 944 : index
    %c0_118 = arith.constant 0 : index
    %255 = vector.load %arg2[%c944, %c0_118] : memref<960x128xf32, #tpu.memory_space<vmem>>, vector<1x32xf32>
    %c952 = arith.constant 952 : index
    %c0_119 = arith.constant 0 : index
    %256 = vector.load %arg2[%c952, %c0_119] : memref<960x128xf32, #tpu.memory_space<vmem>>, vector<1x32xf32>
    %cst_120 = arith.constant dense<0.000000e+00> : vector<8xf32>
    %257 = vector.multi_reduction <add>, %254, %cst_120 [1] : vector<8x32xf32> to vector<8xf32>
    %258 = vector.shape_cast %257 : vector<8xf32> to vector<8x1xf32>
    %cst_121 = arith.constant 3.200000e+01 : f32
    %259 = vector.broadcast %cst_121 : f32 to vector<8x1xf32>
    %260 = arith.divf %258, %259 : vector<8x1xf32>
    %261 = vector.broadcast %260 : vector<8x1xf32> to vector<8x32xf32>
    %262 = arith.subf %254, %261 : vector<8x32xf32>
    %263 = arith.mulf %262, %262 : vector<8x32xf32>
    %cst_122 = arith.constant dense<0.000000e+00> : vector<8xf32>
    %264 = vector.multi_reduction <add>, %263, %cst_122 [1] : vector<8x32xf32> to vector<8xf32>
    %265 = vector.shape_cast %264 : vector<8xf32> to vector<8x1xf32>
    %cst_123 = arith.constant 3.200000e+01 : f32
    %266 = vector.broadcast %cst_123 : f32 to vector<8x1xf32>
    %267 = arith.divf %265, %266 : vector<8x1xf32>
    %268 = vector.broadcast %260 : vector<8x1xf32> to vector<8x32xf32>
    %269 = arith.subf %254, %268 : vector<8x32xf32>
    %cst_124 = arith.constant 9.99999974E-6 : f32
    %270 = vector.broadcast %cst_124 : f32 to vector<8x1xf32>
    %271 = arith.addf %267, %270 : vector<8x1xf32>
    %272 = math.rsqrt %271 : vector<8x1xf32>
    %273 = vector.broadcast %272 : vector<8x1xf32> to vector<8x32xf32>
    %274 = arith.mulf %269, %273 : vector<8x32xf32>
    %275 = vector.broadcast %255 : vector<1x32xf32> to vector<8x32xf32>
    %276 = arith.mulf %274, %275 : vector<8x32xf32>
    %277 = vector.broadcast %256 : vector<1x32xf32> to vector<8x32xf32>
    %278 = arith.addf %276, %277 : vector<8x32xf32>
    %c0_125 = arith.constant 0 : index
    %c0_126 = arith.constant 0 : index
    %279 = vector.load %arg3[%c0_125, %c0_126] : memref<8x32xf32, #tpu.memory_space<vmem>>, vector<8x32xf32>
    tpu.vector_store %arg3[%c0_125, %c0_126], %278 {strides = array<i32>} : memref<8x32xf32, #tpu.memory_space<vmem>>, vector<8x32xf32>,
    return
  }
  func.func @transform_0(%arg0: i32) -> (i32, i32) {
    %c0_i32 = arith.constant 0 : i32
    %c0_i32_0 = arith.constant 0 : i32
    return %arg0, %c0_i32 : i32, i32
  }
  func.func @transform_1(%arg0: i32) -> (i32, i32) {
    %c0_i32 = arith.constant 0 : i32
    %c0_i32_0 = arith.constant 0 : i32
    %c0_i32_1 = arith.constant 0 : i32
    return %c0_i32, %c0_i32_0 : i32, i32
  }
  func.func @transform_2(%arg0: i32) -> (i32, i32) {
    %c0_i32 = arith.constant 0 : i32
    %c0_i32_0 = arith.constant 0 : i32
    return %arg0, %c0_i32 : i32, i32
  }
}

</mosaic_0001>

<llo_original>
// kernel: sequence_module_forward.1
$region0: #{sequence_module_forward.1}
  #allocation0 [shape = 'u32[]', space=smem, size = 0x4, offset = 0x4, fixed_abs, tag = 'smem constant byte address 0x4 - core index']
  #allocation1 [shape = 'u32[144,128]{1,0:T(1,128)}', space=vmem, size = 0x12000, scoped, tag = 'internal scratch']
  %s0 = inlined_call_operand.vmem [shape: s32[16,1], index: 0, kind: input, shape index: {}]
  %s1 = inlined_call_operand.vmem [shape: f32[960,128], index: 1, kind: input, shape index: {}]
  %s2 = inlined_call_operand.hbm [shape: f32[16,32], index: 2, kind: output, shape index: {}]
  %s3 = sld [smem:[#allocation0]]
  $region41: #{sequence_module_forward.1} parent=0
    _
  %s5 = ssub.s32 1, %s3
  %s6 = scalar_select 0, %s5, %s3
  $region1: #{sequence_module_forward.1} parent=0
    #allocation2 [shape = 'u8[8192]{0}', space=vmem, size = 0x2000, scoped, tag = 'output window, operand 0']
    #allocation3 [shape = 's32[2]{0}', space=sflag, size = 0x8, scoped, tag = 'scoped memory for sequence_module_forward.1']
    %7 = vsyncpa [#allocation3], 0
    %s8 = scalar_lea.sflag [#allocation3], 1
    %9 = vsyncpa %s8, 0
    loop: start=0, step=1, limit=4
    $region2: #{sequence_module_forward.1} parent=1 // loop_pre_header
      _
    $region3: #{sequence_module_forward.1} parent=1 // loop_header
      %s11 = sphi 0, %s15
      %p12 = scmp.ge.s32.totalorder %s11, 4
      %s21 = sphi 0, %s23
      %s24 = sphi 0, %s21
      %s25 = sphi 0, %s24
      %s41 = sphi 0, %s25
      %s45 = sphi 0, %s45
      %s47 = sphi 0, %s45
      %s48 = sphi 0, %s47
      %s62 = sphi 0, %s48
      %s68 = sphi 0, %s70
      %s71 = sphi 0, %s68
      %s72 = sphi 0, %s71
      %s88 = sphi 0, %s72
    $region4: #{sequence_module_forward.1} parent=1 // loop_header_branch
      %14 = sbr.rel (%p12) target = $region8
    $region5: #{sequence_module_forward.1} parent=1 // loop_body
      %s16 = ssub.s32 %s11, 1
      %s17 = ssub.s32 %s11, 2
      %s18 = sadd.s32 %s11, 1
      %s19 = ssub.s32 %s11, %s18
      %p20 = scmp.eq.s32.totalorder %s19, 0
      %s22 = sadd.s32 %s21, 1
      %s23 = scalar_select %p20, %s21, %s22
      %p26 = pneg %p20
      %p27 = scmp.eq.s32.totalorder %s11, 1
      %p28 = por %p26, %p27
      %p29 = scmp.ne.s32.totalorder %s21, %s24
      %p30 = scmp.eq.s32.totalorder %s11, 0
      %p31 = por %p29, %p30
      %p32 = scmp.ne.s32.totalorder %s21, %s24
      %p33 = scmp.eq.s32.totalorder %s16, 1
      %p34 = por %p32, %p33
      %p35 = scmp.ne.s32.totalorder %s24, %s25
      %p36 = scmp.eq.s32.totalorder %s16, 0
      %p37 = por %p35, %p36
      %p38 = scmp.ne.s32.totalorder %s24, %s25
      %p39 = scmp.eq.s32.totalorder %s17, 1
      %p40 = por %p38, %p39
      %p42 = scmp.ne.s32.totalorder %s25, %s41
      %p43 = scmp.eq.s32.totalorder %s17, 0
      %p44 = por %p42, %p43
      %s46 = sadd.s32 %s45, 1
      %p49 = scmp.eq.s32.totalorder %s11, 1
      %p50 = scmp.ne.s32.totalorder %s45, %s47
      %p51 = scmp.eq.s32.totalorder %s11, 0
      %p52 = por %p50, %p51
      %p53 = scmp.ne.s32.totalorder %s45, %s47
      %p54 = scmp.eq.s32.totalorder %s16, 1
      %p55 = por %p53, %p54
      %p56 = scmp.ne.s32.totalorder %s47, %s48
      %p57 = scmp.eq.s32.totalorder %s16, 0
      %p58 = por %p56, %p57
      %p59 = scmp.ne.s32.totalorder %s47, %s48
      %p60 = scmp.eq.s32.totalorder %s17, 1
      %p61 = por %p59, %p60
      %p63 = scmp.ne.s32.totalorder %s48, %s62
      %p64 = scmp.eq.s32.totalorder %s17, 0
      %p65 = por %p63, %p64
      %s66 = ssub.s32 %s11, %s18
      %p67 = scmp.eq.s32.totalorder %s66, 0
      %s69 = sadd.s32 %s68, 1
      %s70 = scalar_select %p67, %s68, %s69
      %p73 = pneg %p67
      %p74 = scmp.eq.s32.totalorder %s11, 1
      %p75 = por %p73, %p74
      %p76 = scmp.ne.s32.totalorder %s68, %s71
      %p77 = scmp.eq.s32.totalorder %s11, 0
      %p78 = por %p76, %p77
      %p79 = scmp.ne.s32.totalorder %s68, %s71
      %p80 = scmp.eq.s32.totalorder %s16, 1
      %p81 = por %p79, %p80
      %p82 = scmp.ne.s32.totalorder %s71, %s72
      %p83 = scmp.eq.s32.totalorder %s16, 0
      %p84 = por %p82, %p83
      %p85 = scmp.ne.s32.totalorder %s71, %s72
      %p86 = scmp.eq.s32.totalorder %s17, 1
      %p87 = por %p85, %p86
      %p89 = scmp.ne.s32.totalorder %s72, %s88
      %p90 = scmp.eq.s32.totalorder %s17, 0
      %p91 = por %p89, %p90
      %p92 = scmp.le.s32.totalorder 1, %s11
      %p93 = scmp.lt.s32.totalorder %s11, 3
      %p94 = pnand %p92, %p93
      %p95 = pneg %p94
      // Predicated region
      $region9: #{sequence_module_forward.1} parent=5 // pred_check
        _
      $region10: #{sequence_module_forward.1} parent=5 // pred_check_branch
        %97 = sbr.rel (%p94) target = $region12
      $region11: #{sequence_module_forward.1} parent=5 // pred_region
        %s98 = ssub.s32 %s11, 1
        // Predicated region
        $region13: #{sequence_module_forward.1} parent=11 // pred_check
          %p99 = pneg %p58
        $region14: #{sequence_module_forward.1} parent=11 // pred_check_branch
          %101 = sbr.rel (%p99) target = $region16
        $region15: #{sequence_module_forward.1} parent=11 // pred_region
          _
        $region16: #{sequence_module_forward.1} parent=11 // pred_fallthru
          _
      $region12: #{sequence_module_forward.1} parent=5 // pred_fallthru
        _
      %p102 = scmp.lt.s32.totalorder %s11, 2
      // Predicated region
      $region17: #{sequence_module_forward.1} parent=5 // pred_check
        %p103 = pneg %p102
      $region18: #{sequence_module_forward.1} parent=5 // pred_check_branch
        %105 = sbr.rel (%p103) target = $region20
      $region19: #{sequence_module_forward.1} parent=5 // pred_region
        // Predicated region
        $region21: #{sequence_module_forward.1} parent=19 // pred_check
          %p106 = pneg %p31
        $region22: #{sequence_module_forward.1} parent=19 // pred_check_branch
          %108 = sbr.rel (%p106) target = $region24
        $region23: #{sequence_module_forward.1} parent=19 // pred_region
          %p109 = scmp.lt.s32.totalorder %s11, 1
          %s110 = scalar_select %p109, %s11, 1
          %s111 = smul.addr %s110, 8
          %s112 = scalar_lea.vmem %s0, %s111
        $region24: #{sequence_module_forward.1} parent=19 // pred_fallthru
          _
      $region20: #{sequence_module_forward.1} parent=5 // pred_fallthru
        _
      %p113 = scmp.le.s32.totalorder 1, %s11
      %p114 = scmp.lt.s32.totalorder %s11, 3
      %p115 = pnand %p113, %p114
      %p116 = pneg %p115
      // Predicated region
      $region25: #{sequence_module_forward.1} parent=5 // pred_check
        _
      $region26: #{sequence_module_forward.1} parent=5 // pred_check_branch
        %118 = sbr.rel (%p115) target = $region28
      $region27: #{sequence_module_forward.1} parent=5 // pred_region
        %s119 = ssub.s32 %s11, 1
        %p120 = scmp.lt.s32.totalorder %s16, 1
        %s121 = scalar_select %p120, %s16, 1
        %s122 = smul.addr %s121, 8
        %s123 = scalar_lea.vmem %s0, %s122
        %p124 = pneg %p37
        %p125 = pneg %p34
        %p126 = pneg %p58
        %p127 = pneg %p55
        %p128 = pneg %p84
        %p129 = pneg %p81
        %s130 = sand.u32 %s71, 1
        %s131 = scalar_lea.sflag [#allocation3], %s130
        %s132 = sand.u32 %s71, 1
        %s133 = smul.addr %s132, 8
        %s134 = scalar_lea.vmem [#allocation2], %s133
        %p135 = scmp.lt.s32.totalorder %s16, 1
        %s136 = scalar_select %p135, %s16, 1
        %s137 = smul.addr %s136, 8
        %s138 = scalar_lea.vmem %s0, %s137
        %v139 = vlaneseq
        %v140 = vshrl.u32 %v139, 7
        %v141 = vlaneseq
        %v142 = vand.u32 %v141, 127
        %v143 = vld [vmem:[%s138] sm:$0xff]
        %144 = vset.pattern.permute.xlu0 0
        %145 = vperm.xlu0 %144, %v143
        %v146 = vpop.permute.xlu0 %145
        %vm147 = vcmp.eq.s32.totalorder %v146, %v142
        %v148 = vsel %vm147, 1.0, 0.0
        %v149 = vld [vmem:[%s1] sm:$0xff]
        %v150 = vld [vmem:[%s1 + $0x8] sm:$0xff]
        %v151 = vld [vmem:[%s1 + $0x10] sm:$0xff]
        %v152 = vld [vmem:[%s1 + $0x18] sm:$0x3]
        %vm153 = vcmask 211968
        %v155 = vsel %vm153, %v148, 0
        %vm157 = vcmask 1041408
        %v159 = vsel %vm157, %v152, 0
        %161 = vmatprep.subr.mxu0 0.0
        %162 = vmatpush1.msra.mxu0 0.0
        %163 = vmatprep.subr.mxu0 0.0
        %164 = vmatpush1.msra.mxu0 0.0
        %165 = vmatprep.subr.mxu0 0.0
        %166 = vmatpush1.msra.mxu0 0.0
        %167 = vmatprep.subr.mxu0 0.0
        %168 = vmatpush1.msra.mxu0 0.0
        %169 = vmatprep.subr.mxu0 0.0
        %170 = vmatpush1.msra.mxu0 0.0
        %171 = vmatprep.subr.mxu0 0.0
        %172 = vmatpush1.msra.mxu0 0.0
        %173 = vmatprep.subr.mxu0 0.0
        %174 = vmatpush1.msra.mxu0 0.0
        %175 = vmatprep.subr.mxu0 0.0
        %176 = vmatpush1.msra.mxu0 0.0
        %177 = vmatprep.subr.mxu0 0.0
        %178 = vmatpush1.msra.mxu0 0.0
        %179 = vmatprep.subr.mxu0 0.0
        %180 = vmatpush1.msra.mxu0 0.0
        %181 = vmatprep.subr.mxu0 0.0
        %182 = vmatpush1.msra.mxu0 0.0
        %183 = vmatprep.subr.mxu0 0.0
        %184 = vmatpush1.msra.mxu0 0.0
        %185 = vmatprep.subr.mxu0 0.0
        %186 = vmatpush1.msra.mxu0 %v159
        %187 = vmatprep.subr.mxu0 0.0
        %188 = vmatpush1.msra.mxu0 %v151
        %189 = vmatprep.subr.mxu0 0.0
        %190 = vmatpush1.msra.mxu0 %v150
        %191 = vmatprep.subr.mxu0 0.0
        %192 = vmatpush1.msra.mxu0 %v149
        %193 = vmatprep.subr.mxu0 0.0
        %194 = vmatpush2.msra.mxu0 0.0
        %195 = vmatprep.subr.mxu0 0.0
        %196 = vmatpush2.msra.mxu0 0.0
        %197 = vmatprep.subr.mxu0 0.0
        %198 = vmatpush2.msra.mxu0 0.0
        %199 = vmatprep.subr.mxu0 0.0
        %200 = vmatpush2.msra.mxu0 0.0
        %201 = vmatprep.subr.mxu0 0.0
        %202 = vmatpush2.msra.mxu0 0.0
        %203 = vmatprep.subr.mxu0 0.0
        %204 = vmatpush2.msra.mxu0 0.0
        %205 = vmatprep.subr.mxu0 0.0
        %206 = vmatpush2.msra.mxu0 0.0
        %207 = vmatprep.subr.mxu0 0.0
        %208 = vmatpush2.msra.mxu0 0.0
        %209 = vmatprep.subr.mxu0 0.0
        %210 = vmatpush2.msra.mxu0 0.0
        %211 = vmatprep.subr.mxu0 0.0
        %212 = vmatpush2.msra.mxu0 0.0
        %213 = vmatprep.subr.mxu0 0.0
        %214 = vmatpush2.msra.mxu0 0.0
        %215 = vmatprep.subr.mxu0 0.0
        %216 = vmatpush2.msra.mxu0 0.0
        %217 = vmatprep.subr.mxu0 0.0
        %218 = vmatpush2.msra.mxu0 0.0
        %219 = vmatprep.subr.mxu0 0.0
        %220 = vmatpush2.msra.mxu0 0.0
        %221 = vmatprep.subr.mxu0 0.0
        %222 = vmatpush2.msra.mxu0 0.0
        %223 = vmatprep.subr.mxu0 0.0
        %224 = vmatpush2.msra.mxu0 0.0
        %225 = vmatprep.mubr.f32.mxu0 0.0
        %226 = vmatmul.mubr.f32.gmra.mxu0 %v155
        %v227 = vpop.f32.mrf.mxu0
        %v228 = vadd.f32 0.0, %v227
        %v229 = vpop.f32.mrf.mxu0
        %230 = vdwg.mxu0
        %v231 = vrot.slane %v228, 7
        %vm232 = vcmp.lt.s32.totalorder %v140, 1
        %v233 = vsel %vm232, 1, 0
        %vm234 = vcmp.eq.s32.totalorder %v233, 1
        %v235 = vsel %vm234, 0.0, %v231
        %v236 = vld [vmem:[%s1 + $0x28] sm:$0xff]
        %v237 = vld [vmem:[%s1 + $0x30] sm:$0xff]
        %v238 = vld [vmem:[%s1 + $0x38] sm:$0xf]
        %v239 = vld [vmem:[%s1 + $0x40] sm:$0xff]
        %v240 = vld [vmem:[%s1 + $0x48] sm:$0xff]
        %v241 = vld [vmem:[%s1 + $0x50] sm:$0xf]
        %vm242 = vcmask 162816
        %v244 = vsel %vm242, %v228, 0
        %vm246 = vcmask 1043456
        %v248 = vsel %vm246, %v241, 0
        %250 = vmatprep.subr.mxu0 0.0
        %251 = vmatpush1.msra.mxu0 0.0
        %252 = vmatprep.subr.mxu0 0.0
        %253 = vmatpush1.msra.mxu0 0.0
        %254 = vmatprep.subr.mxu0 0.0
        %255 = vmatpush1.msra.mxu0 0.0
        %256 = vmatprep.subr.mxu0 0.0
        %257 = vmatpush1.msra.mxu0 0.0
        %258 = vmatprep.subr.mxu0 0.0
        %259 = vmatpush1.msra.mxu0 0.0
        %260 = vmatprep.subr.mxu0 0.0
        %261 = vmatpush1.msra.mxu0 0.0
        %262 = vmatprep.subr.mxu0 0.0
        %263 = vmatpush1.msra.mxu0 0.0
        %264 = vmatprep.subr.mxu0 0.0
        %265 = vmatpush1.msra.mxu0 0.0
        %266 = vmatprep.subr.mxu0 0.0
        %267 = vmatpush1.msra.mxu0 0.0
        %268 = vmatprep.subr.mxu0 0.0
        %269 = vmatpush1.msra.mxu0 0.0
        %270 = vmatprep.subr.mxu0 0.0
        %271 = vmatpush1.msra.mxu0 0.0
        %272 = vmatprep.subr.mxu0 0.0
        %273 = vmatpush1.msra.mxu0 0.0
        %274 = vmatprep.subr.mxu0 0.0
        %275 = vmatpush1.msra.mxu0 0.0
        %276 = vmatprep.subr.mxu0 0.0
        %277 = vmatpush1.msra.mxu0 %v248
        %278 = vmatprep.subr.mxu0 0.0
        %279 = vmatpush1.msra.mxu0 %v240
        %280 = vmatprep.subr.mxu0 0.0
        %281 = vmatpush1.msra.mxu0 %v239
        %282 = vmatprep.subr.mxu0 0.0
        %283 = vmatpush2.msra.mxu0 0.0
        %284 = vmatprep.subr.mxu0 0.0
        %285 = vmatpush2.msra.mxu0 0.0
        %286 = vmatprep.subr.mxu0 0.0
        %287 = vmatpush2.msra.mxu0 0.0
        %288 = vmatprep.subr.mxu0 0.0
        %289 = vmatpush2.msra.mxu0 0.0
        %290 = vmatprep.subr.mxu0 0.0
        %291 = vmatpush2.msra.mxu0 0.0
        %292 = vmatprep.subr.mxu0 0.0
        %293 = vmatpush2.msra.mxu0 0.0
        %294 = vmatprep.subr.mxu0 0.0
        %295 = vmatpush2.msra.mxu0 0.0
        %296 = vmatprep.subr.mxu0 0.0
        %297 = vmatpush2.msra.mxu0 0.0
        %298 = vmatprep.subr.mxu0 0.0
        %299 = vmatpush2.msra.mxu0 0.0
        %300 = vmatprep.subr.mxu0 0.0
        %301 = vmatpush2.msra.mxu0 0.0
        %302 = vmatprep.subr.mxu0 0.0
        %303 = vmatpush2.msra.mxu0 0.0
        %304 = vmatprep.subr.mxu0 0.0
        %305 = vmatpush2.msra.mxu0 0.0
        %306 = vmatprep.subr.mxu0 0.0
        %307 = vmatpush2.msra.mxu0 0.0
        %308 = vmatprep.subr.mxu0 0.0
        %309 = vmatpush2.msra.mxu0 0.0
        %310 = vmatprep.subr.mxu0 0.0
        %311 = vmatpush2.msra.mxu0 0.0
        %312 = vmatprep.subr.mxu0 0.0
        %313 = vmatpush2.msra.mxu0 0.0
        %314 = vmatprep.mubr.f32.mxu0 0.0
        %315 = vmatmul.mubr.f32.gmra.mxu0 %v244
        %v316 = vpop.f32.mrf.mxu0
        %v317 = vadd.f32 0.0, %v316
        %v318 = vpop.f32.mrf.mxu0
        %319 = vdwg.mxu0
        %v321 = vsel %vm242, %v235, 0
        %v324 = vsel %vm246, %v238, 0
        %326 = vmatprep.subr.mxu0 0.0
        %327 = vmatpush1.msra.mxu0 0.0
        %328 = vmatprep.subr.mxu0 0.0
        %329 = vmatpush1.msra.mxu0 0.0
        %330 = vmatprep.subr.mxu0 0.0
        %331 = vmatpush1.msra.mxu0 0.0
        %332 = vmatprep.subr.mxu0 0.0
        %333 = vmatpush1.msra.mxu0 0.0
        %334 = vmatprep.subr.mxu0 0.0
        %335 = vmatpush1.msra.mxu0 0.0
        %336 = vmatprep.subr.mxu0 0.0
        %337 = vmatpush1.msra.mxu0 0.0
        %338 = vmatprep.subr.mxu0 0.0
        %339 = vmatpush1.msra.mxu0 0.0
        %340 = vmatprep.subr.mxu0 0.0
        %341 = vmatpush1.msra.mxu0 0.0
        %342 = vmatprep.subr.mxu0 0.0
        %343 = vmatpush1.msra.mxu0 0.0
        %344 = vmatprep.subr.mxu0 0.0
        %345 = vmatpush1.msra.mxu0 0.0
        %346 = vmatprep.subr.mxu0 0.0
        %347 = vmatpush1.msra.mxu0 0.0
        %348 = vmatprep.subr.mxu0 0.0
        %349 = vmatpush1.msra.mxu0 0.0
        %350 = vmatprep.subr.mxu0 0.0
        %351 = vmatpush1.msra.mxu0 0.0
        %352 = vmatprep.subr.mxu0 0.0
        %353 = vmatpush1.msra.mxu0 %v324
        %354 = vmatprep.subr.mxu0 0.0
        %355 = vmatpush1.msra.mxu0 %v237
        %356 = vmatprep.subr.mxu0 0.0
        %357 = vmatpush1.msra.mxu0 %v236
        %358 = vmatprep.subr.mxu0 0.0
        %359 = vmatpush2.msra.mxu0 0.0
        %360 = vmatprep.subr.mxu0 0.0
        %361 = vmatpush2.msra.mxu0 0.0
        %362 = vmatprep.subr.mxu0 0.0
        %363 = vmatpush2.msra.mxu0 0.0
        %364 = vmatprep.subr.mxu0 0.0
        %365 = vmatpush2.msra.mxu0 0.0
        %366 = vmatprep.subr.mxu0 0.0
        %367 = vmatpush2.msra.mxu0 0.0
        %368 = vmatprep.subr.mxu0 0.0
        %369 = vmatpush2.msra.mxu0 0.0
        %370 = vmatprep.subr.mxu0 0.0
        %371 = vmatpush2.msra.mxu0 0.0
        %372 = vmatprep.subr.mxu0 0.0
        %373 = vmatpush2.msra.mxu0 0.0
        %374 = vmatprep.subr.mxu0 0.0
        %375 = vmatpush2.msra.mxu0 0.0
        %376 = vmatprep.subr.mxu0 0.0
        %377 = vmatpush2.msra.mxu0 0.0
        %378 = vmatprep.subr.mxu0 0.0
        %379 = vmatpush2.msra.mxu0 0.0
        %380 = vmatprep.subr.mxu0 0.0
        %381 = vmatpush2.msra.mxu0 0.0
        %382 = vmatprep.subr.mxu0 0.0
        %383 = vmatpush2.msra.mxu0 0.0
        %384 = vmatprep.subr.mxu0 0.0
        %385 = vmatpush2.msra.mxu0 0.0
        %386 = vmatprep.subr.mxu0 0.0
        %387 = vmatpush2.msra.mxu0 0.0
        %388 = vmatprep.subr.mxu0 0.0
        %389 = vmatpush2.msra.mxu0 0.0
        %390 = vmatprep.mubr.f32.mxu0 0.0
        %391 = vmatmul.mubr.f32.gmra.mxu0 %v321
        %v392 = vpop.f32.mrf.mxu0
        %v393 = vadd.f32 %v317, %v392
        %v394 = vpop.f32.mrf.mxu0
        %395 = vdwg.mxu0
        %v396 = vrot.slane %v228, 1
        %vm397 = vcmp.ge.s32.totalorder %v140, 7
        %v398 = vsel %vm397, 1, 0
        %vm399 = vcmp.eq.s32.totalorder %v398, 1
        %v400 = vsel %vm399, 0.0, %v396
        %v401 = vld [vmem:[%s1 + $0x58] sm:$0xff]
        %v402 = vld [vmem:[%s1 + $0x60] sm:$0xff]
        %v403 = vld [vmem:[%s1 + $0x68] sm:$0xf]
        %v405 = vsel %vm242, %v400, 0
        %v408 = vsel %vm246, %v403, 0
        %410 = vmatprep.subr.mxu0 0.0
        %411 = vmatpush1.msra.mxu0 0.0
        %412 = vmatprep.subr.mxu0 0.0
        %413 = vmatpush1.msra.mxu0 0.0
        %414 = vmatprep.subr.mxu0 0.0
        %415 = vmatpush1.msra.mxu0 0.0
        %416 = vmatprep.subr.mxu0 0.0
        %417 = vmatpush1.msra.mxu0 0.0
        %418 = vmatprep.subr.mxu0 0.0
        %419 = vmatpush1.msra.mxu0 0.0
        %420 = vmatprep.subr.mxu0 0.0
        %421 = vmatpush1.msra.mxu0 0.0
        %422 = vmatprep.subr.mxu0 0.0
        %423 = vmatpush1.msra.mxu0 0.0
        %424 = vmatprep.subr.mxu0 0.0
        %425 = vmatpush1.msra.mxu0 0.0
        %426 = vmatprep.subr.mxu0 0.0
        %427 = vmatpush1.msra.mxu0 0.0
        %428 = vmatprep.subr.mxu0 0.0
        %429 = vmatpush1.msra.mxu0 0.0
        %430 = vmatprep.subr.mxu0 0.0
        %431 = vmatpush1.msra.mxu0 0.0
        %432 = vmatprep.subr.mxu0 0.0
        %433 = vmatpush1.msra.mxu0 0.0
        %434 = vmatprep.subr.mxu0 0.0
        %435 = vmatpush1.msra.mxu0 0.0
        %436 = vmatprep.subr.mxu0 0.0
        %437 = vmatpush1.msra.mxu0 %v408
        %438 = vmatprep.subr.mxu0 0.0
        %439 = vmatpush1.msra.mxu0 %v402
        %440 = vmatprep.subr.mxu0 0.0
        %441 = vmatpush1.msra.mxu0 %v401
        %442 = vmatprep.subr.mxu0 0.0
        %443 = vmatpush2.msra.mxu0 0.0
        %444 = vmatprep.subr.mxu0 0.0
        %445 = vmatpush2.msra.mxu0 0.0
        %446 = vmatprep.subr.mxu0 0.0
        %447 = vmatpush2.msra.mxu0 0.0
        %448 = vmatprep.subr.mxu0 0.0
        %449 = vmatpush2.msra.mxu0 0.0
        %450 = vmatprep.subr.mxu0 0.0
        %451 = vmatpush2.msra.mxu0 0.0
        %452 = vmatprep.subr.mxu0 0.0
        %453 = vmatpush2.msra.mxu0 0.0
        %454 = vmatprep.subr.mxu0 0.0
        %455 = vmatpush2.msra.mxu0 0.0
        %456 = vmatprep.subr.mxu0 0.0
        %457 = vmatpush2.msra.mxu0 0.0
        %458 = vmatprep.subr.mxu0 0.0
        %459 = vmatpush2.msra.mxu0 0.0
        %460 = vmatprep.subr.mxu0 0.0
        %461 = vmatpush2.msra.mxu0 0.0
        %462 = vmatprep.subr.mxu0 0.0
        %463 = vmatpush2.msra.mxu0 0.0
        %464 = vmatprep.subr.mxu0 0.0
        %465 = vmatpush2.msra.mxu0 0.0
        %466 = vmatprep.subr.mxu0 0.0
        %467 = vmatpush2.msra.mxu0 0.0
        %468 = vmatprep.subr.mxu0 0.0
        %469 = vmatpush2.msra.mxu0 0.0
        %470 = vmatprep.subr.mxu0 0.0
        %471 = vmatpush2.msra.mxu0 0.0
        %472 = vmatprep.subr.mxu0 0.0
        %473 = vmatpush2.msra.mxu0 0.0
        %474 = vmatprep.mubr.f32.mxu0 0.0
        %475 = vmatmul.mubr.f32.gmra.mxu0 %v405
        %v476 = vpop.f32.mrf.mxu0
        %v477 = vadd.f32 0.0, %v476
        %v478 = vpop.f32.mrf.mxu0
        %479 = vdwg.mxu0
        %v480 = vadd.f32 %v393, %v477
        %v481 = vld [vmem:[%s1 + $0x70] sm:$0x1]
        %v482 = vlaneseq
        %v483 = vshrl.u32 %v482, 7
        %v484 = vsub.s32 0, %v483
        %v485 = vrot.slane %v481, %v484
        %v486 = vadd.f32 %v480, %v485
        %vm487 = vcmp.ge.f32.partialorder %v486, 0.0
        %v488 = vmul.f32 %v486, 0.1
        %v489 = vsel %vm487, %v486, %v488
        %v490 = vrot.slane %v489, 7
        %v491 = vsel %vm234, 0.0, %v490
        %v492 = vld [vmem:[%s1 + $0x78] sm:$0xff]
        %v493 = vld [vmem:[%s1 + $0x80] sm:$0xff]
        %v494 = vld [vmem:[%s1 + $0x88] sm:$0xff]
        %v495 = vld [vmem:[%s1 + $0x90] sm:$0xff]
        %v496 = vld [vmem:[%s1 + $0x98] sm:$0xff]
        %v497 = vld [vmem:[%s1 + $0xa0] sm:$0xff]
        %v498 = vld [vmem:[%s1 + $0xa8] sm:$0xff]
        %v499 = vld [vmem:[%s1 + $0xb0] sm:$0xff]
        %vm500 = vcmask 261120
        %v502 = vsel %vm500, %v489, 0
        %504 = vmatprep.subr.mxu0 0.0
        %505 = vmatpush1.msra.mxu0 0.0
        %506 = vmatprep.subr.mxu0 0.0
        %507 = vmatpush1.msra.mxu0 0.0
        %508 = vmatprep.subr.mxu0 0.0
        %509 = vmatpush1.msra.mxu0 0.0
        %510 = vmatprep.subr.mxu0 0.0
        %511 = vmatpush1.msra.mxu0 0.0
        %512 = vmatprep.subr.mxu0 0.0
        %513 = vmatpush1.msra.mxu0 0.0
        %514 = vmatprep.subr.mxu0 0.0
        %515 = vmatpush1.msra.mxu0 0.0
        %516 = vmatprep.subr.mxu0 0.0
        %517 = vmatpush1.msra.mxu0 0.0
        %518 = vmatprep.subr.mxu0 0.0
        %519 = vmatpush1.msra.mxu0 0.0
        %520 = vmatprep.subr.mxu0 0.0
        %521 = vmatpush1.msra.mxu0 0.0
        %522 = vmatprep.subr.mxu0 0.0
        %523 = vmatpush1.msra.mxu0 0.0
        %524 = vmatprep.subr.mxu0 0.0
        %525 = vmatpush1.msra.mxu0 0.0
        %526 = vmatprep.subr.mxu0 0.0
        %527 = vmatpush1.msra.mxu0 0.0
        %528 = vmatprep.subr.mxu0 0.0
        %529 = vmatpush1.msra.mxu0 %v499
        %530 = vmatprep.subr.mxu0 0.0
        %531 = vmatpush1.msra.mxu0 %v498
        %532 = vmatprep.subr.mxu0 0.0
        %533 = vmatpush1.msra.mxu0 %v497
        %534 = vmatprep.subr.mxu0 0.0
        %535 = vmatpush1.msra.mxu0 %v496
        %536 = vmatprep.subr.mxu0 0.0
        %537 = vmatpush2.msra.mxu0 0.0
        %538 = vmatprep.subr.mxu0 0.0
        %539 = vmatpush2.msra.mxu0 0.0
        %540 = vmatprep.subr.mxu0 0.0
        %541 = vmatpush2.msra.mxu0 0.0
        %542 = vmatprep.subr.mxu0 0.0
        %543 = vmatpush2.msra.mxu0 0.0
        %544 = vmatprep.subr.mxu0 0.0
        %545 = vmatpush2.msra.mxu0 0.0
        %546 = vmatprep.subr.mxu0 0.0
        %547 = vmatpush2.msra.mxu0 0.0
        %548 = vmatprep.subr.mxu0 0.0
        %549 = vmatpush2.msra.mxu0 0.0
        %550 = vmatprep.subr.mxu0 0.0
        %551 = vmatpush2.msra.mxu0 0.0
        %552 = vmatprep.subr.mxu0 0.0
        %553 = vmatpush2.msra.mxu0 0.0
        %554 = vmatprep.subr.mxu0 0.0
        %555 = vmatpush2.msra.mxu0 0.0
        %556 = vmatprep.subr.mxu0 0.0
        %557 = vmatpush2.msra.mxu0 0.0
        %558 = vmatprep.subr.mxu0 0.0
        %559 = vmatpush2.msra.mxu0 0.0
        %560 = vmatprep.subr.mxu0 0.0
        %561 = vmatpush2.msra.mxu0 0.0
        %562 = vmatprep.subr.mxu0 0.0
        %563 = vmatpush2.msra.mxu0 0.0
        %564 = vmatprep.subr.mxu0 0.0
        %565 = vmatpush2.msra.mxu0 0.0
        %566 = vmatprep.subr.mxu0 0.0
        %567 = vmatpush2.msra.mxu0 0.0
        %568 = vmatprep.mubr.f32.mxu0 0.0
        %569 = vmatmul.mubr.f32.gmra.mxu0 %v502
        %v570 = vpop.f32.mrf.mxu0
        %v571 = vadd.f32 0.0, %v570
        %v572 = vpop.f32.mrf.mxu0
        %573 = vdwg.mxu0
        %v575 = vsel %vm500, %v491, 0
        %577 = vmatprep.subr.mxu0 0.0
        %578 = vmatpush1.msra.mxu0 0.0
        %579 = vmatprep.subr.mxu0 0.0
        %580 = vmatpush1.msra.mxu0 0.0
        %581 = vmatprep.subr.mxu0 0.0
        %582 = vmatpush1.msra.mxu0 0.0
        %583 = vmatprep.subr.mxu0 0.0
        %584 = vmatpush1.msra.mxu0 0.0
        %585 = vmatprep.subr.mxu0 0.0
        %586 = vmatpush1.msra.mxu0 0.0
        %587 = vmatprep.subr.mxu0 0.0
        %588 = vmatpush1.msra.mxu0 0.0
        %589 = vmatprep.subr.mxu0 0.0
        %590 = vmatpush1.msra.mxu0 0.0
        %591 = vmatprep.subr.mxu0 0.0
        %592 = vmatpush1.msra.mxu0 0.0
        %593 = vmatprep.subr.mxu0 0.0
        %594 = vmatpush1.msra.mxu0 0.0
        %595 = vmatprep.subr.mxu0 0.0
        %596 = vmatpush1.msra.mxu0 0.0
        %597 = vmatprep.subr.mxu0 0.0
        %598 = vmatpush1.msra.mxu0 0.0
        %599 = vmatprep.subr.mxu0 0.0
        %600 = vmatpush1.msra.mxu0 0.0
        %601 = vmatprep.subr.mxu0 0.0
        %602 = vmatpush1.msra.mxu0 %v495
        %603 = vmatprep.subr.mxu0 0.0
        %604 = vmatpush1.msra.mxu0 %v494
        %605 = vmatprep.subr.mxu0 0.0
        %606 = vmatpush1.msra.mxu0 %v493
        %607 = vmatprep.subr.mxu0 0.0
        %608 = vmatpush1.msra.mxu0 %v492
        %609 = vmatprep.subr.mxu0 0.0
        %610 = vmatpush2.msra.mxu0 0.0
        %611 = vmatprep.subr.mxu0 0.0
        %612 = vmatpush2.msra.mxu0 0.0
        %613 = vmatprep.subr.mxu0 0.0
        %614 = vmatpush2.msra.mxu0 0.0
        %615 = vmatprep.subr.mxu0 0.0
        %616 = vmatpush2.msra.mxu0 0.0
        %617 = vmatprep.subr.mxu0 0.0
        %618 = vmatpush2.msra.mxu0 0.0
        %619 = vmatprep.subr.mxu0 0.0
        %620 = vmatpush2.msra.mxu0 0.0
        %621 = vmatprep.subr.mxu0 0.0
        %622 = vmatpush2.msra.mxu0 0.0
        %623 = vmatprep.subr.mxu0 0.0
        %624 = vmatpush2.msra.mxu0 0.0
        %625 = vmatprep.subr.mxu0 0.0
        %626 = vmatpush2.msra.mxu0 0.0
        %627 = vmatprep.subr.mxu0 0.0
        %628 = vmatpush2.msra.mxu0 0.0
        %629 = vmatprep.subr.mxu0 0.0
        %630 = vmatpush2.msra.mxu0 0.0
        %631 = vmatprep.subr.mxu0 0.0
        %632 = vmatpush2.msra.mxu0 0.0
        %633 = vmatprep.subr.mxu0 0.0
        %634 = vmatpush2.msra.mxu0 0.0
        %635 = vmatprep.subr.mxu0 0.0
        %636 = vmatpush2.msra.mxu0 0.0
        %637 = vmatprep.subr.mxu0 0.0
        %638 = vmatpush2.msra.mxu0 0.0
        %639 = vmatprep.subr.mxu0 0.0
        %640 = vmatpush2.msra.mxu0 0.0
        %641 = vmatprep.mubr.f32.mxu0 0.0
        %642 = vmatmul.mubr.f32.gmra.mxu0 %v575
        %v643 = vpop.f32.mrf.mxu0
        %v644 = vadd.f32 %v571, %v643
        %v645 = vpop.f32.mrf.mxu0
        %646 = vdwg.mxu0
        %v647 = vrot.slane %v489, 1
        %v648 = vsel %vm399, 0.0, %v647
        %v649 = vld [vmem:[%s1 + $0xb8] sm:$0xff]
        %v650 = vld [vmem:[%s1 + $0xc0] sm:$0xff]
        %v651 = vld [vmem:[%s1 + $0xc8] sm:$0xff]
        %v652 = vld [vmem:[%s1 + $0xd0] sm:$0xff]
        %v654 = vsel %vm500, %v648, 0
        %656 = vmatprep.subr.mxu0 0.0
        %657 = vmatpush1.msra.mxu0 0.0
        %658 = vmatprep.subr.mxu0 0.0
        %659 = vmatpush1.msra.mxu0 0.0
        %660 = vmatprep.subr.mxu0 0.0
        %661 = vmatpush1.msra.mxu0 0.0
        %662 = vmatprep.subr.mxu0 0.0
        %663 = vmatpush1.msra.mxu0 0.0
        %664 = vmatprep.subr.mxu0 0.0
        %665 = vmatpush1.msra.mxu0 0.0
        %666 = vmatprep.subr.mxu0 0.0
        %667 = vmatpush1.msra.mxu0 0.0
        %668 = vmatprep.subr.mxu0 0.0
        %669 = vmatpush1.msra.mxu0 0.0
        %670 = vmatprep.subr.mxu0 0.0
        %671 = vmatpush1.msra.mxu0 0.0
        %672 = vmatprep.subr.mxu0 0.0
        %673 = vmatpush1.msra.mxu0 0.0
        %674 = vmatprep.subr.mxu0 0.0
        %675 = vmatpush1.msra.mxu0 0.0
        %676 = vmatprep.subr.mxu0 0.0
        %677 = vmatpush1.msra.mxu0 0.0
        %678 = vmatprep.subr.mxu0 0.0
        %679 = vmatpush1.msra.mxu0 0.0
        %680 = vmatprep.subr.mxu0 0.0
        %681 = vmatpush1.msra.mxu0 %v652
        %682 = vmatprep.subr.mxu0 0.0
        %683 = vmatpush1.msra.mxu0 %v651
        %684 = vmatprep.subr.mxu0 0.0
        %685 = vmatpush1.msra.mxu0 %v650
        %686 = vmatprep.subr.mxu0 0.0
        %687 = vmatpush1.msra.mxu0 %v649
        %688 = vmatprep.subr.mxu0 0.0
        %689 = vmatpush2.msra.mxu0 0.0
        %690 = vmatprep.subr.mxu0 0.0
        %691 = vmatpush2.msra.mxu0 0.0
        %692 = vmatprep.subr.mxu0 0.0
        %693 = vmatpush2.msra.mxu0 0.0
        %694 = vmatprep.subr.mxu0 0.0
        %695 = vmatpush2.msra.mxu0 0.0
        %696 = vmatprep.subr.mxu0 0.0
        %697 = vmatpush2.msra.mxu0 0.0
        %698 = vmatprep.subr.mxu0 0.0
        %699 = vmatpush2.msra.mxu0 0.0
        %700 = vmatprep.subr.mxu0 0.0
        %701 = vmatpush2.msra.mxu0 0.0
        %702 = vmatprep.subr.mxu0 0.0
        %703 = vmatpush2.msra.mxu0 0.0
        %704 = vmatprep.subr.mxu0 0.0
        %705 = vmatpush2.msra.mxu0 0.0
        %706 = vmatprep.subr.mxu0 0.0
        %707 = vmatpush2.msra.mxu0 0.0
        %708 = vmatprep.subr.mxu0 0.0
        %709 = vmatpush2.msra.mxu0 0.0
        %710 = vmatprep.subr.mxu0 0.0
        %711 = vmatpush2.msra.mxu0 0.0
        %712 = vmatprep.subr.mxu0 0.0
        %713 = vmatpush2.msra.mxu0 0.0
        %714 = vmatprep.subr.mxu0 0.0
        %715 = vmatpush2.msra.mxu0 0.0
        %716 = vmatprep.subr.mxu0 0.0
        %717 = vmatpush2.msra.mxu0 0.0
        %718 = vmatprep.subr.mxu0 0.0
        %719 = vmatpush2.msra.mxu0 0.0
        %720 = vmatprep.mubr.f32.mxu0 0.0
        %721 = vmatmul.mubr.f32.gmra.mxu0 %v654
        %v722 = vpop.f32.mrf.mxu0
        %v723 = vadd.f32 0.0, %v722
        %v724 = vpop.f32.mrf.mxu0
        %725 = vdwg.mxu0
        %v726 = vadd.f32 %v644, %v723
        %v727 = vld [vmem:[%s1 + $0xd8] sm:$0x1]
        %v728 = vlaneseq
        %v729 = vshrl.u32 %v728, 7
        %v730 = vsub.s32 0, %v729
        %v731 = vrot.slane %v727, %v730
        %v732 = vadd.f32 %v726, %v731
        %vm733 = vcmp.ge.f32.partialorder %v732, 0.0
        %v734 = vmul.f32 %v732, 0.1
        %v735 = vsel %vm733, %v732, %v734
        %v736 = vrot.slane %v735, 7
        %v737 = vsel %vm234, 0.0, %v736
        %v738 = vld [vmem:[%s1 + $0xe0] sm:$0xff]
        %v739 = vld [vmem:[%s1 + $0xe8] sm:$0xff]
        %v740 = vld [vmem:[%s1 + $0xf0] sm:$0xff]
        %v741 = vld [vmem:[%s1 + $0xf8] sm:$0xff]
        %v742 = vld [vmem:[%s1 + $0x100] sm:$0xff]
        %v743 = vld [vmem:[%s1 + $0x108] sm:$0xff]
        %v744 = vld [vmem:[%s1 + $0x110] sm:$0xff]
        %v745 = vld [vmem:[%s1 + $0x118] sm:$0xff]
        %v747 = vsel %vm500, %v735, 0
        %749 = vmatprep.subr.mxu0 0.0
        %750 = vmatpush1.msra.mxu0 0.0
        %751 = vmatprep.subr.mxu0 0.0
        %752 = vmatpush1.msra.mxu0 0.0
        %753 = vmatprep.subr.mxu0 0.0
        %754 = vmatpush1.msra.mxu0 0.0
        %755 = vmatprep.subr.mxu0 0.0
        %756 = vmatpush1.msra.mxu0 0.0
        %757 = vmatprep.subr.mxu0 0.0
        %758 = vmatpush1.msra.mxu0 0.0
        %759 = vmatprep.subr.mxu0 0.0
        %760 = vmatpush1.msra.mxu0 0.0
        %761 = vmatprep.subr.mxu0 0.0
        %762 = vmatpush1.msra.mxu0 0.0
        %763 = vmatprep.subr.mxu0 0.0
        %764 = vmatpush1.msra.mxu0 0.0
        %765 = vmatprep.subr.mxu0 0.0
        %766 = vmatpush1.msra.mxu0 0.0
        %767 = vmatprep.subr.mxu0 0.0
        %768 = vmatpush1.msra.mxu0 0.0
        %769 = vmatprep.subr.mxu0 0.0
        %770 = vmatpush1.msra.mxu0 0.0
        %771 = vmatprep.subr.mxu0 0.0
        %772 = vmatpush1.msra.mxu0 0.0
        %773 = vmatprep.subr.mxu0 0.0
        %774 = vmatpush1.msra.mxu0 %v745
        %775 = vmatprep.subr.mxu0 0.0
        %776 = vmatpush1.msra.mxu0 %v744
        %777 = vmatprep.subr.mxu0 0.0
        %778 = vmatpush1.msra.mxu0 %v743
        %779 = vmatprep.subr.mxu0 0.0
        %780 = vmatpush1.msra.mxu0 %v742
        %781 = vmatprep.subr.mxu0 0.0
        %782 = vmatpush2.msra.mxu0 0.0
        %783 = vmatprep.subr.mxu0 0.0
        %784 = vmatpush2.msra.mxu0 0.0
        %785 = vmatprep.subr.mxu0 0.0
        %786 = vmatpush2.msra.mxu0 0.0
        %787 = vmatprep.subr.mxu0 0.0
        %788 = vmatpush2.msra.mxu0 0.0
        %789 = vmatprep.subr.mxu0 0.0
        %790 = vmatpush2.msra.mxu0 0.0
        %791 = vmatprep.subr.mxu0 0.0
        %792 = vmatpush2.msra.mxu0 0.0
        %793 = vmatprep.subr.mxu0 0.0
        %794 = vmatpush2.msra.mxu0 0.0
        %795 = vmatprep.subr.mxu0 0.0
        %796 = vmatpush2.msra.mxu0 0.0
        %797 = vmatprep.subr.mxu0 0.0
        %798 = vmatpush2.msra.mxu0 0.0
        %799 = vmatprep.subr.mxu0 0.0
        %800 = vmatpush2.msra.mxu0 0.0
        %801 = vmatprep.subr.mxu0 0.0
        %802 = vmatpush2.msra.mxu0 0.0
        %803 = vmatprep.subr.mxu0 0.0
        %804 = vmatpush2.msra.mxu0 0.0
        %805 = vmatprep.subr.mxu0 0.0
        %806 = vmatpush2.msra.mxu0 0.0
        %807 = vmatprep.subr.mxu0 0.0
        %808 = vmatpush2.msra.mxu0 0.0
        %809 = vmatprep.subr.mxu0 0.0
        %810 = vmatpush2.msra.mxu0 0.0
        %811 = vmatprep.subr.mxu0 0.0
        %812 = vmatpush2.msra.mxu0 0.0
        %813 = vmatprep.mubr.f32.mxu0 0.0
        %814 = vmatmul.mubr.f32.gmra.mxu0 %v747
        %v815 = vpop.f32.mrf.mxu0
        %v816 = vadd.f32 0.0, %v815
        %v817 = vpop.f32.mrf.mxu0
        %818 = vdwg.mxu0
        %v820 = vsel %vm500, %v737, 0
        %822 = vmatprep.subr.mxu0 0.0
        %823 = vmatpush1.msra.mxu0 0.0
        %824 = vmatprep.subr.mxu0 0.0
        %825 = vmatpush1.msra.mxu0 0.0
        %826 = vmatprep.subr.mxu0 0.0
        %827 = vmatpush1.msra.mxu0 0.0
        %828 = vmatprep.subr.mxu0 0.0
        %829 = vmatpush1.msra.mxu0 0.0
        %830 = vmatprep.subr.mxu0 0.0
        %831 = vmatpush1.msra.mxu0 0.0
        %832 = vmatprep.subr.mxu0 0.0
        %833 = vmatpush1.msra.mxu0 0.0
        %834 = vmatprep.subr.mxu0 0.0
        %835 = vmatpush1.msra.mxu0 0.0
        %836 = vmatprep.subr.mxu0 0.0
        %837 = vmatpush1.msra.mxu0 0.0
        %838 = vmatprep.subr.mxu0 0.0
        %839 = vmatpush1.msra.mxu0 0.0
        %840 = vmatprep.subr.mxu0 0.0
        %841 = vmatpush1.msra.mxu0 0.0
        %842 = vmatprep.subr.mxu0 0.0
        %843 = vmatpush1.msra.mxu0 0.0
        %844 = vmatprep.subr.mxu0 0.0
        %845 = vmatpush1.msra.mxu0 0.0
        %846 = vmatprep.subr.mxu0 0.0
        %847 = vmatpush1.msra.mxu0 %v741
        %848 = vmatprep.subr.mxu0 0.0
        %849 = vmatpush1.msra.mxu0 %v740
        %850 = vmatprep.subr.mxu0 0.0
        %851 = vmatpush1.msra.mxu0 %v739
        %852 = vmatprep.subr.mxu0 0.0
        %853 = vmatpush1.msra.mxu0 %v738
        %854 = vmatprep.subr.mxu0 0.0
        %855 = vmatpush2.msra.mxu0 0.0
        %856 = vmatprep.subr.mxu0 0.0
        %857 = vmatpush2.msra.mxu0 0.0
        %858 = vmatprep.subr.mxu0 0.0
        %859 = vmatpush2.msra.mxu0 0.0
        %860 = vmatprep.subr.mxu0 0.0
        %861 = vmatpush2.msra.mxu0 0.0
        %862 = vmatprep.subr.mxu0 0.0
        %863 = vmatpush2.msra.mxu0 0.0
        %864 = vmatprep.subr.mxu0 0.0
        %865 = vmatpush2.msra.mxu0 0.0
        %866 = vmatprep.subr.mxu0 0.0
        %867 = vmatpush2.msra.mxu0 0.0
        %868 = vmatprep.subr.mxu0 0.0
        %869 = vmatpush2.msra.mxu0 0.0
        %870 = vmatprep.subr.mxu0 0.0
        %871 = vmatpush2.msra.mxu0 0.0
        %872 = vmatprep.subr.mxu0 0.0
        %873 = vmatpush2.msra.mxu0 0.0
        %874 = vmatprep.subr.mxu0 0.0
        %875 = vmatpush2.msra.mxu0 0.0
        %876 = vmatprep.subr.mxu0 0.0
        %877 = vmatpush2.msra.mxu0 0.0
        %878 = vmatprep.subr.mxu0 0.0
        %879 = vmatpush2.msra.mxu0 0.0
        %880 = vmatprep.subr.mxu0 0.0
        %881 = vmatpush2.msra.mxu0 0.0
        %882 = vmatprep.subr.mxu0 0.0
        %883 = vmatpush2.msra.mxu0 0.0
        %884 = vmatprep.subr.mxu0 0.0
        %885 = vmatpush2.msra.mxu0 0.0
        %886 = vmatprep.mubr.f32.mxu0 0.0
        %887 = vmatmul.mubr.f32.gmra.mxu0 %v820
        %v888 = vpop.f32.mrf.mxu0
        %v889 = vadd.f32 %v816, %v888
        %v890 = vpop.f32.mrf.mxu0
        %891 = vdwg.mxu0
        %v892 = vrot.slane %v735, 1
        %v893 = vsel %vm399, 0.0, %v892
        %v894 = vld [vmem:[%s1 + $0x120] sm:$0xff]
        %v895 = vld [vmem:[%s1 + $0x128] sm:$0xff]
        %v896 = vld [vmem:[%s1 + $0x130] sm:$0xff]
        %v897 = vld [vmem:[%s1 + $0x138] sm:$0xff]
        %v899 = vsel %vm500, %v893, 0
        %901 = vmatprep.subr.mxu0 0.0
        %902 = vmatpush1.msra.mxu0 0.0
        %903 = vmatprep.subr.mxu0 0.0
        %904 = vmatpush1.msra.mxu0 0.0
        %905 = vmatprep.subr.mxu0 0.0
        %906 = vmatpush1.msra.mxu0 0.0
        %907 = vmatprep.subr.mxu0 0.0
        %908 = vmatpush1.msra.mxu0 0.0
        %909 = vmatprep.subr.mxu0 0.0
        %910 = vmatpush1.msra.mxu0 0.0
        %911 = vmatprep.subr.mxu0 0.0
        %912 = vmatpush1.msra.mxu0 0.0
        %913 = vmatprep.subr.mxu0 0.0
        %914 = vmatpush1.msra.mxu0 0.0
        %915 = vmatprep.subr.mxu0 0.0
        %916 = vmatpush1.msra.mxu0 0.0
        %917 = vmatprep.subr.mxu0 0.0
        %918 = vmatpush1.msra.mxu0 0.0
        %919 = vmatprep.subr.mxu0 0.0
        %920 = vmatpush1.msra.mxu0 0.0
        %921 = vmatprep.subr.mxu0 0.0
        %922 = vmatpush1.msra.mxu0 0.0
        %923 = vmatprep.subr.mxu0 0.0
        %924 = vmatpush1.msra.mxu0 0.0
        %925 = vmatprep.subr.mxu0 0.0
        %926 = vmatpush1.msra.mxu0 %v897
        %927 = vmatprep.subr.mxu0 0.0
        %928 = vmatpush1.msra.mxu0 %v896
        %929 = vmatprep.subr.mxu0 0.0
        %930 = vmatpush1.msra.mxu0 %v895
        %931 = vmatprep.subr.mxu0 0.0
        %932 = vmatpush1.msra.mxu0 %v894
        %933 = vmatprep.subr.mxu0 0.0
        %934 = vmatpush2.msra.mxu0 0.0
        %935 = vmatprep.subr.mxu0 0.0
        %936 = vmatpush2.msra.mxu0 0.0
        %937 = vmatprep.subr.mxu0 0.0
        %938 = vmatpush2.msra.mxu0 0.0
        %939 = vmatprep.subr.mxu0 0.0
        %940 = vmatpush2.msra.mxu0 0.0
        %941 = vmatprep.subr.mxu0 0.0
        %942 = vmatpush2.msra.mxu0 0.0
        %943 = vmatprep.subr.mxu0 0.0
        %944 = vmatpush2.msra.mxu0 0.0
        %945 = vmatprep.subr.mxu0 0.0
        %946 = vmatpush2.msra.mxu0 0.0
        %947 = vmatprep.subr.mxu0 0.0
        %948 = vmatpush2.msra.mxu0 0.0
        %949 = vmatprep.subr.mxu0 0.0
        %950 = vmatpush2.msra.mxu0 0.0
        %951 = vmatprep.subr.mxu0 0.0
        %952 = vmatpush2.msra.mxu0 0.0
        %953 = vmatprep.subr.mxu0 0.0
        %954 = vmatpush2.msra.mxu0 0.0
        %955 = vmatprep.subr.mxu0 0.0
        %956 = vmatpush2.msra.mxu0 0.0
        %957 = vmatprep.subr.mxu0 0.0
        %958 = vmatpush2.msra.mxu0 0.0
        %959 = vmatprep.subr.mxu0 0.0
        %960 = vmatpush2.msra.mxu0 0.0
        %961 = vmatprep.subr.mxu0 0.0
        %962 = vmatpush2.msra.mxu0 0.0
        %963 = vmatprep.subr.mxu0 0.0
        %964 = vmatpush2.msra.mxu0 0.0
        %965 = vmatprep.mubr.f32.mxu0 0.0
        %966 = vmatmul.mubr.f32.gmra.mxu0 %v899
        %v967 = vpop.f32.mrf.mxu0
        %v968 = vadd.f32 0.0, %v967
        %v969 = vpop.f32.mrf.mxu0
        %970 = vdwg.mxu0
        %v971 = vadd.f32 %v889, %v968
        %v972 = vld [vmem:[%s1 + $0x140] sm:$0x1]
        %v973 = vlaneseq
        %v974 = vshrl.u32 %v973, 7
        %v975 = vsub.s32 0, %v974
        %v976 = vrot.slane %v972, %v975
        %v977 = vadd.f32 %v971, %v976
        %vm978 = vcmp.ge.f32.partialorder %v977, 0.0
        %v979 = vmul.f32 %v977, 0.1
        %v980 = vsel %vm978, %v977, %v979
        %v981 = vrot.slane %v980, 7
        %v982 = vsel %vm234, 0.0, %v981
        %v983 = vld [vmem:[%s1 + $0x148] sm:$0xff]
        %v984 = vld [vmem:[%s1 + $0x150] sm:$0xff]
        %v985 = vld [vmem:[%s1 + $0x158] sm:$0xff]
        %v986 = vld [vmem:[%s1 + $0x160] sm:$0xff]
        %v987 = vld [vmem:[%s1 + $0x168] sm:$0xff]
        %v988 = vld [vmem:[%s1 + $0x170] sm:$0xff]
        %v989 = vld [vmem:[%s1 + $0x178] sm:$0xff]
        %v990 = vld [vmem:[%s1 + $0x180] sm:$0xff]
        %v992 = vsel %vm500, %v980, 0
        %994 = vmatprep.subr.mxu0 0.0
        %995 = vmatpush1.msra.mxu0 0.0
        %996 = vmatprep.subr.mxu0 0.0
        %997 = vmatpush1.msra.mxu0 0.0
        %998 = vmatprep.subr.mxu0 0.0
        %999 = vmatpush1.msra.mxu0 0.0
        %1000 = vmatprep.subr.mxu0 0.0
        %1001 = vmatpush1.msra.mxu0 0.0
        %1002 = vmatprep.subr.mxu0 0.0
        %1003 = vmatpush1.msra.mxu0 0.0
        %1004 = vmatprep.subr.mxu0 0.0
        %1005 = vmatpush1.msra.mxu0 0.0
        %1006 = vmatprep.subr.mxu0 0.0
        %1007 = vmatpush1.msra.mxu0 0.0
        %1008 = vmatprep.subr.mxu0 0.0
        %1009 = vmatpush1.msra.mxu0 0.0
        %1010 = vmatprep.subr.mxu0 0.0
        %1011 = vmatpush1.msra.mxu0 0.0
        %1012 = vmatprep.subr.mxu0 0.0
        %1013 = vmatpush1.msra.mxu0 0.0
        %1014 = vmatprep.subr.mxu0 0.0
        %1015 = vmatpush1.msra.mxu0 0.0
        %1016 = vmatprep.subr.mxu0 0.0
        %1017 = vmatpush1.msra.mxu0 0.0
        %1018 = vmatprep.subr.mxu0 0.0
        %1019 = vmatpush1.msra.mxu0 %v990
        %1020 = vmatprep.subr.mxu0 0.0
        %1021 = vmatpush1.msra.mxu0 %v989
        %1022 = vmatprep.subr.mxu0 0.0
        %1023 = vmatpush1.msra.mxu0 %v988
        %1024 = vmatprep.subr.mxu0 0.0
        %1025 = vmatpush1.msra.mxu0 %v987
        %1026 = vmatprep.subr.mxu0 0.0
        %1027 = vmatpush2.msra.mxu0 0.0
        %1028 = vmatprep.subr.mxu0 0.0
        %1029 = vmatpush2.msra.mxu0 0.0
        %1030 = vmatprep.subr.mxu0 0.0
        %1031 = vmatpush2.msra.mxu0 0.0
        %1032 = vmatprep.subr.mxu0 0.0
        %1033 = vmatpush2.msra.mxu0 0.0
        %1034 = vmatprep.subr.mxu0 0.0
        %1035 = vmatpush2.msra.mxu0 0.0
        %1036 = vmatprep.subr.mxu0 0.0
        %1037 = vmatpush2.msra.mxu0 0.0
        %1038 = vmatprep.subr.mxu0 0.0
        %1039 = vmatpush2.msra.mxu0 0.0
        %1040 = vmatprep.subr.mxu0 0.0
        %1041 = vmatpush2.msra.mxu0 0.0
        %1042 = vmatprep.subr.mxu0 0.0
        %1043 = vmatpush2.msra.mxu0 0.0
        %1044 = vmatprep.subr.mxu0 0.0
        %1045 = vmatpush2.msra.mxu0 0.0
        %1046 = vmatprep.subr.mxu0 0.0
        %1047 = vmatpush2.msra.mxu0 0.0
        %1048 = vmatprep.subr.mxu0 0.0
        %1049 = vmatpush2.msra.mxu0 0.0
        %1050 = vmatprep.subr.mxu0 0.0
        %1051 = vmatpush2.msra.mxu0 0.0
        %1052 = vmatprep.subr.mxu0 0.0
        %1053 = vmatpush2.msra.mxu0 0.0
        %1054 = vmatprep.subr.mxu0 0.0
        %1055 = vmatpush2.msra.mxu0 0.0
        %1056 = vmatprep.subr.mxu0 0.0
        %1057 = vmatpush2.msra.mxu0 0.0
        %1058 = vmatprep.mubr.f32.mxu0 0.0
        %1059 = vmatmul.mubr.f32.gmra.mxu0 %v992
        %v1060 = vpop.f32.mrf.mxu0
        %v1061 = vadd.f32 0.0, %v1060
        %v1062 = vpop.f32.mrf.mxu0
        %1063 = vdwg.mxu0
        %v1065 = vsel %vm500, %v982, 0
        %1067 = vmatprep.subr.mxu0 0.0
        %1068 = vmatpush1.msra.mxu0 0.0
        %1069 = vmatprep.subr.mxu0 0.0
        %1070 = vmatpush1.msra.mxu0 0.0
        %1071 = vmatprep.subr.mxu0 0.0
        %1072 = vmatpush1.msra.mxu0 0.0
        %1073 = vmatprep.subr.mxu0 0.0
        %1074 = vmatpush1.msra.mxu0 0.0
        %1075 = vmatprep.subr.mxu0 0.0
        %1076 = vmatpush1.msra.mxu0 0.0
        %1077 = vmatprep.subr.mxu0 0.0
        %1078 = vmatpush1.msra.mxu0 0.0
        %1079 = vmatprep.subr.mxu0 0.0
        %1080 = vmatpush1.msra.mxu0 0.0
        %1081 = vmatprep.subr.mxu0 0.0
        %1082 = vmatpush1.msra.mxu0 0.0
        %1083 = vmatprep.subr.mxu0 0.0
        %1084 = vmatpush1.msra.mxu0 0.0
        %1085 = vmatprep.subr.mxu0 0.0
        %1086 = vmatpush1.msra.mxu0 0.0
        %1087 = vmatprep.subr.mxu0 0.0
        %1088 = vmatpush1.msra.mxu0 0.0
        %1089 = vmatprep.subr.mxu0 0.0
        %1090 = vmatpush1.msra.mxu0 0.0
        %1091 = vmatprep.subr.mxu0 0.0
        %1092 = vmatpush1.msra.mxu0 %v986
        %1093 = vmatprep.subr.mxu0 0.0
        %1094 = vmatpush1.msra.mxu0 %v985
        %1095 = vmatprep.subr.mxu0 0.0
        %1096 = vmatpush1.msra.mxu0 %v984
        %1097 = vmatprep.subr.mxu0 0.0
        %1098 = vmatpush1.msra.mxu0 %v983
        %1099 = vmatprep.subr.mxu0 0.0
        %1100 = vmatpush2.msra.mxu0 0.0
        %1101 = vmatprep.subr.mxu0 0.0
        %1102 = vmatpush2.msra.mxu0 0.0
        %1103 = vmatprep.subr.mxu0 0.0
        %1104 = vmatpush2.msra.mxu0 0.0
        %1105 = vmatprep.subr.mxu0 0.0
        %1106 = vmatpush2.msra.mxu0 0.0
        %1107 = vmatprep.subr.mxu0 0.0
        %1108 = vmatpush2.msra.mxu0 0.0
        %1109 = vmatprep.subr.mxu0 0.0
        %1110 = vmatpush2.msra.mxu0 0.0
        %1111 = vmatprep.subr.mxu0 0.0
        %1112 = vmatpush2.msra.mxu0 0.0
        %1113 = vmatprep.subr.mxu0 0.0
        %1114 = vmatpush2.msra.mxu0 0.0
        %1115 = vmatprep.subr.mxu0 0.0
        %1116 = vmatpush2.msra.mxu0 0.0
        %1117 = vmatprep.subr.mxu0 0.0
        %1118 = vmatpush2.msra.mxu0 0.0
        %1119 = vmatprep.subr.mxu0 0.0
        %1120 = vmatpush2.msra.mxu0 0.0
        %1121 = vmatprep.subr.mxu0 0.0
        %1122 = vmatpush2.msra.mxu0 0.0
        %1123 = vmatprep.subr.mxu0 0.0
        %1124 = vmatpush2.msra.mxu0 0.0
        %1125 = vmatprep.subr.mxu0 0.0
        %1126 = vmatpush2.msra.mxu0 0.0
        %1127 = vmatprep.subr.mxu0 0.0
        %1128 = vmatpush2.msra.mxu0 0.0
        %1129 = vmatprep.subr.mxu0 0.0
        %1130 = vmatpush2.msra.mxu0 0.0
        %1131 = vmatprep.mubr.f32.mxu0 0.0
        %1132 = vmatmul.mubr.f32.gmra.mxu0 %v1065
        %v1133 = vpop.f32.mrf.mxu0
        %v1134 = vadd.f32 %v1061, %v1133
        %v1135 = vpop.f32.mrf.mxu0
        %1136 = vdwg.mxu0
        %v1137 = vrot.slane %v980, 1
        %v1138 = vsel %vm399, 0.0, %v1137
        %v1139 = vld [vmem:[%s1 + $0x188] sm:$0xff]
        %v1140 = vld [vmem:[%s1 + $0x190] sm:$0xff]
        %v1141 = vld [vmem:[%s1 + $0x198] sm:$0xff]
        %v1142 = vld [vmem:[%s1 + $0x1a0] sm:$0xff]
        %v1144 = vsel %vm500, %v1138, 0
        %1146 = vmatprep.subr.mxu0 0.0
        %1147 = vmatpush1.msra.mxu0 0.0
        %1148 = vmatprep.subr.mxu0 0.0
        %1149 = vmatpush1.msra.mxu0 0.0
        %1150 = vmatprep.subr.mxu0 0.0
        %1151 = vmatpush1.msra.mxu0 0.0
        %1152 = vmatprep.subr.mxu0 0.0
        %1153 = vmatpush1.msra.mxu0 0.0
        %1154 = vmatprep.subr.mxu0 0.0
        %1155 = vmatpush1.msra.mxu0 0.0
        %1156 = vmatprep.subr.mxu0 0.0
        %1157 = vmatpush1.msra.mxu0 0.0
        %1158 = vmatprep.subr.mxu0 0.0
        %1159 = vmatpush1.msra.mxu0 0.0
        %1160 = vmatprep.subr.mxu0 0.0
        %1161 = vmatpush1.msra.mxu0 0.0
        %1162 = vmatprep.subr.mxu0 0.0
        %1163 = vmatpush1.msra.mxu0 0.0
        %1164 = vmatprep.subr.mxu0 0.0
        %1165 = vmatpush1.msra.mxu0 0.0
        %1166 = vmatprep.subr.mxu0 0.0
        %1167 = vmatpush1.msra.mxu0 0.0
        %1168 = vmatprep.subr.mxu0 0.0
        %1169 = vmatpush1.msra.mxu0 0.0
        %1170 = vmatprep.subr.mxu0 0.0
        %1171 = vmatpush1.msra.mxu0 %v1142
        %1172 = vmatprep.subr.mxu0 0.0
        %1173 = vmatpush1.msra.mxu0 %v1141
        %1174 = vmatprep.subr.mxu0 0.0
        %1175 = vmatpush1.msra.mxu0 %v1140
        %1176 = vmatprep.subr.mxu0 0.0
        %1177 = vmatpush1.msra.mxu0 %v1139
        %1178 = vmatprep.subr.mxu0 0.0
        %1179 = vmatpush2.msra.mxu0 0.0
        %1180 = vmatprep.subr.mxu0 0.0
        %1181 = vmatpush2.msra.mxu0 0.0
        %1182 = vmatprep.subr.mxu0 0.0
        %1183 = vmatpush2.msra.mxu0 0.0
        %1184 = vmatprep.subr.mxu0 0.0
        %1185 = vmatpush2.msra.mxu0 0.0
        %1186 = vmatprep.subr.mxu0 0.0
        %1187 = vmatpush2.msra.mxu0 0.0
        %1188 = vmatprep.subr.mxu0 0.0
        %1189 = vmatpush2.msra.mxu0 0.0
        %1190 = vmatprep.subr.mxu0 0.0
        %1191 = vmatpush2.msra.mxu0 0.0
        %1192 = vmatprep.subr.mxu0 0.0
        %1193 = vmatpush2.msra.mxu0 0.0
        %1194 = vmatprep.subr.mxu0 0.0
        %1195 = vmatpush2.msra.mxu0 0.0
        %1196 = vmatprep.subr.mxu0 0.0
        %1197 = vmatpush2.msra.mxu0 0.0
        %1198 = vmatprep.subr.mxu0 0.0
        %1199 = vmatpush2.msra.mxu0 0.0
        %1200 = vmatprep.subr.mxu0 0.0
        %1201 = vmatpush2.msra.mxu0 0.0
        %1202 = vmatprep.subr.mxu0 0.0
        %1203 = vmatpush2.msra.mxu0 0.0
        %1204 = vmatprep.subr.mxu0 0.0
        %1205 = vmatpush2.msra.mxu0 0.0
        %1206 = vmatprep.subr.mxu0 0.0
        %1207 = vmatpush2.msra.mxu0 0.0
        %1208 = vmatprep.subr.mxu0 0.0
        %1209 = vmatpush2.msra.mxu0 0.0
        %1210 = vmatprep.mubr.f32.mxu0 0.0
        %1211 = vmatmul.mubr.f32.gmra.mxu0 %v1144
        %v1212 = vpop.f32.mrf.mxu0
        %v1213 = vadd.f32 0.0, %v1212
        %v1214 = vpop.f32.mrf.mxu0
        %1215 = vdwg.mxu0
        %v1216 = vadd.f32 %v1134, %v1213
        %v1217 = vld [vmem:[%s1 + $0x1a8] sm:$0x1]
        %v1218 = vlaneseq
        %v1219 = vshrl.u32 %v1218, 7
        %v1220 = vsub.s32 0, %v1219
        %v1221 = vrot.slane %v1217, %v1220
        %v1222 = vadd.f32 %v1216, %v1221
        %vm1223 = vcmp.ge.f32.partialorder %v1222, 0.0
        %v1224 = vmul.f32 %v1222, 0.1
        %v1225 = vsel %vm1223, %v1222, %v1224
        %v1226 = vadd.f32 %v1225, %v489
        %v1227 = vld [vmem:[%s1 + $0x1b0] sm:$0xff]
        %v1228 = vld [vmem:[%s1 + $0x1b8] sm:$0xff]
        %v1229 = vld [vmem:[%s1 + $0x1c0] sm:$0xff]
        %v1230 = vld [vmem:[%s1 + $0x1c8] sm:$0xff]
        %v1231 = vld [vmem:[%s1 + $0x1d0] sm:$0x1]
        %v1232 = vlaneseq
        %v1233 = vshrl.u32 %v1232, 7
        %v1234 = vsub.s32 0, %v1233
        %v1235 = vrot.slane %v1231, %v1234
        %v1237 = vsel %vm500, %v1226, 0
        %1239 = vmatprep.subr.mxu0 0.0
        %1240 = vmatpush1.msra.mxu0 0.0
        %1241 = vmatprep.subr.mxu0 0.0
        %1242 = vmatpush1.msra.mxu0 0.0
        %1243 = vmatprep.subr.mxu0 0.0
        %1244 = vmatpush1.msra.mxu0 0.0
        %1245 = vmatprep.subr.mxu0 0.0
        %1246 = vmatpush1.msra.mxu0 0.0
        %1247 = vmatprep.subr.mxu0 0.0
        %1248 = vmatpush1.msra.mxu0 0.0
        %1249 = vmatprep.subr.mxu0 0.0
        %1250 = vmatpush1.msra.mxu0 0.0
        %1251 = vmatprep.subr.mxu0 0.0
        %1252 = vmatpush1.msra.mxu0 0.0
        %1253 = vmatprep.subr.mxu0 0.0
        %1254 = vmatpush1.msra.mxu0 0.0
        %1255 = vmatprep.subr.mxu0 0.0
        %1256 = vmatpush1.msra.mxu0 0.0
        %1257 = vmatprep.subr.mxu0 0.0
        %1258 = vmatpush1.msra.mxu0 0.0
        %1259 = vmatprep.subr.mxu0 0.0
        %1260 = vmatpush1.msra.mxu0 0.0
        %1261 = vmatprep.subr.mxu0 0.0
        %1262 = vmatpush1.msra.mxu0 0.0
        %1263 = vmatprep.subr.mxu0 0.0
        %1264 = vmatpush1.msra.mxu0 %v1230
        %1265 = vmatprep.subr.mxu0 0.0
        %1266 = vmatpush1.msra.mxu0 %v1229
        %1267 = vmatprep.subr.mxu0 0.0
        %1268 = vmatpush1.msra.mxu0 %v1228
        %1269 = vmatprep.subr.mxu0 0.0
        %1270 = vmatpush1.msra.mxu0 %v1227
        %1271 = vmatprep.subr.mxu0 0.0
        %1272 = vmatpush2.msra.mxu0 0.0
        %1273 = vmatprep.subr.mxu0 0.0
        %1274 = vmatpush2.msra.mxu0 0.0
        %1275 = vmatprep.subr.mxu0 0.0
        %1276 = vmatpush2.msra.mxu0 0.0
        %1277 = vmatprep.subr.mxu0 0.0
        %1278 = vmatpush2.msra.mxu0 0.0
        %1279 = vmatprep.subr.mxu0 0.0
        %1280 = vmatpush2.msra.mxu0 0.0
        %1281 = vmatprep.subr.mxu0 0.0
        %1282 = vmatpush2.msra.mxu0 0.0
        %1283 = vmatprep.subr.mxu0 0.0
        %1284 = vmatpush2.msra.mxu0 0.0
        %1285 = vmatprep.subr.mxu0 0.0
        %1286 = vmatpush2.msra.mxu0 0.0
        %1287 = vmatprep.subr.mxu0 0.0
        %1288 = vmatpush2.msra.mxu0 0.0
        %1289 = vmatprep.subr.mxu0 0.0
        %1290 = vmatpush2.msra.mxu0 0.0
        %1291 = vmatprep.subr.mxu0 0.0
        %1292 = vmatpush2.msra.mxu0 0.0
        %1293 = vmatprep.subr.mxu0 0.0
        %1294 = vmatpush2.msra.mxu0 0.0
        %1295 = vmatprep.subr.mxu0 0.0
        %1296 = vmatpush2.msra.mxu0 0.0
        %1297 = vmatprep.subr.mxu0 0.0
        %1298 = vmatpush2.msra.mxu0 0.0
        %1299 = vmatprep.subr.mxu0 0.0
        %1300 = vmatpush2.msra.mxu0 0.0
        %1301 = vmatprep.subr.mxu0 0.0
        %1302 = vmatpush2.msra.mxu0 0.0
        %1303 = vmatprep.mubr.f32.mxu0 0.0
        %1304 = vmatmul.mubr.f32.gmra.mxu0 %v1237
        %v1305 = vpop.f32.mrf.mxu0
        %v1306 = vadd.f32 %v1235, %v1305
        %v1307 = vpop.f32.mrf.mxu0
        %1308 = vdwg.mxu0
        %v1309 = vmul.f32 %v1306, %v1306
        %v1310 = vmul.f32 %v1306, %v1309
        %v1311 = vmul.f32 %v1310, 0.044715
        %v1312 = vadd.f32 %v1306, %v1311
        %v1313 = vmul.f32 %v1312, 0.7978846
        %v1314 = vtanh.pop %v1313
        %v1315 = vadd.f32 %v1314, 1.0
        %v1316 = vmul.f32 %v1315, 0.5
        %v1317 = vmul.f32 %v1306, %v1316
        %v1318 = vld [vmem:[%s1 + $0x20] sm:$0xff]
        %v1319 = vadd.f32 %v1317, %v1318
        %v1320 = vld [vmem:[%s1 + $0x1d8] sm:$0xff]
        %v1321 = vld [vmem:[%s1 + $0x1e0] sm:$0xff]
        %v1322 = vld [vmem:[%s1 + $0x1e8] sm:$0xff]
        %v1323 = vld [vmem:[%s1 + $0x1f0] sm:$0xff]
        %v1324 = vld [vmem:[%s1 + $0x248] sm:$0x1]
        %v1325 = vlaneseq
        %v1326 = vshrl.u32 %v1325, 7
        %v1327 = vsub.s32 0, %v1326
        %v1328 = vrot.slane %v1324, %v1327
        %v1330 = vsel %vm500, %v1319, 0
        %1332 = vmatprep.subr.mxu0 0.0
        %1333 = vmatpush1.msra.mxu0 0.0
        %1334 = vmatprep.subr.mxu0 0.0
        %1335 = vmatpush1.msra.mxu0 0.0
        %1336 = vmatprep.subr.mxu0 0.0
        %1337 = vmatpush1.msra.mxu0 0.0
        %1338 = vmatprep.subr.mxu0 0.0
        %1339 = vmatpush1.msra.mxu0 0.0
        %1340 = vmatprep.subr.mxu0 0.0
        %1341 = vmatpush1.msra.mxu0 0.0
        %1342 = vmatprep.subr.mxu0 0.0
        %1343 = vmatpush1.msra.mxu0 0.0
        %1344 = vmatprep.subr.mxu0 0.0
        %1345 = vmatpush1.msra.mxu0 0.0
        %1346 = vmatprep.subr.mxu0 0.0
        %1347 = vmatpush1.msra.mxu0 0.0
        %1348 = vmatprep.subr.mxu0 0.0
        %1349 = vmatpush1.msra.mxu0 0.0
        %1350 = vmatprep.subr.mxu0 0.0
        %1351 = vmatpush1.msra.mxu0 0.0
        %1352 = vmatprep.subr.mxu0 0.0
        %1353 = vmatpush1.msra.mxu0 0.0
        %1354 = vmatprep.subr.mxu0 0.0
        %1355 = vmatpush1.msra.mxu0 0.0
        %1356 = vmatprep.subr.mxu0 0.0
        %1357 = vmatpush1.msra.mxu0 %v1323
        %1358 = vmatprep.subr.mxu0 0.0
        %1359 = vmatpush1.msra.mxu0 %v1322
        %1360 = vmatprep.subr.mxu0 0.0
        %1361 = vmatpush1.msra.mxu0 %v1321
        %1362 = vmatprep.subr.mxu0 0.0
        %1363 = vmatpush1.msra.mxu0 %v1320
        %1364 = vmatprep.subr.mxu0 0.0
        %1365 = vmatpush2.msra.mxu0 0.0
        %1366 = vmatprep.subr.mxu0 0.0
        %1367 = vmatpush2.msra.mxu0 0.0
        %1368 = vmatprep.subr.mxu0 0.0
        %1369 = vmatpush2.msra.mxu0 0.0
        %1370 = vmatprep.subr.mxu0 0.0
        %1371 = vmatpush2.msra.mxu0 0.0
        %1372 = vmatprep.subr.mxu0 0.0
        %1373 = vmatpush2.msra.mxu0 0.0
        %1374 = vmatprep.subr.mxu0 0.0
        %1375 = vmatpush2.msra.mxu0 0.0
        %1376 = vmatprep.subr.mxu0 0.0
        %1377 = vmatpush2.msra.mxu0 0.0
        %1378 = vmatprep.subr.mxu0 0.0
        %1379 = vmatpush2.msra.mxu0 0.0
        %1380 = vmatprep.subr.mxu0 0.0
        %1381 = vmatpush2.msra.mxu0 0.0
        %1382 = vmatprep.subr.mxu0 0.0
        %1383 = vmatpush2.msra.mxu0 0.0
        %1384 = vmatprep.subr.mxu0 0.0
        %1385 = vmatpush2.msra.mxu0 0.0
        %1386 = vmatprep.subr.mxu0 0.0
        %1387 = vmatpush2.msra.mxu0 0.0
        %1388 = vmatprep.subr.mxu0 0.0
        %1389 = vmatpush2.msra.mxu0 0.0
        %1390 = vmatprep.subr.mxu0 0.0
        %1391 = vmatpush2.msra.mxu0 0.0
        %1392 = vmatprep.subr.mxu0 0.0
        %1393 = vmatpush2.msra.mxu0 0.0
        %1394 = vmatprep.subr.mxu0 0.0
        %1395 = vmatpush2.msra.mxu0 0.0
        %1396 = vmatprep.mubr.f32.mxu0 0.0
        %1397 = vmatmul.mubr.f32.gmra.mxu0 %v1330
        %v1398 = vpop.f32.mrf.mxu0
        %v1399 = vadd.f32 %v1328, %v1398
        %v1400 = vpop.f32.mrf.mxu0
        %1401 = vdwg.mxu0
        %v1402 = vld [vmem:[%s1 + $0x1f8] sm:$0xff]
        %v1403 = vld [vmem:[%s1 + $0x200] sm:$0xff]
        %v1404 = vld [vmem:[%s1 + $0x208] sm:$0xff]
        %v1405 = vld [vmem:[%s1 + $0x210] sm:$0xff]
        %v1406 = vld [vmem:[%s1 + $0x250] sm:$0x1]
        %v1407 = vlaneseq
        %v1408 = vshrl.u32 %v1407, 7
        %v1409 = vsub.s32 0, %v1408
        %v1410 = vrot.slane %v1406, %v1409
        %1411 = vmatprep.subr.mxu0 0.0
        %1412 = vmatpush1.msra.mxu0 0.0
        %1413 = vmatprep.subr.mxu0 0.0
        %1414 = vmatpush1.msra.mxu0 0.0
        %1415 = vmatprep.subr.mxu0 0.0
        %1416 = vmatpush1.msra.mxu0 0.0
        %1417 = vmatprep.subr.mxu0 0.0
        %1418 = vmatpush1.msra.mxu0 0.0
        %1419 = vmatprep.subr.mxu0 0.0
        %1420 = vmatpush1.msra.mxu0 0.0
        %1421 = vmatprep.subr.mxu0 0.0
        %1422 = vmatpush1.msra.mxu0 0.0
        %1423 = vmatprep.subr.mxu0 0.0
        %1424 = vmatpush1.msra.mxu0 0.0
        %1425 = vmatprep.subr.mxu0 0.0
        %1426 = vmatpush1.msra.mxu0 0.0
        %1427 = vmatprep.subr.mxu0 0.0
        %1428 = vmatpush1.msra.mxu0 0.0
        %1429 = vmatprep.subr.mxu0 0.0
        %1430 = vmatpush1.msra.mxu0 0.0
        %1431 = vmatprep.subr.mxu0 0.0
        %1432 = vmatpush1.msra.mxu0 0.0
        %1433 = vmatprep.subr.mxu0 0.0
        %1434 = vmatpush1.msra.mxu0 0.0
        %1435 = vmatprep.subr.mxu0 0.0
        %1436 = vmatpush1.msra.mxu0 %v1405
        %1437 = vmatprep.subr.mxu0 0.0
        %1438 = vmatpush1.msra.mxu0 %v1404
        %1439 = vmatprep.subr.mxu0 0.0
        %1440 = vmatpush1.msra.mxu0 %v1403
        %1441 = vmatprep.subr.mxu0 0.0
        %1442 = vmatpush1.msra.mxu0 %v1402
        %1443 = vmatprep.subr.mxu0 0.0
        %1444 = vmatpush2.msra.mxu0 0.0
        %1445 = vmatprep.subr.mxu0 0.0
        %1446 = vmatpush2.msra.mxu0 0.0
        %1447 = vmatprep.subr.mxu0 0.0
        %1448 = vmatpush2.msra.mxu0 0.0
        %1449 = vmatprep.subr.mxu0 0.0
        %1450 = vmatpush2.msra.mxu0 0.0
        %1451 = vmatprep.subr.mxu0 0.0
        %1452 = vmatpush2.msra.mxu0 0.0
        %1453 = vmatprep.subr.mxu0 0.0
        %1454 = vmatpush2.msra.mxu0 0.0
        %1455 = vmatprep.subr.mxu0 0.0
        %1456 = vmatpush2.msra.mxu0 0.0
        %1457 = vmatprep.subr.mxu0 0.0
        %1458 = vmatpush2.msra.mxu0 0.0
        %1459 = vmatprep.subr.mxu0 0.0
        %1460 = vmatpush2.msra.mxu0 0.0
        %1461 = vmatprep.subr.mxu0 0.0
        %1462 = vmatpush2.msra.mxu0 0.0
        %1463 = vmatprep.subr.mxu0 0.0
        %1464 = vmatpush2.msra.mxu0 0.0
        %1465 = vmatprep.subr.mxu0 0.0
        %1466 = vmatpush2.msra.mxu0 0.0
        %1467 = vmatprep.subr.mxu0 0.0
        %1468 = vmatpush2.msra.mxu0 0.0
        %1469 = vmatprep.subr.mxu0 0.0
        %1470 = vmatpush2.msra.mxu0 0.0
        %1471 = vmatprep.subr.mxu0 0.0
        %1472 = vmatpush2.msra.mxu0 0.0
        %1473 = vmatprep.subr.mxu0 0.0
        %1474 = vmatpush2.msra.mxu0 0.0
        %1475 = vmatprep.mubr.f32.mxu0 0.0
        %1476 = vmatmul.mubr.f32.gmra.mxu0 %v1330
        %v1477 = vpop.f32.mrf.mxu0
        %v1478 = vadd.f32 %v1410, %v1477
        %v1479 = vpop.f32.mrf.mxu0
        %1480 = vdwg.mxu0
        %v1481 = vld [vmem:[%s1 + $0x218] sm:$0xff]
        %v1482 = vld [vmem:[%s1 + $0x220] sm:$0xff]
        %v1483 = vld [vmem:[%s1 + $0x228] sm:$0xff]
        %v1484 = vld [vmem:[%s1 + $0x230] sm:$0xff]
        %v1485 = vld [vmem:[%s1 + $0x258] sm:$0x1]
        %v1486 = vlaneseq
        %v1487 = vshrl.u32 %v1486, 7
        %v1488 = vsub.s32 0, %v1487
        %v1489 = vrot.slane %v1485, %v1488
        %1490 = vmatprep.subr.mxu0 0.0
        %1491 = vmatpush1.msra.mxu0 0.0
        %1492 = vmatprep.subr.mxu0 0.0
        %1493 = vmatpush1.msra.mxu0 0.0
        %1494 = vmatprep.subr.mxu0 0.0
        %1495 = vmatpush1.msra.mxu0 0.0
        %1496 = vmatprep.subr.mxu0 0.0
        %1497 = vmatpush1.msra.mxu0 0.0
        %1498 = vmatprep.subr.mxu0 0.0
        %1499 = vmatpush1.msra.mxu0 0.0
        %1500 = vmatprep.subr.mxu0 0.0
        %1501 = vmatpush1.msra.mxu0 0.0
        %1502 = vmatprep.subr.mxu0 0.0
        %1503 = vmatpush1.msra.mxu0 0.0
        %1504 = vmatprep.subr.mxu0 0.0
        %1505 = vmatpush1.msra.mxu0 0.0
        %1506 = vmatprep.subr.mxu0 0.0
        %1507 = vmatpush1.msra.mxu0 0.0
        %1508 = vmatprep.subr.mxu0 0.0
        %1509 = vmatpush1.msra.mxu0 0.0
        %1510 = vmatprep.subr.mxu0 0.0
        %1511 = vmatpush1.msra.mxu0 0.0
        %1512 = vmatprep.subr.mxu0 0.0
        %1513 = vmatpush1.msra.mxu0 0.0
        %1514 = vmatprep.subr.mxu0 0.0
        %1515 = vmatpush1.msra.mxu0 %v1484
        %1516 = vmatprep.subr.mxu0 0.0
        %1517 = vmatpush1.msra.mxu0 %v1483
        %1518 = vmatprep.subr.mxu0 0.0
        %1519 = vmatpush1.msra.mxu0 %v1482
        %1520 = vmatprep.subr.mxu0 0.0
        %1521 = vmatpush1.msra.mxu0 %v1481
        %1522 = vmatprep.subr.mxu0 0.0
        %1523 = vmatpush2.msra.mxu0 0.0
        %1524 = vmatprep.subr.mxu0 0.0
        %1525 = vmatpush2.msra.mxu0 0.0
        %1526 = vmatprep.subr.mxu0 0.0
        %1527 = vmatpush2.msra.mxu0 0.0
        %1528 = vmatprep.subr.mxu0 0.0
        %1529 = vmatpush2.msra.mxu0 0.0
        %1530 = vmatprep.subr.mxu0 0.0
        %1531 = vmatpush2.msra.mxu0 0.0
        %1532 = vmatprep.subr.mxu0 0.0
        %1533 = vmatpush2.msra.mxu0 0.0
        %1534 = vmatprep.subr.mxu0 0.0
        %1535 = vmatpush2.msra.mxu0 0.0
        %1536 = vmatprep.subr.mxu0 0.0
        %1537 = vmatpush2.msra.mxu0 0.0
        %1538 = vmatprep.subr.mxu0 0.0
        %1539 = vmatpush2.msra.mxu0 0.0
        %1540 = vmatprep.subr.mxu0 0.0
        %1541 = vmatpush2.msra.mxu0 0.0
        %1542 = vmatprep.subr.mxu0 0.0
        %1543 = vmatpush2.msra.mxu0 0.0
        %1544 = vmatprep.subr.mxu0 0.0
        %1545 = vmatpush2.msra.mxu0 0.0
        %1546 = vmatprep.subr.mxu0 0.0
        %1547 = vmatpush2.msra.mxu0 0.0
        %1548 = vmatprep.subr.mxu0 0.0
        %1549 = vmatpush2.msra.mxu0 0.0
        %1550 = vmatprep.subr.mxu0 0.0
        %1551 = vmatpush2.msra.mxu0 0.0
        %1552 = vmatprep.subr.mxu0 0.0
        %1553 = vmatpush2.msra.mxu0 0.0
        %1554 = vmatprep.mubr.f32.mxu0 0.0
        %1555 = vmatmul.mubr.f32.gmra.mxu0 %v1330
        %v1556 = vpop.f32.mrf.mxu0
        %v1557 = vadd.f32 %v1489, %v1556
        %v1558 = vpop.f32.mrf.mxu0
        %1559 = vdwg.mxu0
        %vm1560 = vcmask 130048
        %v1562 = vsel %vm1560, %v1399, 0
        %v1565 = vsel %vm1560, %v1478, 0
        %1567 = vmatprep.subr.mxu0 0.0
        %1568 = vmatpush1.xpose.msra.mxu0 0.0
        %1569 = vmatprep.subr.mxu0 0.0
        %1570 = vmatpush1.xpose.msra.mxu0 0.0
        %1571 = vmatprep.subr.mxu0 0.0
        %1572 = vmatpush1.xpose.msra.mxu0 0.0
        %1573 = vmatprep.subr.mxu0 0.0
        %1574 = vmatpush1.xpose.msra.mxu0 0.0
        %1575 = vmatprep.subr.mxu0 0.0
        %1576 = vmatpush1.xpose.msra.mxu0 0.0
        %1577 = vmatprep.subr.mxu0 0.0
        %1578 = vmatpush1.xpose.msra.mxu0 0.0
        %1579 = vmatprep.subr.mxu0 0.0
        %1580 = vmatpush1.xpose.msra.mxu0 0.0
        %1581 = vmatprep.subr.mxu0 0.0
        %1582 = vmatpush1.xpose.msra.mxu0 0.0
        %1583 = vmatprep.subr.mxu0 0.0
        %1584 = vmatpush1.xpose.msra.mxu0 0.0
        %1585 = vmatprep.subr.mxu0 0.0
        %1586 = vmatpush1.xpose.msra.mxu0 0.0
        %1587 = vmatprep.subr.mxu0 0.0
        %1588 = vmatpush1.xpose.msra.mxu0 0.0
        %1589 = vmatprep.subr.mxu0 0.0
        %1590 = vmatpush1.xpose.msra.mxu0 0.0
        %1591 = vmatprep.subr.mxu0 0.0
        %1592 = vmatpush1.xpose.msra.mxu0 0.0
        %1593 = vmatprep.subr.mxu0 0.0
        %1594 = vmatpush1.xpose.msra.mxu0 0.0
        %1595 = vmatprep.subr.mxu0 0.0
        %1596 = vmatpush1.xpose.msra.mxu0 0.0
        %1597 = vmatprep.subr.mxu0 0.0
        %1598 = vmatpush1.xpose.msra.mxu0 %v1565
        %1599 = vmatprep.subr.mxu0 0.0
        %1600 = vmatpush2.xpose.msra.mxu0 0.0
        %1601 = vmatprep.subr.mxu0 0.0
        %1602 = vmatpush2.xpose.msra.mxu0 0.0
        %1603 = vmatprep.subr.mxu0 0.0
        %1604 = vmatpush2.xpose.msra.mxu0 0.0
        %1605 = vmatprep.subr.mxu0 0.0
        %1606 = vmatpush2.xpose.msra.mxu0 0.0
        %1607 = vmatprep.subr.mxu0 0.0
        %1608 = vmatpush2.xpose.msra.mxu0 0.0
        %1609 = vmatprep.subr.mxu0 0.0
        %1610 = vmatpush2.xpose.msra.mxu0 0.0
        %1611 = vmatprep.subr.mxu0 0.0
        %1612 = vmatpush2.xpose.msra.mxu0 0.0
        %1613 = vmatprep.subr.mxu0 0.0
        %1614 = vmatpush2.xpose.msra.mxu0 0.0
        %1615 = vmatprep.subr.mxu0 0.0
        %1616 = vmatpush2.xpose.msra.mxu0 0.0
        %1617 = vmatprep.subr.mxu0 0.0
        %1618 = vmatpush2.xpose.msra.mxu0 0.0
        %1619 = vmatprep.subr.mxu0 0.0
        %1620 = vmatpush2.xpose.msra.mxu0 0.0
        %1621 = vmatprep.subr.mxu0 0.0
        %1622 = vmatpush2.xpose.msra.mxu0 0.0
        %1623 = vmatprep.subr.mxu0 0.0
        %1624 = vmatpush2.xpose.msra.mxu0 0.0
        %1625 = vmatprep.subr.mxu0 0.0
        %1626 = vmatpush2.xpose.msra.mxu0 0.0
        %1627 = vmatprep.subr.mxu0 0.0
        %1628 = vmatpush2.xpose.msra.mxu0 0.0
        %1629 = vmatprep.subr.mxu0 0.0
        %1630 = vmatpush2.xpose.msra.mxu0 0.0
        %1631 = vmatprep.mubr.f32.mxu0 0.0
        %1632 = vmatmul.mubr.f32.gmra.mxu0 %v1562
        %v1633 = vpop.f32.mrf.mxu0
        %v1634 = vadd.f32 0.0, %v1633
        %v1635 = vpop.f32.mrf.mxu0
        %1636 = vdwg.mxu0
        %v1637 = vmul.f32 %v1634, 0.25
        %vm1638 = vcmask 64512
        %v1639 = vsel %vm1638, %v1637, -inf
        %1640 = vmax.xlane.f32.xlu0 %v1639
        %v1641 = vpop.xlane.xlu0 %1640
        %v1642 = vsub.f32 %v1637, %v1641
        %v1643 = vmul.f32 %v1642, 1.442695
        %v1644 = vpow.pop %v1643
        %v1645 = vsel %vm1638, %v1644, 0.0
        %1646 = vadd.xlane.f32.xlu0 %v1645
        %v1647 = vpop.xlane.xlu0 %1646
        %v1648 = vrcp.pop %v1647
        %v1649 = vmul.f32 %v1644, %v1648
        %v1651 = vsel %vm1638, %v1649, 0
        %1653 = vmatprep.subr.mxu0 0.0
        %1654 = vmatpush1.msra.mxu0 0.0
        %1655 = vmatprep.subr.mxu0 0.0
        %1656 = vmatpush1.msra.mxu0 0.0
        %1657 = vmatprep.subr.mxu0 0.0
        %1658 = vmatpush1.msra.mxu0 0.0
        %1659 = vmatprep.subr.mxu0 0.0
        %1660 = vmatpush1.msra.mxu0 0.0
        %1661 = vmatprep.subr.mxu0 0.0
        %1662 = vmatpush1.msra.mxu0 0.0
        %1663 = vmatprep.subr.mxu0 0.0
        %1664 = vmatpush1.msra.mxu0 0.0
        %1665 = vmatprep.subr.mxu0 0.0
        %1666 = vmatpush1.msra.mxu0 0.0
        %1667 = vmatprep.subr.mxu0 0.0
        %1668 = vmatpush1.msra.mxu0 0.0
        %1669 = vmatprep.subr.mxu0 0.0
        %1670 = vmatpush1.msra.mxu0 0.0
        %1671 = vmatprep.subr.mxu0 0.0
        %1672 = vmatpush1.msra.mxu0 0.0
        %1673 = vmatprep.subr.mxu0 0.0
        %1674 = vmatpush1.msra.mxu0 0.0
        %1675 = vmatprep.subr.mxu0 0.0
        %1676 = vmatpush1.msra.mxu0 0.0
        %1677 = vmatprep.subr.mxu0 0.0
        %1678 = vmatpush1.msra.mxu0 0.0
        %1679 = vmatprep.subr.mxu0 0.0
        %1680 = vmatpush1.msra.mxu0 0.0
        %1681 = vmatprep.subr.mxu0 0.0
        %1682 = vmatpush1.msra.mxu0 0.0
        %1683 = vmatprep.subr.mxu0 0.0
        %1684 = vmatpush1.msra.mxu0 %v1557
        %1685 = vmatprep.subr.mxu0 0.0
        %1686 = vmatpush2.msra.mxu0 0.0
        %1687 = vmatprep.subr.mxu0 0.0
        %1688 = vmatpush2.msra.mxu0 0.0
        %1689 = vmatprep.subr.mxu0 0.0
        %1690 = vmatpush2.msra.mxu0 0.0
        %1691 = vmatprep.subr.mxu0 0.0
        %1692 = vmatpush2.msra.mxu0 0.0
        %1693 = vmatprep.subr.mxu0 0.0
        %1694 = vmatpush2.msra.mxu0 0.0
        %1695 = vmatprep.subr.mxu0 0.0
        %1696 = vmatpush2.msra.mxu0 0.0
        %1697 = vmatprep.subr.mxu0 0.0
        %1698 = vmatpush2.msra.mxu0 0.0
        %1699 = vmatprep.subr.mxu0 0.0
        %1700 = vmatpush2.msra.mxu0 0.0
        %1701 = vmatprep.subr.mxu0 0.0
        %1702 = vmatpush2.msra.mxu0 0.0
        %1703 = vmatprep.subr.mxu0 0.0
        %1704 = vmatpush2.msra.mxu0 0.0
        %1705 = vmatprep.subr.mxu0 0.0
        %1706 = vmatpush2.msra.mxu0 0.0
        %1707 = vmatprep.subr.mxu0 0.0
        %1708 = vmatpush2.msra.mxu0 0.0
        %1709 = vmatprep.subr.mxu0 0.0
        %1710 = vmatpush2.msra.mxu0 0.0
        %1711 = vmatprep.subr.mxu0 0.0
        %1712 = vmatpush2.msra.mxu0 0.0
        %1713 = vmatprep.subr.mxu0 0.0
        %1714 = vmatpush2.msra.mxu0 0.0
        %1715 = vmatprep.subr.mxu0 0.0
        %1716 = vmatpush2.msra.mxu0 0.0
        %1717 = vmatprep.mubr.f32.mxu0 0.0
        %1718 = vmatmul.mubr.f32.gmra.mxu0 %v1651
        %v1719 = vpop.f32.mrf.mxu0
        %v1720 = vadd.f32 0.0, %v1719
        %v1721 = vpop.f32.mrf.mxu0
        %1722 = vdwg.mxu0
        %v1723 = vld [vmem:[%s1 + $0x238] sm:$0xff]
        %v1724 = vld [vmem:[%s1 + $0x240] sm:$0xff]
        %v1725 = vld [vmem:[%s1 + $0x260] sm:$0xff]
        %v1726 = vld [vmem:[%s1 + $0x268] sm:$0xff]
        %v1727 = vld [vmem:[%s1 + $0x270] sm:$0xff]
        %v1728 = vld [vmem:[%s1 + $0x278] sm:$0xff]
        %v1729 = vld [vmem:[%s1 + $0x2d0] sm:$0x1]
        %v1730 = vlaneseq
        %v1731 = vshrl.u32 %v1730, 7
        %v1732 = vsub.s32 0, %v1731
        %v1733 = vrot.slane %v1729, %v1732
        %1734 = vmatprep.subr.mxu0 0.0
        %1735 = vmatpush1.msra.mxu0 0.0
        %1736 = vmatprep.subr.mxu0 0.0
        %1737 = vmatpush1.msra.mxu0 0.0
        %1738 = vmatprep.subr.mxu0 0.0
        %1739 = vmatpush1.msra.mxu0 0.0
        %1740 = vmatprep.subr.mxu0 0.0
        %1741 = vmatpush1.msra.mxu0 0.0
        %1742 = vmatprep.subr.mxu0 0.0
        %1743 = vmatpush1.msra.mxu0 0.0
        %1744 = vmatprep.subr.mxu0 0.0
        %1745 = vmatpush1.msra.mxu0 0.0
        %1746 = vmatprep.subr.mxu0 0.0
        %1747 = vmatpush1.msra.mxu0 0.0
        %1748 = vmatprep.subr.mxu0 0.0
        %1749 = vmatpush1.msra.mxu0 0.0
        %1750 = vmatprep.subr.mxu0 0.0
        %1751 = vmatpush1.msra.mxu0 0.0
        %1752 = vmatprep.subr.mxu0 0.0
        %1753 = vmatpush1.msra.mxu0 0.0
        %1754 = vmatprep.subr.mxu0 0.0
        %1755 = vmatpush1.msra.mxu0 0.0
        %1756 = vmatprep.subr.mxu0 0.0
        %1757 = vmatpush1.msra.mxu0 0.0
        %1758 = vmatprep.subr.mxu0 0.0
        %1759 = vmatpush1.msra.mxu0 %v1728
        %1760 = vmatprep.subr.mxu0 0.0
        %1761 = vmatpush1.msra.mxu0 %v1727
        %1762 = vmatprep.subr.mxu0 0.0
        %1763 = vmatpush1.msra.mxu0 %v1726
        %1764 = vmatprep.subr.mxu0 0.0
        %1765 = vmatpush1.msra.mxu0 %v1725
        %1766 = vmatprep.subr.mxu0 0.0
        %1767 = vmatpush2.msra.mxu0 0.0
        %1768 = vmatprep.subr.mxu0 0.0
        %1769 = vmatpush2.msra.mxu0 0.0
        %1770 = vmatprep.subr.mxu0 0.0
        %1771 = vmatpush2.msra.mxu0 0.0
        %1772 = vmatprep.subr.mxu0 0.0
        %1773 = vmatpush2.msra.mxu0 0.0
        %1774 = vmatprep.subr.mxu0 0.0
        %1775 = vmatpush2.msra.mxu0 0.0
        %1776 = vmatprep.subr.mxu0 0.0
        %1777 = vmatpush2.msra.mxu0 0.0
        %1778 = vmatprep.subr.mxu0 0.0
        %1779 = vmatpush2.msra.mxu0 0.0
        %1780 = vmatprep.subr.mxu0 0.0
        %1781 = vmatpush2.msra.mxu0 0.0
        %1782 = vmatprep.subr.mxu0 0.0
        %1783 = vmatpush2.msra.mxu0 0.0
        %1784 = vmatprep.subr.mxu0 0.0
        %1785 = vmatpush2.msra.mxu0 0.0
        %1786 = vmatprep.subr.mxu0 0.0
        %1787 = vmatpush2.msra.mxu0 0.0
        %1788 = vmatprep.subr.mxu0 0.0
        %1789 = vmatpush2.msra.mxu0 0.0
        %1790 = vmatprep.subr.mxu0 0.0
        %1791 = vmatpush2.msra.mxu0 0.0
        %1792 = vmatprep.subr.mxu0 0.0
        %1793 = vmatpush2.msra.mxu0 0.0
        %1794 = vmatprep.subr.mxu0 0.0
        %1795 = vmatpush2.msra.mxu0 0.0
        %1796 = vmatprep.subr.mxu0 0.0
        %1797 = vmatpush2.msra.mxu0 0.0
        %1798 = vmatprep.mubr.f32.mxu0 0.0
        %1799 = vmatmul.mubr.f32.gmra.mxu0 %v1330
        %v1800 = vpop.f32.mrf.mxu0
        %v1801 = vadd.f32 %v1733, %v1800
        %v1802 = vpop.f32.mrf.mxu0
        %1803 = vdwg.mxu0
        %v1804 = vld [vmem:[%s1 + $0x280] sm:$0xff]
        %v1805 = vld [vmem:[%s1 + $0x288] sm:$0xff]
        %v1806 = vld [vmem:[%s1 + $0x290] sm:$0xff]
        %v1807 = vld [vmem:[%s1 + $0x298] sm:$0xff]
        %v1808 = vld [vmem:[%s1 + $0x2d8] sm:$0x1]
        %v1809 = vlaneseq
        %v1810 = vshrl.u32 %v1809, 7
        %v1811 = vsub.s32 0, %v1810
        %v1812 = vrot.slane %v1808, %v1811
        %1813 = vmatprep.subr.mxu0 0.0
        %1814 = vmatpush1.msra.mxu0 0.0
        %1815 = vmatprep.subr.mxu0 0.0
        %1816 = vmatpush1.msra.mxu0 0.0
        %1817 = vmatprep.subr.mxu0 0.0
        %1818 = vmatpush1.msra.mxu0 0.0
        %1819 = vmatprep.subr.mxu0 0.0
        %1820 = vmatpush1.msra.mxu0 0.0
        %1821 = vmatprep.subr.mxu0 0.0
        %1822 = vmatpush1.msra.mxu0 0.0
        %1823 = vmatprep.subr.mxu0 0.0
        %1824 = vmatpush1.msra.mxu0 0.0
        %1825 = vmatprep.subr.mxu0 0.0
        %1826 = vmatpush1.msra.mxu0 0.0
        %1827 = vmatprep.subr.mxu0 0.0
        %1828 = vmatpush1.msra.mxu0 0.0
        %1829 = vmatprep.subr.mxu0 0.0
        %1830 = vmatpush1.msra.mxu0 0.0
        %1831 = vmatprep.subr.mxu0 0.0
        %1832 = vmatpush1.msra.mxu0 0.0
        %1833 = vmatprep.subr.mxu0 0.0
        %1834 = vmatpush1.msra.mxu0 0.0
        %1835 = vmatprep.subr.mxu0 0.0
        %1836 = vmatpush1.msra.mxu0 0.0
        %1837 = vmatprep.subr.mxu0 0.0
        %1838 = vmatpush1.msra.mxu0 %v1807
        %1839 = vmatprep.subr.mxu0 0.0
        %1840 = vmatpush1.msra.mxu0 %v1806
        %1841 = vmatprep.subr.mxu0 0.0
        %1842 = vmatpush1.msra.mxu0 %v1805
        %1843 = vmatprep.subr.mxu0 0.0
        %1844 = vmatpush1.msra.mxu0 %v1804
        %1845 = vmatprep.subr.mxu0 0.0
        %1846 = vmatpush2.msra.mxu0 0.0
        %1847 = vmatprep.subr.mxu0 0.0
        %1848 = vmatpush2.msra.mxu0 0.0
        %1849 = vmatprep.subr.mxu0 0.0
        %1850 = vmatpush2.msra.mxu0 0.0
        %1851 = vmatprep.subr.mxu0 0.0
        %1852 = vmatpush2.msra.mxu0 0.0
        %1853 = vmatprep.subr.mxu0 0.0
        %1854 = vmatpush2.msra.mxu0 0.0
        %1855 = vmatprep.subr.mxu0 0.0
        %1856 = vmatpush2.msra.mxu0 0.0
        %1857 = vmatprep.subr.mxu0 0.0
        %1858 = vmatpush2.msra.mxu0 0.0
        %1859 = vmatprep.subr.mxu0 0.0
        %1860 = vmatpush2.msra.mxu0 0.0
        %1861 = vmatprep.subr.mxu0 0.0
        %1862 = vmatpush2.msra.mxu0 0.0
        %1863 = vmatprep.subr.mxu0 0.0
        %1864 = vmatpush2.msra.mxu0 0.0
        %1865 = vmatprep.subr.mxu0 0.0
        %1866 = vmatpush2.msra.mxu0 0.0
        %1867 = vmatprep.subr.mxu0 0.0
        %1868 = vmatpush2.msra.mxu0 0.0
        %1869 = vmatprep.subr.mxu0 0.0
        %1870 = vmatpush2.msra.mxu0 0.0
        %1871 = vmatprep.subr.mxu0 0.0
        %1872 = vmatpush2.msra.mxu0 0.0
        %1873 = vmatprep.subr.mxu0 0.0
        %1874 = vmatpush2.msra.mxu0 0.0
        %1875 = vmatprep.subr.mxu0 0.0
        %1876 = vmatpush2.msra.mxu0 0.0
        %1877 = vmatprep.mubr.f32.mxu0 0.0
        %1878 = vmatmul.mubr.f32.gmra.mxu0 %v1330
        %v1879 = vpop.f32.mrf.mxu0
        %v1880 = vadd.f32 %v1812, %v1879
        %v1881 = vpop.f32.mrf.mxu0
        %1882 = vdwg.mxu0
        %v1883 = vld [vmem:[%s1 + $0x2a0] sm:$0xff]
        %v1884 = vld [vmem:[%s1 + $0x2a8] sm:$0xff]
        %v1885 = vld [vmem:[%s1 + $0x2b0] sm:$0xff]
        %v1886 = vld [vmem:[%s1 + $0x2b8] sm:$0xff]
        %v1887 = vld [vmem:[%s1 + $0x2e0] sm:$0x1]
        %v1888 = vlaneseq
        %v1889 = vshrl.u32 %v1888, 7
        %v1890 = vsub.s32 0, %v1889
        %v1891 = vrot.slane %v1887, %v1890
        %1892 = vmatprep.subr.mxu0 0.0
        %1893 = vmatpush1.msra.mxu0 0.0
        %1894 = vmatprep.subr.mxu0 0.0
        %1895 = vmatpush1.msra.mxu0 0.0
        %1896 = vmatprep.subr.mxu0 0.0
        %1897 = vmatpush1.msra.mxu0 0.0
        %1898 = vmatprep.subr.mxu0 0.0
        %1899 = vmatpush1.msra.mxu0 0.0
        %1900 = vmatprep.subr.mxu0 0.0
        %1901 = vmatpush1.msra.mxu0 0.0
        %1902 = vmatprep.subr.mxu0 0.0
        %1903 = vmatpush1.msra.mxu0 0.0
        %1904 = vmatprep.subr.mxu0 0.0
        %1905 = vmatpush1.msra.mxu0 0.0
        %1906 = vmatprep.subr.mxu0 0.0
        %1907 = vmatpush1.msra.mxu0 0.0
        %1908 = vmatprep.subr.mxu0 0.0
        %1909 = vmatpush1.msra.mxu0 0.0
        %1910 = vmatprep.subr.mxu0 0.0
        %1911 = vmatpush1.msra.mxu0 0.0
        %1912 = vmatprep.subr.mxu0 0.0
        %1913 = vmatpush1.msra.mxu0 0.0
        %1914 = vmatprep.subr.mxu0 0.0
        %1915 = vmatpush1.msra.mxu0 0.0
        %1916 = vmatprep.subr.mxu0 0.0
        %1917 = vmatpush1.msra.mxu0 %v1886
        %1918 = vmatprep.subr.mxu0 0.0
        %1919 = vmatpush1.msra.mxu0 %v1885
        %1920 = vmatprep.subr.mxu0 0.0
        %1921 = vmatpush1.msra.mxu0 %v1884
        %1922 = vmatprep.subr.mxu0 0.0
        %1923 = vmatpush1.msra.mxu0 %v1883
        %1924 = vmatprep.subr.mxu0 0.0
        %1925 = vmatpush2.msra.mxu0 0.0
        %1926 = vmatprep.subr.mxu0 0.0
        %1927 = vmatpush2.msra.mxu0 0.0
        %1928 = vmatprep.subr.mxu0 0.0
        %1929 = vmatpush2.msra.mxu0 0.0
        %1930 = vmatprep.subr.mxu0 0.0
        %1931 = vmatpush2.msra.mxu0 0.0
        %1932 = vmatprep.subr.mxu0 0.0
        %1933 = vmatpush2.msra.mxu0 0.0
        %1934 = vmatprep.subr.mxu0 0.0
        %1935 = vmatpush2.msra.mxu0 0.0
        %1936 = vmatprep.subr.mxu0 0.0
        %1937 = vmatpush2.msra.mxu0 0.0
        %1938 = vmatprep.subr.mxu0 0.0
        %1939 = vmatpush2.msra.mxu0 0.0
        %1940 = vmatprep.subr.mxu0 0.0
        %1941 = vmatpush2.msra.mxu0 0.0
        %1942 = vmatprep.subr.mxu0 0.0
        %1943 = vmatpush2.msra.mxu0 0.0
        %1944 = vmatprep.subr.mxu0 0.0
        %1945 = vmatpush2.msra.mxu0 0.0
        %1946 = vmatprep.subr.mxu0 0.0
        %1947 = vmatpush2.msra.mxu0 0.0
        %1948 = vmatprep.subr.mxu0 0.0
        %1949 = vmatpush2.msra.mxu0 0.0
        %1950 = vmatprep.subr.mxu0 0.0
        %1951 = vmatpush2.msra.mxu0 0.0
        %1952 = vmatprep.subr.mxu0 0.0
        %1953 = vmatpush2.msra.mxu0 0.0
        %1954 = vmatprep.subr.mxu0 0.0
        %1955 = vmatpush2.msra.mxu0 0.0
        %1956 = vmatprep.mubr.f32.mxu0 0.0
        %1957 = vmatmul.mubr.f32.gmra.mxu0 %v1330
        %v1958 = vpop.f32.mrf.mxu0
        %v1959 = vadd.f32 %v1891, %v1958
        %v1960 = vpop.f32.mrf.mxu0
        %1961 = vdwg.mxu0
        %v1963 = vsel %vm1560, %v1801, 0
        %v1966 = vsel %vm1560, %v1880, 0
        %1968 = vmatprep.subr.mxu0 0.0
        %1969 = vmatpush1.xpose.msra.mxu0 0.0
        %1970 = vmatprep.subr.mxu0 0.0
        %1971 = vmatpush1.xpose.msra.mxu0 0.0
        %1972 = vmatprep.subr.mxu0 0.0
        %1973 = vmatpush1.xpose.msra.mxu0 0.0
        %1974 = vmatprep.subr.mxu0 0.0
        %1975 = vmatpush1.xpose.msra.mxu0 0.0
        %1976 = vmatprep.subr.mxu0 0.0
        %1977 = vmatpush1.xpose.msra.mxu0 0.0
        %1978 = vmatprep.subr.mxu0 0.0
        %1979 = vmatpush1.xpose.msra.mxu0 0.0
        %1980 = vmatprep.subr.mxu0 0.0
        %1981 = vmatpush1.xpose.msra.mxu0 0.0
        %1982 = vmatprep.subr.mxu0 0.0
        %1983 = vmatpush1.xpose.msra.mxu0 0.0
        %1984 = vmatprep.subr.mxu0 0.0
        %1985 = vmatpush1.xpose.msra.mxu0 0.0
        %1986 = vmatprep.subr.mxu0 0.0
        %1987 = vmatpush1.xpose.msra.mxu0 0.0
        %1988 = vmatprep.subr.mxu0 0.0
        %1989 = vmatpush1.xpose.msra.mxu0 0.0
        %1990 = vmatprep.subr.mxu0 0.0
        %1991 = vmatpush1.xpose.msra.mxu0 0.0
        %1992 = vmatprep.subr.mxu0 0.0
        %1993 = vmatpush1.xpose.msra.mxu0 0.0
        %1994 = vmatprep.subr.mxu0 0.0
        %1995 = vmatpush1.xpose.msra.mxu0 0.0
        %1996 = vmatprep.subr.mxu0 0.0
        %1997 = vmatpush1.xpose.msra.mxu0 0.0
        %1998 = vmatprep.subr.mxu0 0.0
        %1999 = vmatpush1.xpose.msra.mxu0 %v1966
        %2000 = vmatprep.subr.mxu0 0.0
        %2001 = vmatpush2.xpose.msra.mxu0 0.0
        %2002 = vmatprep.subr.mxu0 0.0
        %2003 = vmatpush2.xpose.msra.mxu0 0.0
        %2004 = vmatprep.subr.mxu0 0.0
        %2005 = vmatpush2.xpose.msra.mxu0 0.0
        %2006 = vmatprep.subr.mxu0 0.0
        %2007 = vmatpush2.xpose.msra.mxu0 0.0
        %2008 = vmatprep.subr.mxu0 0.0
        %2009 = vmatpush2.xpose.msra.mxu0 0.0
        %2010 = vmatprep.subr.mxu0 0.0
        %2011 = vmatpush2.xpose.msra.mxu0 0.0
        %2012 = vmatprep.subr.mxu0 0.0
        %2013 = vmatpush2.xpose.msra.mxu0 0.0
        %2014 = vmatprep.subr.mxu0 0.0
        %2015 = vmatpush2.xpose.msra.mxu0 0.0
        %2016 = vmatprep.subr.mxu0 0.0
        %2017 = vmatpush2.xpose.msra.mxu0 0.0
        %2018 = vmatprep.subr.mxu0 0.0
        %2019 = vmatpush2.xpose.msra.mxu0 0.0
        %2020 = vmatprep.subr.mxu0 0.0
        %2021 = vmatpush2.xpose.msra.mxu0 0.0
        %2022 = vmatprep.subr.mxu0 0.0
        %2023 = vmatpush2.xpose.msra.mxu0 0.0
        %2024 = vmatprep.subr.mxu0 0.0
        %2025 = vmatpush2.xpose.msra.mxu0 0.0
        %2026 = vmatprep.subr.mxu0 0.0
        %2027 = vmatpush2.xpose.msra.mxu0 0.0
        %2028 = vmatprep.subr.mxu0 0.0
        %2029 = vmatpush2.xpose.msra.mxu0 0.0
        %2030 = vmatprep.subr.mxu0 0.0
        %2031 = vmatpush2.xpose.msra.mxu0 0.0
        %2032 = vmatprep.mubr.f32.mxu0 0.0
        %2033 = vmatmul.mubr.f32.gmra.mxu0 %v1963
        %v2034 = vpop.f32.mrf.mxu0
        %v2035 = vadd.f32 0.0, %v2034
        %v2036 = vpop.f32.mrf.mxu0
        %2037 = vdwg.mxu0
        %v2038 = vmul.f32 %v2035, 0.25
        %v2039 = vsel %vm1638, %v2038, -inf
        %2040 = vmax.xlane.f32.xlu0 %v2039
        %v2041 = vpop.xlane.xlu0 %2040
        %v2042 = vsub.f32 %v2038, %v2041
        %v2043 = vmul.f32 %v2042, 1.442695
        %v2044 = vpow.pop %v2043
        %v2045 = vsel %vm1638, %v2044, 0.0
        %2046 = vadd.xlane.f32.xlu0 %v2045
        %v2047 = vpop.xlane.xlu0 %2046
        %v2048 = vrcp.pop %v2047
        %v2049 = vmul.f32 %v2044, %v2048
        %v2051 = vsel %vm1638, %v2049, 0
        %2053 = vmatprep.subr.mxu0 0.0
        %2054 = vmatpush1.msra.mxu0 0.0
        %2055 = vmatprep.subr.mxu0 0.0
        %2056 = vmatpush1.msra.mxu0 0.0
        %2057 = vmatprep.subr.mxu0 0.0
        %2058 = vmatpush1.msra.mxu0 0.0
        %2059 = vmatprep.subr.mxu0 0.0
        %2060 = vmatpush1.msra.mxu0 0.0
        %2061 = vmatprep.subr.mxu0 0.0
        %2062 = vmatpush1.msra.mxu0 0.0
        %2063 = vmatprep.subr.mxu0 0.0
        %2064 = vmatpush1.msra.mxu0 0.0
        %2065 = vmatprep.subr.mxu0 0.0
        %2066 = vmatpush1.msra.mxu0 0.0
        %2067 = vmatprep.subr.mxu0 0.0
        %2068 = vmatpush1.msra.mxu0 0.0
        %2069 = vmatprep.subr.mxu0 0.0
        %2070 = vmatpush1.msra.mxu0 0.0
        %2071 = vmatprep.subr.mxu0 0.0
        %2072 = vmatpush1.msra.mxu0 0.0
        %2073 = vmatprep.subr.mxu0 0.0
        %2074 = vmatpush1.msra.mxu0 0.0
        %2075 = vmatprep.subr.mxu0 0.0
        %2076 = vmatpush1.msra.mxu0 0.0
        %2077 = vmatprep.subr.mxu0 0.0
        %2078 = vmatpush1.msra.mxu0 0.0
        %2079 = vmatprep.subr.mxu0 0.0
        %2080 = vmatpush1.msra.mxu0 0.0
        %2081 = vmatprep.subr.mxu0 0.0
        %2082 = vmatpush1.msra.mxu0 0.0
        %2083 = vmatprep.subr.mxu0 0.0
        %2084 = vmatpush1.msra.mxu0 %v1959
        %2085 = vmatprep.subr.mxu0 0.0
        %2086 = vmatpush2.msra.mxu0 0.0
        %2087 = vmatprep.subr.mxu0 0.0
        %2088 = vmatpush2.msra.mxu0 0.0
        %2089 = vmatprep.subr.mxu0 0.0
        %2090 = vmatpush2.msra.mxu0 0.0
        %2091 = vmatprep.subr.mxu0 0.0
        %2092 = vmatpush2.msra.mxu0 0.0
        %2093 = vmatprep.subr.mxu0 0.0
        %2094 = vmatpush2.msra.mxu0 0.0
        %2095 = vmatprep.subr.mxu0 0.0
        %2096 = vmatpush2.msra.mxu0 0.0
        %2097 = vmatprep.subr.mxu0 0.0
        %2098 = vmatpush2.msra.mxu0 0.0
        %2099 = vmatprep.subr.mxu0 0.0
        %2100 = vmatpush2.msra.mxu0 0.0
        %2101 = vmatprep.subr.mxu0 0.0
        %2102 = vmatpush2.msra.mxu0 0.0
        %2103 = vmatprep.subr.mxu0 0.0
        %2104 = vmatpush2.msra.mxu0 0.0
        %2105 = vmatprep.subr.mxu0 0.0
        %2106 = vmatpush2.msra.mxu0 0.0
        %2107 = vmatprep.subr.mxu0 0.0
        %2108 = vmatpush2.msra.mxu0 0.0
        %2109 = vmatprep.subr.mxu0 0.0
        %2110 = vmatpush2.msra.mxu0 0.0
        %2111 = vmatprep.subr.mxu0 0.0
        %2112 = vmatpush2.msra.mxu0 0.0
        %2113 = vmatprep.subr.mxu0 0.0
        %2114 = vmatpush2.msra.mxu0 0.0
        %2115 = vmatprep.subr.mxu0 0.0
        %2116 = vmatpush2.msra.mxu0 0.0
        %2117 = vmatprep.mubr.f32.mxu0 0.0
        %2118 = vmatmul.mubr.f32.gmra.mxu0 %v2051
        %v2119 = vpop.f32.mrf.mxu0
        %v2120 = vadd.f32 0.0, %v2119
        %v2121 = vpop.f32.mrf.mxu0
        %2122 = vdwg.mxu0
        %v2123 = vld [vmem:[%s1 + $0x2c0] sm:$0xff]
        %v2124 = vld [vmem:[%s1 + $0x2c8] sm:$0xff]
        %v2126 = vsel %vm1560, %v2120, 0
        %2128 = vmatprep.subr.mxu0 0.0
        %2129 = vmatpush1.msra.mxu0 0.0
        %2130 = vmatprep.subr.mxu0 0.0
        %2131 = vmatpush1.msra.mxu0 0.0
        %2132 = vmatprep.subr.mxu0 0.0
        %2133 = vmatpush1.msra.mxu0 0.0
        %2134 = vmatprep.subr.mxu0 0.0
        %2135 = vmatpush1.msra.mxu0 0.0
        %2136 = vmatprep.subr.mxu0 0.0
        %2137 = vmatpush1.msra.mxu0 0.0
        %2138 = vmatprep.subr.mxu0 0.0
        %2139 = vmatpush1.msra.mxu0 0.0
        %2140 = vmatprep.subr.mxu0 0.0
        %2141 = vmatpush1.msra.mxu0 0.0
        %2142 = vmatprep.subr.mxu0 0.0
        %2143 = vmatpush1.msra.mxu0 0.0
        %2144 = vmatprep.subr.mxu0 0.0
        %2145 = vmatpush1.msra.mxu0 0.0
        %2146 = vmatprep.subr.mxu0 0.0
        %2147 = vmatpush1.msra.mxu0 0.0
        %2148 = vmatprep.subr.mxu0 0.0
        %2149 = vmatpush1.msra.mxu0 0.0
        %2150 = vmatprep.subr.mxu0 0.0
        %2151 = vmatpush1.msra.mxu0 0.0
        %2152 = vmatprep.subr.mxu0 0.0
        %2153 = vmatpush1.msra.mxu0 0.0
        %2154 = vmatprep.subr.mxu0 0.0
        %2155 = vmatpush1.msra.mxu0 0.0
        %2156 = vmatprep.subr.mxu0 0.0
        %2157 = vmatpush1.msra.mxu0 %v2124
        %2158 = vmatprep.subr.mxu0 0.0
        %2159 = vmatpush1.msra.mxu0 %v2123
        %2160 = vmatprep.subr.mxu0 0.0
        %2161 = vmatpush2.msra.mxu0 0.0
        %2162 = vmatprep.subr.mxu0 0.0
        %2163 = vmatpush2.msra.mxu0 0.0
        %2164 = vmatprep.subr.mxu0 0.0
        %2165 = vmatpush2.msra.mxu0 0.0
        %2166 = vmatprep.subr.mxu0 0.0
        %2167 = vmatpush2.msra.mxu0 0.0
        %2168 = vmatprep.subr.mxu0 0.0
        %2169 = vmatpush2.msra.mxu0 0.0
        %2170 = vmatprep.subr.mxu0 0.0
        %2171 = vmatpush2.msra.mxu0 0.0
        %2172 = vmatprep.subr.mxu0 0.0
        %2173 = vmatpush2.msra.mxu0 0.0
        %2174 = vmatprep.subr.mxu0 0.0
        %2175 = vmatpush2.msra.mxu0 0.0
        %2176 = vmatprep.subr.mxu0 0.0
        %2177 = vmatpush2.msra.mxu0 0.0
        %2178 = vmatprep.subr.mxu0 0.0
        %2179 = vmatpush2.msra.mxu0 0.0
        %2180 = vmatprep.subr.mxu0 0.0
        %2181 = vmatpush2.msra.mxu0 0.0
        %2182 = vmatprep.subr.mxu0 0.0
        %2183 = vmatpush2.msra.mxu0 0.0
        %2184 = vmatprep.subr.mxu0 0.0
        %2185 = vmatpush2.msra.mxu0 0.0
        %2186 = vmatprep.subr.mxu0 0.0
        %2187 = vmatpush2.msra.mxu0 0.0
        %2188 = vmatprep.subr.mxu0 0.0
        %2189 = vmatpush2.msra.mxu0 0.0
        %2190 = vmatprep.subr.mxu0 0.0
        %2191 = vmatpush2.msra.mxu0 0.0
        %2192 = vmatprep.mubr.f32.mxu0 0.0
        %2193 = vmatmul.mubr.f32.gmra.mxu0 %v2126
        %v2194 = vpop.f32.mrf.mxu0
        %v2195 = vadd.f32 0.0, %v2194
        %v2196 = vpop.f32.mrf.mxu0
        %2197 = vdwg.mxu0
        %v2199 = vsel %vm1560, %v1720, 0
        %2201 = vmatprep.subr.mxu0 0.0
        %2202 = vmatpush1.msra.mxu0 0.0
        %2203 = vmatprep.subr.mxu0 0.0
        %2204 = vmatpush1.msra.mxu0 0.0
        %2205 = vmatprep.subr.mxu0 0.0
        %2206 = vmatpush1.msra.mxu0 0.0
        %2207 = vmatprep.subr.mxu0 0.0
        %2208 = vmatpush1.msra.mxu0 0.0
        %2209 = vmatprep.subr.mxu0 0.0
        %2210 = vmatpush1.msra.mxu0 0.0
        %2211 = vmatprep.subr.mxu0 0.0
        %2212 = vmatpush1.msra.mxu0 0.0
        %2213 = vmatprep.subr.mxu0 0.0
        %2214 = vmatpush1.msra.mxu0 0.0
        %2215 = vmatprep.subr.mxu0 0.0
        %2216 = vmatpush1.msra.mxu0 0.0
        %2217 = vmatprep.subr.mxu0 0.0
        %2218 = vmatpush1.msra.mxu0 0.0
        %2219 = vmatprep.subr.mxu0 0.0
        %2220 = vmatpush1.msra.mxu0 0.0
        %2221 = vmatprep.subr.mxu0 0.0
        %2222 = vmatpush1.msra.mxu0 0.0
        %2223 = vmatprep.subr.mxu0 0.0
        %2224 = vmatpush1.msra.mxu0 0.0
        %2225 = vmatprep.subr.mxu0 0.0
        %2226 = vmatpush1.msra.mxu0 0.0
        %2227 = vmatprep.subr.mxu0 0.0
        %2228 = vmatpush1.msra.mxu0 0.0
        %2229 = vmatprep.subr.mxu0 0.0
        %2230 = vmatpush1.msra.mxu0 %v1724
        %2231 = vmatprep.subr.mxu0 0.0
        %2232 = vmatpush1.msra.mxu0 %v1723
        %2233 = vmatprep.subr.mxu0 0.0
        %2234 = vmatpush2.msra.mxu0 0.0
        %2235 = vmatprep.subr.mxu0 0.0
        %2236 = vmatpush2.msra.mxu0 0.0
        %2237 = vmatprep.subr.mxu0 0.0
        %2238 = vmatpush2.msra.mxu0 0.0
        %2239 = vmatprep.subr.mxu0 0.0
        %2240 = vmatpush2.msra.mxu0 0.0
        %2241 = vmatprep.subr.mxu0 0.0
        %2242 = vmatpush2.msra.mxu0 0.0
        %2243 = vmatprep.subr.mxu0 0.0
        %2244 = vmatpush2.msra.mxu0 0.0
        %2245 = vmatprep.subr.mxu0 0.0
        %2246 = vmatpush2.msra.mxu0 0.0
        %2247 = vmatprep.subr.mxu0 0.0
        %2248 = vmatpush2.msra.mxu0 0.0
        %2249 = vmatprep.subr.mxu0 0.0
        %2250 = vmatpush2.msra.mxu0 0.0
        %2251 = vmatprep.subr.mxu0 0.0
        %2252 = vmatpush2.msra.mxu0 0.0
        %2253 = vmatprep.subr.mxu0 0.0
        %2254 = vmatpush2.msra.mxu0 0.0
        %2255 = vmatprep.subr.mxu0 0.0
        %2256 = vmatpush2.msra.mxu0 0.0
        %2257 = vmatprep.subr.mxu0 0.0
        %2258 = vmatpush2.msra.mxu0 0.0
        %2259 = vmatprep.subr.mxu0 0.0
        %2260 = vmatpush2.msra.mxu0 0.0
        %2261 = vmatprep.subr.mxu0 0.0
        %2262 = vmatpush2.msra.mxu0 0.0
        %2263 = vmatprep.subr.mxu0 0.0
        %2264 = vmatpush2.msra.mxu0 0.0
        %2265 = vmatprep.mubr.f32.mxu0 0.0
        %2266 = vmatmul.mubr.f32.gmra.mxu0 %v2199
        %v2267 = vpop.f32.mrf.mxu0
        %v2268 = vadd.f32 %v2195, %v2267
        %v2269 = vpop.f32.mrf.mxu0
        %2270 = vdwg.mxu0
        %v2271 = vld [vmem:[%s1 + $0x2e8] sm:$0x1]
        %v2272 = vlaneseq
        %v2273 = vshrl.u32 %v2272, 7
        %v2274 = vsub.s32 0, %v2273
        %v2275 = vrot.slane %v2271, %v2274
        %v2276 = vadd.f32 %v2268, %v2275
        %v2277 = vadd.f32 %v1319, %v2276
        %v2278 = vld [vmem:[%s1 + $0x3a0] sm:$0x1]
        %v2279 = vld [vmem:[%s1 + $0x3a8] sm:$0x1]
        %v2280 = vsel %vm500, %v2277, 0.0
        %2281 = vadd.xlane.f32.xlu0 %v2280
        %v2282 = vpop.xlane.xlu0 %2281
        %v2283 = vrcp.pop 32.0
        %v2284 = vmul.f32 %v2282, %v2283
        %v2285 = vsub.f32 %v2277, %v2284
        %v2286 = vmul.f32 %v2285, %v2285
        %v2287 = vsel %vm500, %v2286, 0.0
        %2288 = vadd.xlane.f32.xlu0 %v2287
        %v2289 = vpop.xlane.xlu0 %2288
        %v2290 = vmul.f32 %v2289, %v2283
        %v2291 = vadd.f32 %v2290, 1e-05
        %v2292 = vrsqrt.pop %v2291
        %v2293 = vmul.f32 %v2285, %v2292
        %v2294 = vlaneseq
        %v2295 = vshrl.u32 %v2294, 7
        %v2296 = vsub.s32 0, %v2295
        %v2297 = vrot.slane %v2278, %v2296
        %v2298 = vmul.f32 %v2293, %v2297
        %v2299 = vlaneseq
        %v2300 = vshrl.u32 %v2299, 7
        %v2301 = vsub.s32 0, %v2300
        %v2302 = vrot.slane %v2279, %v2301
        %v2303 = vadd.f32 %v2298, %v2302
        %v2304 = vld [vmem:[%s1 + $0x2f0] sm:$0xff]
        %v2305 = vld [vmem:[%s1 + $0x2f8] sm:$0xff]
        %v2306 = vld [vmem:[%s1 + $0x300] sm:$0xff]
        %v2307 = vld [vmem:[%s1 + $0x308] sm:$0xff]
        %v2308 = vld [vmem:[%s1 + $0x310] sm:$0x1]
        %v2309 = vlaneseq
        %v2310 = vshrl.u32 %v2309, 7
        %v2311 = vsub.s32 0, %v2310
        %v2312 = vrot.slane %v2308, %v2311
        %v2314 = vsel %vm500, %v2303, 0
        %2316 = vmatprep.subr.mxu0 0.0
        %2317 = vmatpush1.msra.mxu0 0.0
        %2318 = vmatprep.subr.mxu0 0.0
        %2319 = vmatpush1.msra.mxu0 0.0
        %2320 = vmatprep.subr.mxu0 0.0
        %2321 = vmatpush1.msra.mxu0 0.0
        %2322 = vmatprep.subr.mxu0 0.0
        %2323 = vmatpush1.msra.mxu0 0.0
        %2324 = vmatprep.subr.mxu0 0.0
        %2325 = vmatpush1.msra.mxu0 0.0
        %2326 = vmatprep.subr.mxu0 0.0
        %2327 = vmatpush1.msra.mxu0 0.0
        %2328 = vmatprep.subr.mxu0 0.0
        %2329 = vmatpush1.msra.mxu0 0.0
        %2330 = vmatprep.subr.mxu0 0.0
        %2331 = vmatpush1.msra.mxu0 0.0
        %2332 = vmatprep.subr.mxu0 0.0
        %2333 = vmatpush1.msra.mxu0 0.0
        %2334 = vmatprep.subr.mxu0 0.0
        %2335 = vmatpush1.msra.mxu0 0.0
        %2336 = vmatprep.subr.mxu0 0.0
        %2337 = vmatpush1.msra.mxu0 0.0
        %2338 = vmatprep.subr.mxu0 0.0
        %2339 = vmatpush1.msra.mxu0 0.0
        %2340 = vmatprep.subr.mxu0 0.0
        %2341 = vmatpush1.msra.mxu0 %v2307
        %2342 = vmatprep.subr.mxu0 0.0
        %2343 = vmatpush1.msra.mxu0 %v2306
        %2344 = vmatprep.subr.mxu0 0.0
        %2345 = vmatpush1.msra.mxu0 %v2305
        %2346 = vmatprep.subr.mxu0 0.0
        %2347 = vmatpush1.msra.mxu0 %v2304
        %2348 = vmatprep.subr.mxu0 0.0
        %2349 = vmatpush2.msra.mxu0 0.0
        %2350 = vmatprep.subr.mxu0 0.0
        %2351 = vmatpush2.msra.mxu0 0.0
        %2352 = vmatprep.subr.mxu0 0.0
        %2353 = vmatpush2.msra.mxu0 0.0
        %2354 = vmatprep.subr.mxu0 0.0
        %2355 = vmatpush2.msra.mxu0 0.0
        %2356 = vmatprep.subr.mxu0 0.0
        %2357 = vmatpush2.msra.mxu0 0.0
        %2358 = vmatprep.subr.mxu0 0.0
        %2359 = vmatpush2.msra.mxu0 0.0
        %2360 = vmatprep.subr.mxu0 0.0
        %2361 = vmatpush2.msra.mxu0 0.0
        %2362 = vmatprep.subr.mxu0 0.0
        %2363 = vmatpush2.msra.mxu0 0.0
        %2364 = vmatprep.subr.mxu0 0.0
        %2365 = vmatpush2.msra.mxu0 0.0
        %2366 = vmatprep.subr.mxu0 0.0
        %2367 = vmatpush2.msra.mxu0 0.0
        %2368 = vmatprep.subr.mxu0 0.0
        %2369 = vmatpush2.msra.mxu0 0.0
        %2370 = vmatprep.subr.mxu0 0.0
        %2371 = vmatpush2.msra.mxu0 0.0
        %2372 = vmatprep.subr.mxu0 0.0
        %2373 = vmatpush2.msra.mxu0 0.0
        %2374 = vmatprep.subr.mxu0 0.0
        %2375 = vmatpush2.msra.mxu0 0.0
        %2376 = vmatprep.subr.mxu0 0.0
        %2377 = vmatpush2.msra.mxu0 0.0
        %2378 = vmatprep.subr.mxu0 0.0
        %2379 = vmatpush2.msra.mxu0 0.0
        %2380 = vmatprep.mubr.f32.mxu0 0.0
        %2381 = vmatmul.mubr.f32.gmra.mxu0 %v2314
        %v2382 = vpop.f32.mrf.mxu0
        %v2383 = vadd.f32 %v2312, %v2382
        %v2384 = vpop.f32.mrf.mxu0
        %2385 = vdwg.mxu0
        %v2386 = vmax.f32 %v2383, 0.0
        %v2387 = vld [vmem:[%s1 + $0x318] sm:$0xff]
        %v2388 = vld [vmem:[%s1 + $0x320] sm:$0xff]
        %v2389 = vld [vmem:[%s1 + $0x328] sm:$0xff]
        %v2390 = vld [vmem:[%s1 + $0x330] sm:$0xff]
        %v2391 = vld [vmem:[%s1 + $0x338] sm:$0xff]
        %v2392 = vld [vmem:[%s1 + $0x340] sm:$0xff]
        %v2393 = vld [vmem:[%s1 + $0x348] sm:$0xff]
        %v2394 = vld [vmem:[%s1 + $0x350] sm:$0xff]
        %v2395 = vld [vmem:[%s1 + $0x358] sm:$0xff]
        %v2396 = vld [vmem:[%s1 + $0x360] sm:$0xff]
        %v2397 = vld [vmem:[%s1 + $0x368] sm:$0xff]
        %v2398 = vld [vmem:[%s1 + $0x370] sm:$0xff]
        %v2399 = vld [vmem:[%s1 + $0x378] sm:$0xff]
        %v2400 = vld [vmem:[%s1 + $0x380] sm:$0xff]
        %v2401 = vld [vmem:[%s1 + $0x388] sm:$0xff]
        %v2402 = vld [vmem:[%s1 + $0x390] sm:$0xff]
        %v2403 = vld [vmem:[%s1 + $0x398] sm:$0x1]
        %v2404 = vlaneseq
        %v2405 = vshrl.u32 %v2404, 7
        %v2406 = vsub.s32 0, %v2405
        %v2407 = vrot.slane %v2403, %v2406
        %2408 = vmatprep.subr.mxu0 0.0
        %2409 = vmatpush1.msra.mxu0 %v2402
        %2410 = vmatprep.subr.mxu0 0.0
        %2411 = vmatpush1.msra.mxu0 %v2401
        %2412 = vmatprep.subr.mxu0 0.0
        %2413 = vmatpush1.msra.mxu0 %v2400
        %2414 = vmatprep.subr.mxu0 0.0
        %2415 = vmatpush1.msra.mxu0 %v2399
        %2416 = vmatprep.subr.mxu0 0.0
        %2417 = vmatpush1.msra.mxu0 %v2398
        %2418 = vmatprep.subr.mxu0 0.0
        %2419 = vmatpush1.msra.mxu0 %v2397
        %2420 = vmatprep.subr.mxu0 0.0
        %2421 = vmatpush1.msra.mxu0 %v2396
        %2422 = vmatprep.subr.mxu0 0.0
        %2423 = vmatpush1.msra.mxu0 %v2395
        %2424 = vmatprep.subr.mxu0 0.0
        %2425 = vmatpush1.msra.mxu0 %v2394
        %2426 = vmatprep.subr.mxu0 0.0
        %2427 = vmatpush1.msra.mxu0 %v2393
        %2428 = vmatprep.subr.mxu0 0.0
        %2429 = vmatpush1.msra.mxu0 %v2392
        %2430 = vmatprep.subr.mxu0 0.0
        %2431 = vmatpush1.msra.mxu0 %v2391
        %2432 = vmatprep.subr.mxu0 0.0
        %2433 = vmatpush1.msra.mxu0 %v2390
        %2434 = vmatprep.subr.mxu0 0.0
        %2435 = vmatpush1.msra.mxu0 %v2389
        %2436 = vmatprep.subr.mxu0 0.0
        %2437 = vmatpush1.msra.mxu0 %v2388
        %2438 = vmatprep.subr.mxu0 0.0
        %2439 = vmatpush1.msra.mxu0 %v2387
        %2440 = vmatprep.subr.mxu0 0.0
        %2441 = vmatpush2.msra.mxu0 0.0
        %2442 = vmatprep.subr.mxu0 0.0
        %2443 = vmatpush2.msra.mxu0 0.0
        %2444 = vmatprep.subr.mxu0 0.0
        %2445 = vmatpush2.msra.mxu0 0.0
        %2446 = vmatprep.subr.mxu0 0.0
        %2447 = vmatpush2.msra.mxu0 0.0
        %2448 = vmatprep.subr.mxu0 0.0
        %2449 = vmatpush2.msra.mxu0 0.0
        %2450 = vmatprep.subr.mxu0 0.0
        %2451 = vmatpush2.msra.mxu0 0.0
        %2452 = vmatprep.subr.mxu0 0.0
        %2453 = vmatpush2.msra.mxu0 0.0
        %2454 = vmatprep.subr.mxu0 0.0
        %2455 = vmatpush2.msra.mxu0 0.0
        %2456 = vmatprep.subr.mxu0 0.0
        %2457 = vmatpush2.msra.mxu0 0.0
        %2458 = vmatprep.subr.mxu0 0.0
        %2459 = vmatpush2.msra.mxu0 0.0
        %2460 = vmatprep.subr.mxu0 0.0
        %2461 = vmatpush2.msra.mxu0 0.0
        %2462 = vmatprep.subr.mxu0 0.0
        %2463 = vmatpush2.msra.mxu0 0.0
        %2464 = vmatprep.subr.mxu0 0.0
        %2465 = vmatpush2.msra.mxu0 0.0
        %2466 = vmatprep.subr.mxu0 0.0
        %2467 = vmatpush2.msra.mxu0 0.0
        %2468 = vmatprep.subr.mxu0 0.0
        %2469 = vmatpush2.msra.mxu0 0.0
        %2470 = vmatprep.subr.mxu0 0.0
        %2471 = vmatpush2.msra.mxu0 0.0
        %2472 = vmatprep.mubr.f32.mxu0 0.0
        %2473 = vmatmul.mubr.f32.gmra.mxu0 %v2386
        %v2474 = vpop.f32.mrf.mxu0
        %v2475 = vadd.f32 %v2407, %v2474
        %v2476 = vpop.f32.mrf.mxu0
        %2477 = vdwg.mxu0
        %v2478 = vadd.f32 %v2303, %v2475
        %v2479 = vld [vmem:[%s1 + $0x3b0] sm:$0x1]
        %v2480 = vld [vmem:[%s1 + $0x3b8] sm:$0x1]
        %v2481 = vsel %vm500, %v2478, 0.0
        %2482 = vadd.xlane.f32.xlu0 %v2481
        %v2483 = vpop.xlane.xlu0 %2482
        %v2484 = vmul.f32 %v2483, %v2283
        %v2485 = vsub.f32 %v2478, %v2484
        %v2486 = vmul.f32 %v2485, %v2485
        %v2487 = vsel %vm500, %v2486, 0.0
        %2488 = vadd.xlane.f32.xlu0 %v2487
        %v2489 = vpop.xlane.xlu0 %2488
        %v2490 = vmul.f32 %v2489, %v2283
        %v2491 = vadd.f32 %v2490, 1e-05
        %v2492 = vrsqrt.pop %v2491
        %v2493 = vmul.f32 %v2485, %v2492
        %v2494 = vlaneseq
        %v2495 = vshrl.u32 %v2494, 7
        %v2496 = vsub.s32 0, %v2495
        %v2497 = vrot.slane %v2479, %v2496
        %v2498 = vmul.f32 %v2493, %v2497
        %v2499 = vlaneseq
        %v2500 = vshrl.u32 %v2499, 7
        %v2501 = vsub.s32 0, %v2500
        %v2502 = vrot.slane %v2480, %v2501
        %v2503 = vadd.f32 %v2498, %v2502
        %2504 = vst.msk [vmem:[%s134] sm:$0xff] %vm500, %v2503
        %s2505 = sand.u32 %s71, 1
        %s2506 = scalar_lea.sflag [#allocation3], %s2505
        %s2507 = sand.u32 %s71, 1
        %s2508 = smul.addr %s2507, 8
        %s2509 = scalar_lea.vmem [#allocation2], %s2508
        // Predicated region
        $region29: #{sequence_module_forward.1} parent=27 // pred_check
          %p2510 = pneg %p81
        $region30: #{sequence_module_forward.1} parent=27 // pred_check_branch
          %2512 = sbr.rel (%p2510) target = $region32
        $region31: #{sequence_module_forward.1} parent=27 // pred_region
          %s2514 = ssub.s32 128, 128
          %2515 = vsyncadd %s2506, %s2514
          %s2516 = smul.addr %s16, 128
          %s2517 = scalar_lea.hbm %s2, %s2516
          %s2519 = sshll.u32 %s2509, 4
          %s2520 = int_to_ptr.vmem [resolvable:$true] %s2519
          %2522 = dma.vmem_to_hbm [thread:$0]  %s2520, 128, %s2517, %s2506
        $region32: #{sequence_module_forward.1} parent=27 // pred_fallthru
          _
      $region28: #{sequence_module_forward.1} parent=5 // pred_fallthru
        _
      %p2523 = scmp.le.s32.totalorder 2, %s11
      // Predicated region
      $region33: #{sequence_module_forward.1} parent=5 // pred_check
        %p2524 = pneg %p2523
      $region34: #{sequence_module_forward.1} parent=5 // pred_check_branch
        %2526 = sbr.rel (%p2524) target = $region36
      $region35: #{sequence_module_forward.1} parent=5 // pred_region
        %s2527 = ssub.s32 %s11, 2
        // Predicated region
        $region37: #{sequence_module_forward.1} parent=35 // pred_check
          %p2528 = pneg %p87
        $region38: #{sequence_module_forward.1} parent=35 // pred_check_branch
          %2530 = sbr.rel (%p2528) target = $region40
        $region39: #{sequence_module_forward.1} parent=35 // pred_region
          %s2531 = sand.u32 %s72, 1
          %s2532 = scalar_lea.sflag [#allocation3], %s2531
          %s2533 = sand.u32 %s72, 1
          %s2534 = smul.addr %s2533, 8
          %s2535 = scalar_lea.vmem [#allocation2], %s2534
          %2536 = dma.done %s2532, 128
        $region40: #{sequence_module_forward.1} parent=35 // pred_fallthru
          _
      $region36: #{sequence_module_forward.1} parent=5 // pred_fallthru
        _
    $region6: #{sequence_module_forward.1} parent=1 // loop_footer
      %s15 = sadd.s32 1, %s11
    $region7: #{sequence_module_forward.1} parent=1 // loop_footer_branch
      %10 = sbr.rel target = $region3
    $region8: #{sequence_module_forward.1} parent=1 // loop_exit
      _
    %2537 = vsyncpa [#allocation3], 1
    %s2538 = scalar_lea.sflag [#allocation3], 1
    %2539 = vsyncpa %s2538, 1

</llo_original>
